<compile_context>
chip_gen: v6e
topology: v6e:2x2x1
jax: 0.10.0
libtpu: 0.0.40
codegen_flags: <defaults>
</compile_context>

<pallas_src>
import functools

import jax
import jax.numpy as jnp
from jax.experimental import pallas as pl
from jax.experimental.pallas import tpu as pltpu

EPS = 1e-5  # PyTorch nn.LayerNorm default

PARAM_ORDER = ("ln1_g", "ln1_b", "wq", "bq", "wk", "bk", "wv", "bv",
               "wo", "bo", "ln2_g", "ln2_b", "w1", "b1", "w2", "b2")
_MATMUL_WEIGHTS = ("wq", "wk", "wv", "wo", "w1", "w2")


def _layer_norm(x, gamma, beta):
    mean = jnp.mean(x, axis=-1, keepdims=True)
    var = jnp.mean((x - mean) ** 2, axis=-1, keepdims=True)
    return (x - mean) * jax.lax.rsqrt(var + EPS) * gamma + beta


def fused_encoder_kernel(*refs, num_heads, seq, mxu_dtype, kv_chunk, ff_chunk,
                         approx_recip, with_hidden):
    (x_ref,
     ln1_g_ref, ln1_b_ref, wq_ref, bq_ref, wk_ref, bk_ref, wv_ref, bv_ref,
     wo_ref, bo_ref, ln2_g_ref, ln2_b_ref, w1_ref, b1_ref, w2_ref, b2_ref,
     fng_ref, fnb_ref) = refs[:19]
    if with_hidden:
        hidden_ref, normed_ref, x_scratch, ctx_scratch = refs[19:]
    else:
        hidden_ref = None
        normed_ref, x_scratch, ctx_scratch = refs[19:]

    layer = pl.program_id(1)

    @pl.when(layer == 0)
    def _():
        # Activations loaded once per batch block; they stay resident in VMEM
        # across every layer (no HBM round trip of activations between layers).
        x_scratch[...] = x_ref[...].astype(jnp.float32)

    x = x_scratch[...]                          # [rows, D] f32, rows = bpb*seq
    rows, d_model = x.shape
    bpb = rows // seq
    hd = d_model // num_heads

    def mm(a_mx, w):                            # MXU matmul, f32 accumulation;
        return jnp.dot(a_mx, w,                 # weights already live in mxu_dtype
                       preferred_element_type=jnp.float32)

    # ---------------- self-attention sublayer (pre-norm) -----------------
    xn = _layer_norm(x, ln1_g_ref[...], ln1_b_ref[...])
    xn_mx = xn.astype(mxu_dtype)                # hoisted: one cast for q/k/v
    q = mm(xn_mx, wq_ref[...]) + bq_ref[...]
    k = mm(xn_mx, wk_ref[...]) + bk_ref[...]
    v = mm(xn_mx, wv_ref[...]) + bv_ref[...]
    q = q * (1.0 / float(hd) ** 0.5)            # scale folded into q (not S*S)

    def split_heads(t):                         # [rows, D] -> [H*bpb, seq, hd]
        return jnp.concatenate(
            [t[:, h * hd:(h + 1) * hd].reshape(bpb, seq, hd)
             for h in range(num_heads)], axis=0)

    q3 = split_heads(q).astype(mxu_dtype)
    k3 = split_heads(k).astype(mxu_dtype)
    v3 = split_heads(v).astype(mxu_dtype)

    # Flash-style online softmax over kv_chunk-wide K/V pieces (a single piece
    # at demo sizes); all heads batched into one contraction per piece.
    # TODO(synk): mask / src_key_padding_mask path not implemented (mask=None only).
    bh = num_heads * bpb
    m_i = jnp.full((bh, seq, 1), -1e30, jnp.float32)
    l_i = jnp.zeros((bh, seq, 1), jnp.float32)
    acc = jnp.zeros((bh, seq, hd), jnp.float32)
    for start in range(0, seq, kv_chunk):
        size = min(kv_chunk, seq - start)
        kc = k3[:, start:start + size, :]
        vc = v3[:, start:start + size, :]
        s = jnp.einsum('bqd,bkd->bqk', q3, kc,
                       preferred_element_type=jnp.float32)
        m_new = jnp.maximum(m_i, jnp.max(s, axis=-1, keepdims=True))
        alpha = jnp.exp(m_i - m_new)
        p = jnp.exp(s - m_new)
        l_i = alpha * l_i + jnp.sum(p, axis=-1, keepdims=True)
        acc = alpha * acc + jnp.einsum('bqk,bkd->bqd', p.astype(mxu_dtype), vc,
                                       preferred_element_type=jnp.float32)
        m_i = m_new
    inv_l = pl.reciprocal(l_i, approx=True) if approx_recip else 1.0 / l_i
    ctx = acc * inv_l                           # [H*bpb, seq, hd] f32

    # Merge heads: each head's ctx into its lane slice of a VMEM scratch, then
    # one K=D W_o matmul (instead of H small K=hd matmuls).
    for h in range(num_heads):
        ctx_scratch[:, h * hd:(h + 1) * hd] = (
            ctx[h * bpb:(h + 1) * bpb].reshape(rows, hd))
    attn = mm(ctx_scratch[...].astype(mxu_dtype), wo_ref[...])
    x = x + attn + bo_ref[...]                  # dropout == identity (eval)

    # ------------- feed-forward sublayer (pre-norm), ff-axis tiled ----------
    xn2 = _layer_norm(x, ln2_g_ref[...], ln2_b_ref[...])
    xn2_mx = xn2.astype(mxu_dtype)              # hoisted cast
    ff_total = w1_ref.shape[1]                  # already padded to 128-multiple
    ff_out = None
    # TODO(synk): for production D/ff on v7x, additionally stream w1/w2 chunks
    # from HBM instead of holding the full per-layer FFN weights in VMEM.
    for start in range(0, ff_total, ff_chunk):
        size = min(ff_chunk, ff_total - start)
        h1c = jnp.maximum(
            mm(xn2_mx, w1_ref[:, start:start + size])
            + b1_ref[:, start:start + size], 0.0)
        part = mm(h1c.astype(mxu_dtype), w2_ref[start:start + size, :])
        ff_out = part if ff_out is None else ff_out + part
    x = x + ff_out + b2_ref[...]

    x_scratch[...] = x
    if with_hidden:
        hidden_ref[...] = x.astype(hidden_ref.dtype)

    @pl.when(layer == pl.num_programs(1) - 1)
    def _():
        # Final encoder LayerNorm fused into the last layer's iteration.
        normed_ref[...] = _layer_norm(
            x, fng_ref[...], fnb_ref[...]).astype(normed_ref.dtype)


def transformer_encoder_forward(x, params, num_heads,
                                batch_per_block=None,
                                mxu_dtype=jnp.bfloat16,
                                kv_chunk=512,
                                ff_chunk=1024,
                                return_hidden=True,
                                ffn_weight_buffers=None):
    """Whole encoder stack (+ final LayerNorm) in one fused pallas_call.

    mxu_dtype=bf16 (default) streams weights and feeds the MXU in bf16 with f32
    accumulation; pass jnp.float32 for exact PyTorch-forward parity (this also
    uses the exact softmax reciprocal).  ffn_weight_buffers=3 deepens the w1/w2
    pipeline for v5e when weight DMA is exposed (costs VMEM; avoid on v7x).
    """
    B, S, D = x.shape
    L = len(params["layers"])
    assert D % num_heads == 0
    mxu_dtype = jax.dtypes.canonicalize_dtype(mxu_dtype)
    approx_recip = mxu_dtype != jnp.float32

    # ---- stack per-layer params along a leading L axis (streamed by grid) ----
    stacked = {name: jnp.stack([lp[name] for lp in params["layers"]])
               for name in PARAM_ORDER}
    ff = stacked["w1"].shape[-1]
    ff_p = ((ff + 127) // 128) * 128            # lane-dense ff (exact zero-pad)
    if ff_p != ff:
        padn = ff_p - ff
        stacked["w1"] = jnp.pad(stacked["w1"], ((0, 0), (0, 0), (0, padn)))
        stacked["b1"] = jnp.pad(stacked["b1"], ((0, 0), (0, 0), (0, padn)))
        stacked["w2"] = jnp.pad(stacked["w2"], ((0, 0), (0, padn), (0, 0)))
    for name in _MATMUL_WEIGHTS:                # weights live in HBM in MXU dtype
        stacked[name] = stacked[name].astype(mxu_dtype)

    # ---- per-generation VMEM budget, vmem_limit and batch-per-block sizing ----
    try:
        vmem_cap = int(pltpu.get_tpu_info().vmem_capacity_bytes)
    except Exception:
        vmem_cap = 64 * 1024 * 1024             # conservative (v7x-sized) fallback
    vmem_limit = max(32 * 1024 * 1024,
                     min(vmem_cap - 8 * 1024 * 1024, 100 * 1024 * 1024))
    w_item = mxu_dtype.itemsize

    def _block_vmem_bytes(bpb):
        rows = bpb * S
        d_pad = max(D, 128)
        ff_c = max(min(ff_chunk, ff_p), 128)
        kv_c = max(min(kv_chunk, S), 128)
        acts = 12 * rows * d_pad * 4                            # x/qkv/ln/ctx scratches
        scores = 2 * bpb * num_heads * S * kv_c * 4             # online-softmax piece
        ffn = 2 * rows * ff_c * 4
        weights = 2 * ((4 * D * D + 2 * D * ff_p) * w_item      # double-buffered
                       + (8 * D + ff_p) * 4)
        return acts + scores + ffn + weights

    if batch_per_block is None:
        batch_per_block = B
        budget = int(0.7 * vmem_cap)
        while (batch_per_block % 2 == 0
               and (batch_per_block // 2) * S % 8 == 0
               and _block_vmem_bytes(batch_per_block) > budget):
            batch_per_block //= 2
        # TODO(synk): on v7x also force >= 2 batch blocks so the second
        # TensorCore gets work on the "parallel" grid axis.
    assert B % batch_per_block == 0
    nb = B // batch_per_block
    rows = batch_per_block * S
    BS = B * S

    x2 = x.reshape(BS, D)                       # fold batch into matmul M

    def _stacked_spec(arr, buffers=None):       # per-layer block, streamed over l
        nd = arr.ndim - 1
        kwargs = {}
        if buffers is not None and buffers != 2:
            kwargs["pipeline_mode"] = pl.Buffered(buffers)
        return pl.BlockSpec((None,) + tuple(arr.shape[1:]),
                            lambda b, l, _nd=nd: (l,) + (0,) * _nd, **kwargs)

    def _shared_spec(arr):
        nd = arr.ndim
        return pl.BlockSpec(tuple(arr.shape), lambda b, l, _nd=nd: (0,) * _nd)

    in_specs = [pl.BlockSpec((rows, D), lambda b, l: (b, 0))]
    for name in PARAM_ORDER:
        bufs = ffn_weight_buffers if name in ("w1", "w2") else None
        in_specs.append(_stacked_spec(stacked[name], bufs))
    in_specs += [_shared_spec(params["norm_g"]), _shared_spec(params["norm_b"])]

    out_shape, out_specs = [], []
    if return_hidden:
        out_shape.append(jax.ShapeDtypeStruct((L, BS, D), x.dtype))
        out_specs.append(pl.BlockSpec((None, rows, D), lambda b, l: (l, b, 0)))
    out_shape.append(jax.ShapeDtypeStruct((BS, D), x.dtype))
    out_specs.append(pl.BlockSpec((rows, D), lambda b, l: (b, 0)))

    kernel = functools.partial(
        fused_encoder_kernel, num_heads=num_heads, seq=S, mxu_dtype=mxu_dtype,
        kv_chunk=kv_chunk, ff_chunk=ff_chunk, approx_recip=approx_recip,
        with_hidden=return_hidden)

    outs = pl.pallas_call(
        kernel,
        out_shape=tuple(out_shape),
        grid=(nb, L),
        in_specs=in_specs,
        out_specs=tuple(out_specs),
        scratch_shapes=[pltpu.VMEM((rows, D), jnp.float32),   # resident activations
                        pltpu.VMEM((rows, D), jnp.float32)],  # merged-head context
        compiler_params=pltpu.CompilerParams(
            # batch blocks independent (megacore sharding); layers sequential.
            dimension_semantics=("parallel", "arbitrary"),
            vmem_limit_bytes=vmem_limit),
    )(x2, *[stacked[n] for n in PARAM_ORDER],
      params["norm_g"], params["norm_b"])

    if return_hidden:
        hidden, normed = outs
        hidden_states = [hidden[l].reshape(B, S, D) for l in range(L)]
    else:
        (normed,) = outs
        hidden_states = []
    return hidden_states, normed.reshape(B, S, D)


# ----------------------------- init & reference -----------------------------

def _linear_init(key, fan_in, fan_out):
    # matches nn.Linear default: U(-1/sqrt(fan_in), 1/sqrt(fan_in))
    kw, kb = jax.random.split(key)
    bound = 1.0 / jnp.sqrt(jnp.float32(fan_in))
    w = jax.random.uniform(kw, (fan_in, fan_out), jnp.float32, -bound, bound)
    b = jax.random.uniform(kb, (1, fan_out), jnp.float32, -bound, bound)
    return w, b


def init_params(key, d_model, num_layers, ff_size):
    layers = []
    for _ in range(num_layers):
        keys = jax.random.split(key, 7)
        key = keys[0]
        wq, bq = _linear_init(keys[1], d_model, d_model)
        wk, bk = _linear_init(keys[2], d_model, d_model)
        wv, bv = _linear_init(keys[3], d_model, d_model)
        wo, bo = _linear_init(keys[4], d_model, d_model)
        w1, b1 = _linear_init(keys[5], d_model, ff_size)
        w2, b2 = _linear_init(keys[6], ff_size, d_model)
        layers.append(dict(
            ln1_g=jnp.ones((1, d_model), jnp.float32),
            ln1_b=jnp.zeros((1, d_model), jnp.float32),
            wq=wq, bq=bq, wk=wk, bk=bk, wv=wv, bv=bv, wo=wo, bo=bo,
            ln2_g=jnp.ones((1, d_model), jnp.float32),
            ln2_b=jnp.zeros((1, d_model), jnp.float32),
            w1=w1, b1=b1, w2=w2, b2=b2,
        ))
    return dict(
        layers=layers,
        norm_g=jnp.ones((1, d_model), jnp.float32),
        norm_b=jnp.zeros((1, d_model), jnp.float32),
    )


def reference_forward(x, params, num_heads):
    """Pure-JAX reference of the PyTorch module's forward (eval mode)."""
    B, S, D = x.shape
    hd = D // num_heads

    def ln(v, g, b):
        m = jnp.mean(v, axis=-1, keepdims=True)
        var = jnp.mean((v - m) ** 2, axis=-1, keepdims=True)
        return (v - m) / jnp.sqrt(var + EPS) * g + b

    hidden = []
    for lp in params["layers"]:
        xn = ln(x, lp["ln1_g"], lp["ln1_b"])
        q = (xn @ lp["wq"] + lp["bq"]).reshape(B, S, num_heads, hd).transpose(0, 2, 1, 3)
        k = (xn @ lp["wk"] + lp["bk"]).reshape(B, S, num_heads, hd).transpose(0, 2, 1, 3)
        v = (xn @ lp["wv"] + lp["bv"]).reshape(B, S, num_heads, hd).transpose(0, 2, 1, 3)
        s = (q @ k.transpose(0, 1, 3, 2)) / jnp.sqrt(jnp.float32(hd))
        p = jax.nn.softmax(s, axis=-1)
        ctx = (p @ v).transpose(0, 2, 1, 3).reshape(B, S, D)
        x = x + ctx @ lp["wo"] + lp["bo"]
        xn2 = ln(x, lp["ln2_g"], lp["ln2_b"])
        h1 = jax.nn.relu(xn2 @ lp["w1"] + lp["b1"])
        x = x + h1 @ lp["w2"] + lp["b2"]
        hidden.append(x)
    return hidden, ln(hidden[-1], params["norm_g"], params["norm_b"])


if __name__ == "__main__":
    B, S, D = 2, 8, 32
    NUM_HEADS, NUM_LAYERS = 2, 2
    FF_SIZE = 2096  # module default; padded to 2176 (next 128-multiple) internally

    key = jax.random.PRNGKey(0)
    kx, kp = jax.random.split(key)
    x = jax.random.normal(kx, (B, S, D), jnp.float32)
    params = init_params(kp, D, NUM_LAYERS, FF_SIZE)

    ref_hidden, ref_normed = reference_forward(x, params, NUM_HEADS)

    def check(hidden_states, normed, rel_tol):
        assert normed.shape == (B, S, D) and len(hidden_states) == NUM_LAYERS
        max_ref = float(jnp.max(jnp.abs(ref_normed)))
        err = float(jnp.max(jnp.abs(normed - ref_normed)))
        for h, r in zip(hidden_states, ref_hidden):
            err = max(err, float(jnp.max(jnp.abs(h - r))))
            max_ref = max(max_ref, float(jnp.max(jnp.abs(r))))
        assert err <= rel_tol * (1.0 + max_ref), (
            f"numerical mismatch: max |diff| = {err}")

    # Exact-parity path (f32 MXU operands, exact softmax reciprocal).
    hs32, n32 = transformer_encoder_forward(x, params, NUM_HEADS,
                                            mxu_dtype=jnp.float32)
    jax.block_until_ready(n32)
    check(hs32, n32, 2e-2)

    # Default fast path (bf16 weight streaming / MXU operands, f32 accumulation).
    hs16, n16 = transformer_encoder_forward(x, params, NUM_HEADS)
    jax.block_until_ready(n16)
    check(hs16, n16, 6e-2)

    print("KERNEL_OK")
</pallas_src>

<mosaic_0001>
module attributes {stable_mosaic.version = 11 : i64} {
  func.func @fused_encoder_kernel(%arg0: i32, %arg1: i32, %arg2: memref<16x32xf32, #tpu.memory_space<vmem>>, %arg3: memref<1x1x32xf32, #tpu.memory_space<vmem>>, %arg4: memref<1x1x32xf32, #tpu.memory_space<vmem>>, %arg5: memref<1x32x32xf32, #tpu.memory_space<vmem>>, %arg6: memref<1x1x32xf32, #tpu.memory_space<vmem>>, %arg7: memref<1x32x32xf32, #tpu.memory_space<vmem>>, %arg8: memref<1x1x32xf32, #tpu.memory_space<vmem>>, %arg9: memref<1x32x32xf32, #tpu.memory_space<vmem>>, %arg10: memref<1x1x32xf32, #tpu.memory_space<vmem>>, %arg11: memref<1x32x32xf32, #tpu.memory_space<vmem>>, %arg12: memref<1x1x32xf32, #tpu.memory_space<vmem>>, %arg13: memref<1x1x32xf32, #tpu.memory_space<vmem>>, %arg14: memref<1x1x32xf32, #tpu.memory_space<vmem>>, %arg15: memref<1x32x2176xf32, #tpu.memory_space<vmem>>, %arg16: memref<1x1x2176xf32, #tpu.memory_space<vmem>>, %arg17: memref<1x2176x32xf32, #tpu.memory_space<vmem>>, %arg18: memref<1x1x32xf32, #tpu.memory_space<vmem>>, %arg19: memref<1x32xf32, #tpu.memory_space<vmem>>, %arg20: memref<1x32xf32, #tpu.memory_space<vmem>>, %arg21: memref<1x16x32xf32, #tpu.memory_space<vmem>>, %arg22: memref<16x32xf32, #tpu.memory_space<vmem>>, %arg23: memref<16x32xf32, #tpu.memory_space<vmem>>, %arg24: memref<16x32xf32, #tpu.memory_space<vmem>>) attributes {dimension_semantics = [#tpu.dimension_semantics<parallel>, #tpu.dimension_semantics<arbitrary>], iteration_bounds = array<i64: 1, 2>, scalar_prefetch = 0 : i64, scratch_operands = 2 : i64, tpu.core_type = #tpu.core_type<tc>, window_params = [{transform_indices = @transform_0, window_bounds = array<i64: 16, 32>}, {transform_indices = @transform_1, window_bounds = array<i64: 1, 1, 32>}, {transform_indices = @transform_2, window_bounds = array<i64: 1, 1, 32>}, {transform_indices = @transform_3, window_bounds = array<i64: 1, 32, 32>}, {transform_indices = @transform_4, window_bounds = array<i64: 1, 1, 32>}, {transform_indices = @transform_5, window_bounds = array<i64: 1, 32, 32>}, {transform_indices = @transform_6, window_bounds = array<i64: 1, 1, 32>}, {transform_indices = @transform_7, window_bounds = array<i64: 1, 32, 32>}, {transform_indices = @transform_8, window_bounds = array<i64: 1, 1, 32>}, {transform_indices = @transform_9, window_bounds = array<i64: 1, 32, 32>}, {transform_indices = @transform_10, window_bounds = array<i64: 1, 1, 32>}, {transform_indices = @transform_11, window_bounds = array<i64: 1, 1, 32>}, {transform_indices = @transform_12, window_bounds = array<i64: 1, 1, 32>}, {transform_indices = @transform_13, window_bounds = array<i64: 1, 32, 2176>}, {transform_indices = @transform_14, window_bounds = array<i64: 1, 1, 2176>}, {transform_indices = @transform_15, window_bounds = array<i64: 1, 2176, 32>}, {transform_indices = @transform_16, window_bounds = array<i64: 1, 1, 32>}, {pipeline_mode = #tpu.pipeline_mode<synchronous>, transform_indices = @transform_17, window_bounds = array<i64: 1, 32>}, {pipeline_mode = #tpu.pipeline_mode<synchronous>, transform_indices = @transform_18, window_bounds = array<i64: 1, 32>}, {transform_indices = @transform_19, window_bounds = array<i64: 1, 16, 32>}, {transform_indices = @transform_20, window_bounds = array<i64: 16, 32>}]} {
    %c0_i32 = arith.constant 0 : i32
    %0 = arith.cmpi eq, %arg1, %c0_i32 : i32
    %1 = arith.extui %0 : i1 to i32
    %c0_i32_0 = arith.constant 0 : i32
    %2 = arith.cmpi ne, %1, %c0_i32_0 : i32
    scf.if %2 {
      %c0_108 = arith.constant 0 : index
      %c0_109 = arith.constant 0 : index
      %183 = vector.load %arg2[%c0_108, %c0_109] : memref<16x32xf32, #tpu.memory_space<vmem>>, vector<16x32xf32>
      %c0_110 = arith.constant 0 : index
      %c0_111 = arith.constant 0 : index
      %184 = vector.load %arg23[%c0_110, %c0_111] : memref<16x32xf32, #tpu.memory_space<vmem>>, vector<16x32xf32>
      tpu.vector_store %arg23[%c0_110, %c0_111], %183 {strides = array<i32>} : memref<16x32xf32, #tpu.memory_space<vmem>>, vector<16x32xf32>,
    } else {
    }
    %c0 = arith.constant 0 : index
    %c0_1 = arith.constant 0 : index
    %3 = vector.load %arg23[%c0, %c0_1] : memref<16x32xf32, #tpu.memory_space<vmem>>, vector<16x32xf32>
    %c0_2 = arith.constant 0 : index
    %c0_3 = arith.constant 0 : index
    %c0_4 = arith.constant 0 : index
    %4 = vector.load %arg3[%c0_2, %c0_3, %c0_4] : memref<1x1x32xf32, #tpu.memory_space<vmem>>, vector<1x1x32xf32>
    %5 = vector.shape_cast %4 : vector<1x1x32xf32> to vector<1x32xf32>
    %c0_5 = arith.constant 0 : index
    %c0_6 = arith.constant 0 : index
    %c0_7 = arith.constant 0 : index
    %6 = vector.load %arg4[%c0_5, %c0_6, %c0_7] : memref<1x1x32xf32, #tpu.memory_space<vmem>>, vector<1x1x32xf32>
    %7 = vector.shape_cast %6 : vector<1x1x32xf32> to vector<1x32xf32>
    %cst = arith.constant dense<0.000000e+00> : vector<16xf32>
    %8 = vector.multi_reduction <add>, %3, %cst [1] : vector<16x32xf32> to vector<16xf32>
    %9 = vector.shape_cast %8 : vector<16xf32> to vector<16x1xf32>
    %cst_8 = arith.constant 3.200000e+01 : f32
    %10 = vector.broadcast %cst_8 : f32 to vector<16x1xf32>
    %11 = arith.divf %9, %10 : vector<16x1xf32>
    %12 = vector.broadcast %11 : vector<16x1xf32> to vector<16x32xf32>
    %13 = arith.subf %3, %12 : vector<16x32xf32>
    %14 = arith.mulf %13, %13 : vector<16x32xf32>
    %cst_9 = arith.constant dense<0.000000e+00> : vector<16xf32>
    %15 = vector.multi_reduction <add>, %14, %cst_9 [1] : vector<16x32xf32> to vector<16xf32>
    %16 = vector.shape_cast %15 : vector<16xf32> to vector<16x1xf32>
    %cst_10 = arith.constant 3.200000e+01 : f32
    %17 = vector.broadcast %cst_10 : f32 to vector<16x1xf32>
    %18 = arith.divf %16, %17 : vector<16x1xf32>
    %19 = vector.broadcast %11 : vector<16x1xf32> to vector<16x32xf32>
    %20 = arith.subf %3, %19 : vector<16x32xf32>
    %cst_11 = arith.constant 9.99999974E-6 : f32
    %21 = vector.broadcast %cst_11 : f32 to vector<16x1xf32>
    %22 = arith.addf %18, %21 : vector<16x1xf32>
    %23 = math.rsqrt %22 : vector<16x1xf32>
    %24 = vector.broadcast %23 : vector<16x1xf32> to vector<16x32xf32>
    %25 = arith.mulf %20, %24 : vector<16x32xf32>
    %26 = vector.broadcast %5 : vector<1x32xf32> to vector<16x32xf32>
    %27 = arith.mulf %25, %26 : vector<16x32xf32>
    %28 = vector.broadcast %7 : vector<1x32xf32> to vector<16x32xf32>
    %29 = arith.addf %27, %28 : vector<16x32xf32>
    %c0_12 = arith.constant 0 : index
    %c0_13 = arith.constant 0 : index
    %c0_14 = arith.constant 0 : index
    %30 = vector.load %arg5[%c0_12, %c0_13, %c0_14] : memref<1x32x32xf32, #tpu.memory_space<vmem>>, vector<1x32x32xf32>
    %31 = vector.shape_cast %30 : vector<1x32x32xf32> to vector<32x32xf32>
    %cst_15 = arith.constant dense<0.000000e+00> : vector<16x32xf32>
    %32 = tpu.matmul %29, %31, %cst_15 {dimension_numbers = #tpu.dot_dimension_numbers<[1], [0], [0], [1], [0, 0, 1, 1], [], []>} : vector<16x32xf32>, vector<32x32xf32>, vector<16x32xf32> -> vector<16x32xf32>
    %c0_16 = arith.constant 0 : index
    %c0_17 = arith.constant 0 : index
    %c0_18 = arith.constant 0 : index
    %33 = vector.load %arg6[%c0_16, %c0_17, %c0_18] : memref<1x1x32xf32, #tpu.memory_space<vmem>>, vector<1x1x32xf32>
    %34 = vector.shape_cast %33 : vector<1x1x32xf32> to vector<1x32xf32>
    %35 = vector.broadcast %34 : vector<1x32xf32> to vector<16x32xf32>
    %36 = arith.addf %32, %35 : vector<16x32xf32>
    %c0_19 = arith.constant 0 : index
    %c0_20 = arith.constant 0 : index
    %c0_21 = arith.constant 0 : index
    %37 = vector.load %arg7[%c0_19, %c0_20, %c0_21] : memref<1x32x32xf32, #tpu.memory_space<vmem>>, vector<1x32x32xf32>
    %38 = vector.shape_cast %37 : vector<1x32x32xf32> to vector<32x32xf32>
    %cst_22 = arith.constant dense<0.000000e+00> : vector<16x32xf32>
    %39 = tpu.matmul %29, %38, %cst_22 {dimension_numbers = #tpu.dot_dimension_numbers<[1], [0], [0], [1], [0, 0, 1, 1], [], []>} : vector<16x32xf32>, vector<32x32xf32>, vector<16x32xf32> -> vector<16x32xf32>
    %c0_23 = arith.constant 0 : index
    %c0_24 = arith.constant 0 : index
    %c0_25 = arith.constant 0 : index
    %40 = vector.load %arg8[%c0_23, %c0_24, %c0_25] : memref<1x1x32xf32, #tpu.memory_space<vmem>>, vector<1x1x32xf32>
    %41 = vector.shape_cast %40 : vector<1x1x32xf32> to vector<1x32xf32>
    %42 = vector.broadcast %41 : vector<1x32xf32> to vector<16x32xf32>
    %43 = arith.addf %39, %42 : vector<16x32xf32>
    %c0_26 = arith.constant 0 : index
    %c0_27 = arith.constant 0 : index
    %c0_28 = arith.constant 0 : index
    %44 = vector.load %arg9[%c0_26, %c0_27, %c0_28] : memref<1x32x32xf32, #tpu.memory_space<vmem>>, vector<1x32x32xf32>
    %45 = vector.shape_cast %44 : vector<1x32x32xf32> to vector<32x32xf32>
    %cst_29 = arith.constant dense<0.000000e+00> : vector<16x32xf32>
    %46 = tpu.matmul %29, %45, %cst_29 {dimension_numbers = #tpu.dot_dimension_numbers<[1], [0], [0], [1], [0, 0, 1, 1], [], []>} : vector<16x32xf32>, vector<32x32xf32>, vector<16x32xf32> -> vector<16x32xf32>
    %c0_30 = arith.constant 0 : index
    %c0_31 = arith.constant 0 : index
    %c0_32 = arith.constant 0 : index
    %47 = vector.load %arg10[%c0_30, %c0_31, %c0_32] : memref<1x1x32xf32, #tpu.memory_space<vmem>>, vector<1x1x32xf32>
    %48 = vector.shape_cast %47 : vector<1x1x32xf32> to vector<1x32xf32>
    %49 = vector.broadcast %48 : vector<1x32xf32> to vector<16x32xf32>
    %50 = arith.addf %46, %49 : vector<16x32xf32>
    %cst_33 = arith.constant 2.500000e-01 : f32
    %51 = vector.broadcast %cst_33 : f32 to vector<16x32xf32>
    %52 = arith.mulf %36, %51 : vector<16x32xf32>
    %53 = vector.extract_strided_slice %52 {offsets = [0, 0], sizes = [16, 16], strides = [1, 1]} : vector<16x32xf32> to vector<16x16xf32>
    %54 = vector.shape_cast %53 : vector<16x16xf32> to vector<2x8x16xf32>
    %55 = vector.extract_strided_slice %52 {offsets = [0, 16], sizes = [16, 16], strides = [1, 1]} : vector<16x32xf32> to vector<16x16xf32>
    %56 = vector.shape_cast %55 : vector<16x16xf32> to vector<2x8x16xf32>
    %57 = tpu.concatenate %54, %56 in 0 : vector<2x8x16xf32>, vector<2x8x16xf32> -> vector<4x8x16xf32>
    %58 = vector.extract_strided_slice %43 {offsets = [0, 0], sizes = [16, 16], strides = [1, 1]} : vector<16x32xf32> to vector<16x16xf32>
    %59 = vector.shape_cast %58 : vector<16x16xf32> to vector<2x8x16xf32>
    %60 = vector.extract_strided_slice %43 {offsets = [0, 16], sizes = [16, 16], strides = [1, 1]} : vector<16x32xf32> to vector<16x16xf32>
    %61 = vector.shape_cast %60 : vector<16x16xf32> to vector<2x8x16xf32>
    %62 = tpu.concatenate %59, %61 in 0 : vector<2x8x16xf32>, vector<2x8x16xf32> -> vector<4x8x16xf32>
    %63 = vector.extract_strided_slice %50 {offsets = [0, 0], sizes = [16, 16], strides = [1, 1]} : vector<16x32xf32> to vector<16x16xf32>
    %64 = vector.shape_cast %63 : vector<16x16xf32> to vector<2x8x16xf32>
    %65 = vector.extract_strided_slice %50 {offsets = [0, 16], sizes = [16, 16], strides = [1, 1]} : vector<16x32xf32> to vector<16x16xf32>
    %66 = vector.shape_cast %65 : vector<16x16xf32> to vector<2x8x16xf32>
    %67 = tpu.concatenate %64, %66 in 0 : vector<2x8x16xf32>, vector<2x8x16xf32> -> vector<4x8x16xf32>
    %cst_34 = arith.constant -1.000000e+30 : f32
    %68 = vector.broadcast %cst_34 : f32 to vector<4x8x1xf32>
    %cst_35 = arith.constant 0.000000e+00 : f32
    %69 = vector.broadcast %cst_35 : f32 to vector<4x8x1xf32>
    %cst_36 = arith.constant 0.000000e+00 : f32
    %70 = vector.broadcast %cst_36 : f32 to vector<4x8x16xf32>
    "tpu.trace_start"() <{level = 10 : i32, message = "bqd,bkd->bqk"}> : () -> ()
    %cst_37 = arith.constant dense<0.000000e+00> : vector<4x8x8xf32>
    %71 = tpu.matmul %57, %62, %cst_37 {dimension_numbers = #tpu.dot_dimension_numbers<[2], [2], [1], [1], [0, 0, 0, 1, 1, 1], [0], [0]>} : vector<4x8x16xf32>, vector<4x8x16xf32>, vector<4x8x8xf32> -> vector<4x8x8xf32>
    "tpu.trace_stop"() : () -> ()
    %cst_38 = arith.constant dense<0xFF800000> : vector<4x8xf32>
    %72 = vector.multi_reduction <maximumf>, %71, %cst_38 [2] : vector<4x8x8xf32> to vector<4x8xf32>
    %73 = vector.shape_cast %72 : vector<4x8xf32> to vector<4x8x1xf32>
    %74 = arith.maximumf %68, %73 : vector<4x8x1xf32>
    %75 = arith.subf %68, %74 : vector<4x8x1xf32>
    %76 = math.exp %75 : vector<4x8x1xf32>
    %77 = vector.broadcast %74 : vector<4x8x1xf32> to vector<4x8x8xf32>
    %78 = arith.subf %71, %77 : vector<4x8x8xf32>
    %79 = math.exp %78 : vector<4x8x8xf32>
    %80 = arith.mulf %76, %69 : vector<4x8x1xf32>
    %cst_39 = arith.constant dense<0.000000e+00> : vector<4x8xf32>
    %81 = vector.multi_reduction <add>, %79, %cst_39 [2] : vector<4x8x8xf32> to vector<4x8xf32>
    %82 = vector.shape_cast %81 : vector<4x8xf32> to vector<4x8x1xf32>
    %83 = arith.addf %80, %82 : vector<4x8x1xf32>
    %84 = vector.broadcast %76 : vector<4x8x1xf32> to vector<4x8x16xf32>
    %85 = arith.mulf %84, %70 : vector<4x8x16xf32>
    "tpu.trace_start"() <{level = 10 : i32, message = "bqk,bkd->bqd"}> : () -> ()
    %cst_40 = arith.constant dense<0.000000e+00> : vector<4x8x16xf32>
    %86 = tpu.matmul %79, %67, %cst_40 {dimension_numbers = #tpu.dot_dimension_numbers<[2], [1], [1], [2], [0, 0, 0, 1, 1, 2], [0], [0]>} : vector<4x8x8xf32>, vector<4x8x16xf32>, vector<4x8x16xf32> -> vector<4x8x16xf32>
    "tpu.trace_stop"() : () -> ()
    %87 = arith.addf %85, %86 : vector<4x8x16xf32>
    %cst_41 = arith.constant 1.000000e+00 : f32
    %88 = vector.broadcast %cst_41 : f32 to vector<4x8x1xf32>
    %89 = arith.divf %88, %83 : vector<4x8x1xf32>
    %90 = vector.broadcast %89 : vector<4x8x1xf32> to vector<4x8x16xf32>
    %91 = arith.mulf %87, %90 : vector<4x8x16xf32>
    %92 = vector.extract_strided_slice %91 {offsets = [0, 0, 0], sizes = [2, 8, 16], strides = [1, 1, 1]} : vector<4x8x16xf32> to vector<2x8x16xf32>
    %93 = vector.shape_cast %92 : vector<2x8x16xf32> to vector<16x16xf32>
    %c0_42 = arith.constant 0 : index
    %c0_43 = arith.constant 0 : index
    %94 = vector.load %arg24[%c0_42, %c0_43] : memref<16x32xf32, #tpu.memory_space<vmem>>, vector<16x16xf32>
    tpu.vector_store %arg24[%c0_42, %c0_43], %93 {strides = array<i32>} : memref<16x32xf32, #tpu.memory_space<vmem>>, vector<16x16xf32>,
    %95 = vector.extract_strided_slice %91 {offsets = [2, 0, 0], sizes = [2, 8, 16], strides = [1, 1, 1]} : vector<4x8x16xf32> to vector<2x8x16xf32>
    %96 = vector.shape_cast %95 : vector<2x8x16xf32> to vector<16x16xf32>
    %c0_44 = arith.constant 0 : index
    %c16 = arith.constant 16 : index
    %97 = vector.load %arg24[%c0_44, %c16] : memref<16x32xf32, #tpu.memory_space<vmem>>, vector<16x16xf32>
    tpu.vector_store %arg24[%c0_44, %c16], %96 {strides = array<i32>} : memref<16x32xf32, #tpu.memory_space<vmem>>, vector<16x16xf32>,
    %c0_45 = arith.constant 0 : index
    %c0_46 = arith.constant 0 : index
    %98 = vector.load %arg24[%c0_45, %c0_46] : memref<16x32xf32, #tpu.memory_space<vmem>>, vector<16x32xf32>
    %c0_47 = arith.constant 0 : index
    %c0_48 = arith.constant 0 : index
    %c0_49 = arith.constant 0 : index
    %99 = vector.load %arg11[%c0_47, %c0_48, %c0_49] : memref<1x32x32xf32, #tpu.memory_space<vmem>>, vector<1x32x32xf32>
    %100 = vector.shape_cast %99 : vector<1x32x32xf32> to vector<32x32xf32>
    %cst_50 = arith.constant dense<0.000000e+00> : vector<16x32xf32>
    %101 = tpu.matmul %98, %100, %cst_50 {dimension_numbers = #tpu.dot_dimension_numbers<[1], [0], [0], [1], [0, 0, 1, 1], [], []>} : vector<16x32xf32>, vector<32x32xf32>, vector<16x32xf32> -> vector<16x32xf32>
    %102 = arith.addf %3, %101 : vector<16x32xf32>
    %c0_51 = arith.constant 0 : index
    %c0_52 = arith.constant 0 : index
    %c0_53 = arith.constant 0 : index
    %103 = vector.load %arg12[%c0_51, %c0_52, %c0_53] : memref<1x1x32xf32, #tpu.memory_space<vmem>>, vector<1x1x32xf32>
    %104 = vector.shape_cast %103 : vector<1x1x32xf32> to vector<1x32xf32>
    %105 = vector.broadcast %104 : vector<1x32xf32> to vector<16x32xf32>
    %106 = arith.addf %102, %105 : vector<16x32xf32>
    %c0_54 = arith.constant 0 : index
    %c0_55 = arith.constant 0 : index
    %c0_56 = arith.constant 0 : index
    %107 = vector.load %arg13[%c0_54, %c0_55, %c0_56] : memref<1x1x32xf32, #tpu.memory_space<vmem>>, vector<1x1x32xf32>
    %108 = vector.shape_cast %107 : vector<1x1x32xf32> to vector<1x32xf32>
    %c0_57 = arith.constant 0 : index
    %c0_58 = arith.constant 0 : index
    %c0_59 = arith.constant 0 : index
    %109 = vector.load %arg14[%c0_57, %c0_58, %c0_59] : memref<1x1x32xf32, #tpu.memory_space<vmem>>, vector<1x1x32xf32>
    %110 = vector.shape_cast %109 : vector<1x1x32xf32> to vector<1x32xf32>
    %cst_60 = arith.constant dense<0.000000e+00> : vector<16xf32>
    %111 = vector.multi_reduction <add>, %106, %cst_60 [1] : vector<16x32xf32> to vector<16xf32>
    %112 = vector.shape_cast %111 : vector<16xf32> to vector<16x1xf32>
    %cst_61 = arith.constant 3.200000e+01 : f32
    %113 = vector.broadcast %cst_61 : f32 to vector<16x1xf32>
    %114 = arith.divf %112, %113 : vector<16x1xf32>
    %115 = vector.broadcast %114 : vector<16x1xf32> to vector<16x32xf32>
    %116 = arith.subf %106, %115 : vector<16x32xf32>
    %117 = arith.mulf %116, %116 : vector<16x32xf32>
    %cst_62 = arith.constant dense<0.000000e+00> : vector<16xf32>
    %118 = vector.multi_reduction <add>, %117, %cst_62 [1] : vector<16x32xf32> to vector<16xf32>
    %119 = vector.shape_cast %118 : vector<16xf32> to vector<16x1xf32>
    %cst_63 = arith.constant 3.200000e+01 : f32
    %120 = vector.broadcast %cst_63 : f32 to vector<16x1xf32>
    %121 = arith.divf %119, %120 : vector<16x1xf32>
    %122 = vector.broadcast %114 : vector<16x1xf32> to vector<16x32xf32>
    %123 = arith.subf %106, %122 : vector<16x32xf32>
    %cst_64 = arith.constant 9.99999974E-6 : f32
    %124 = vector.broadcast %cst_64 : f32 to vector<16x1xf32>
    %125 = arith.addf %121, %124 : vector<16x1xf32>
    %126 = math.rsqrt %125 : vector<16x1xf32>
    %127 = vector.broadcast %126 : vector<16x1xf32> to vector<16x32xf32>
    %128 = arith.mulf %123, %127 : vector<16x32xf32>
    %129 = vector.broadcast %108 : vector<1x32xf32> to vector<16x32xf32>
    %130 = arith.mulf %128, %129 : vector<16x32xf32>
    %131 = vector.broadcast %110 : vector<1x32xf32> to vector<16x32xf32>
    %132 = arith.addf %130, %131 : vector<16x32xf32>
    %c0_65 = arith.constant 0 : index
    %c0_66 = arith.constant 0 : index
    %c0_67 = arith.constant 0 : index
    %133 = vector.load %arg15[%c0_65, %c0_66, %c0_67] : memref<1x32x2176xf32, #tpu.memory_space<vmem>>, vector<1x32x1024xf32>
    %134 = vector.shape_cast %133 : vector<1x32x1024xf32> to vector<32x1024xf32>
    %cst_68 = arith.constant dense<0.000000e+00> : vector<16x1024xf32>
    %135 = tpu.matmul %132, %134, %cst_68 {dimension_numbers = #tpu.dot_dimension_numbers<[1], [0], [0], [1], [0, 0, 1, 1], [], []>} : vector<16x32xf32>, vector<32x1024xf32>, vector<16x1024xf32> -> vector<16x1024xf32>
    %c0_69 = arith.constant 0 : index
    %c0_70 = arith.constant 0 : index
    %c0_71 = arith.constant 0 : index
    %136 = vector.load %arg16[%c0_69, %c0_70, %c0_71] : memref<1x1x2176xf32, #tpu.memory_space<vmem>>, vector<1x1x1024xf32>
    %137 = vector.shape_cast %136 : vector<1x1x1024xf32> to vector<1x1024xf32>
    %138 = vector.broadcast %137 : vector<1x1024xf32> to vector<16x1024xf32>
    %139 = arith.addf %135, %138 : vector<16x1024xf32>
    %cst_72 = arith.constant 0.000000e+00 : f32
    %140 = vector.broadcast %cst_72 : f32 to vector<16x1024xf32>
    %141 = arith.maximumf %139, %140 : vector<16x1024xf32>
    %c0_73 = arith.constant 0 : index
    %c0_74 = arith.constant 0 : index
    %c0_75 = arith.constant 0 : index
    %142 = vector.load %arg17[%c0_73, %c0_74, %c0_75] : memref<1x2176x32xf32, #tpu.memory_space<vmem>>, vector<1x1024x32xf32>
    %143 = vector.shape_cast %142 : vector<1x1024x32xf32> to vector<1024x32xf32>
    %cst_76 = arith.constant dense<0.000000e+00> : vector<16x32xf32>
    %144 = tpu.matmul %141, %143, %cst_76 {dimension_numbers = #tpu.dot_dimension_numbers<[1], [0], [0], [1], [0, 0, 1, 1], [], []>} : vector<16x1024xf32>, vector<1024x32xf32>, vector<16x32xf32> -> vector<16x32xf32>
    %c0_77 = arith.constant 0 : index
    %c0_78 = arith.constant 0 : index
    %c1024 = arith.constant 1024 : index
    %145 = vector.load %arg15[%c0_77, %c0_78, %c1024] : memref<1x32x2176xf32, #tpu.memory_space<vmem>>, vector<1x32x1024xf32>
    %146 = vector.shape_cast %145 : vector<1x32x1024xf32> to vector<32x1024xf32>
    %cst_79 = arith.constant dense<0.000000e+00> : vector<16x1024xf32>
    %147 = tpu.matmul %132, %146, %cst_79 {dimension_numbers = #tpu.dot_dimension_numbers<[1], [0], [0], [1], [0, 0, 1, 1], [], []>} : vector<16x32xf32>, vector<32x1024xf32>, vector<16x1024xf32> -> vector<16x1024xf32>
    %c0_80 = arith.constant 0 : index
    %c0_81 = arith.constant 0 : index
    %c1024_82 = arith.constant 1024 : index
    %148 = vector.load %arg16[%c0_80, %c0_81, %c1024_82] : memref<1x1x2176xf32, #tpu.memory_space<vmem>>, vector<1x1x1024xf32>
    %149 = vector.shape_cast %148 : vector<1x1x1024xf32> to vector<1x1024xf32>
    %150 = vector.broadcast %149 : vector<1x1024xf32> to vector<16x1024xf32>
    %151 = arith.addf %147, %150 : vector<16x1024xf32>
    %cst_83 = arith.constant 0.000000e+00 : f32
    %152 = vector.broadcast %cst_83 : f32 to vector<16x1024xf32>
    %153 = arith.maximumf %151, %152 : vector<16x1024xf32>
    %c0_84 = arith.constant 0 : index
    %c1024_85 = arith.constant 1024 : index
    %c0_86 = arith.constant 0 : index
    %154 = vector.load %arg17[%c0_84, %c1024_85, %c0_86] : memref<1x2176x32xf32, #tpu.memory_space<vmem>>, vector<1x1024x32xf32>
    %155 = vector.shape_cast %154 : vector<1x1024x32xf32> to vector<1024x32xf32>
    %cst_87 = arith.constant dense<0.000000e+00> : vector<16x32xf32>
    %156 = tpu.matmul %153, %155, %cst_87 {dimension_numbers = #tpu.dot_dimension_numbers<[1], [0], [0], [1], [0, 0, 1, 1], [], []>} : vector<16x1024xf32>, vector<1024x32xf32>, vector<16x32xf32> -> vector<16x32xf32>
    %157 = arith.addf %144, %156 : vector<16x32xf32>
    %c0_88 = arith.constant 0 : index
    %c0_89 = arith.constant 0 : index
    %c2048 = arith.constant 2048 : index
    %158 = vector.load %arg15[%c0_88, %c0_89, %c2048] : memref<1x32x2176xf32, #tpu.memory_space<vmem>>, vector<1x32x128xf32>
    %159 = vector.shape_cast %158 : vector<1x32x128xf32> to vector<32x128xf32>
    %cst_90 = arith.constant dense<0.000000e+00> : vector<16x128xf32>
    %160 = tpu.matmul %132, %159, %cst_90 {dimension_numbers = #tpu.dot_dimension_numbers<[1], [0], [0], [1], [0, 0, 1, 1], [], []>} : vector<16x32xf32>, vector<32x128xf32>, vector<16x128xf32> -> vector<16x128xf32>
    %c0_91 = arith.constant 0 : index
    %c0_92 = arith.constant 0 : index
    %c2048_93 = arith.constant 2048 : index
    %161 = vector.load %arg16[%c0_91, %c0_92, %c2048_93] : memref<1x1x2176xf32, #tpu.memory_space<vmem>>, vector<1x1x128xf32>
    %162 = vector.shape_cast %161 : vector<1x1x128xf32> to vector<1x128xf32>
    %163 = vector.broadcast %162 : vector<1x128xf32> to vector<16x128xf32>
    %164 = arith.addf %160, %163 : vector<16x128xf32>
    %cst_94 = arith.constant 0.000000e+00 : f32
    %165 = vector.broadcast %cst_94 : f32 to vector<16x128xf32>
    %166 = arith.maximumf %164, %165 : vector<16x128xf32>
    %c0_95 = arith.constant 0 : index
    %c2048_96 = arith.constant 2048 : index
    %c0_97 = arith.constant 0 : index
    %167 = vector.load %arg17[%c0_95, %c2048_96, %c0_97] : memref<1x2176x32xf32, #tpu.memory_space<vmem>>, vector<1x128x32xf32>
    %168 = vector.shape_cast %167 : vector<1x128x32xf32> to vector<128x32xf32>
    %cst_98 = arith.constant dense<0.000000e+00> : vector<16x32xf32>
    %169 = tpu.matmul %166, %168, %cst_98 {dimension_numbers = #tpu.dot_dimension_numbers<[1], [0], [0], [1], [0, 0, 1, 1], [], []>} : vector<16x128xf32>, vector<128x32xf32>, vector<16x32xf32> -> vector<16x32xf32>
    %170 = arith.addf %157, %169 : vector<16x32xf32>
    %171 = arith.addf %106, %170 : vector<16x32xf32>
    %c0_99 = arith.constant 0 : index
    %c0_100 = arith.constant 0 : index
    %c0_101 = arith.constant 0 : index
    %172 = vector.load %arg18[%c0_99, %c0_100, %c0_101] : memref<1x1x32xf32, #tpu.memory_space<vmem>>, vector<1x1x32xf32>
    %173 = vector.shape_cast %172 : vector<1x1x32xf32> to vector<1x32xf32>
    %174 = vector.broadcast %173 : vector<1x32xf32> to vector<16x32xf32>
    %175 = arith.addf %171, %174 : vector<16x32xf32>
    %c0_102 = arith.constant 0 : index
    %c0_103 = arith.constant 0 : index
    %176 = vector.load %arg23[%c0_102, %c0_103] : memref<16x32xf32, #tpu.memory_space<vmem>>, vector<16x32xf32>
    tpu.vector_store %arg23[%c0_102, %c0_103], %175 {strides = array<i32>} : memref<16x32xf32, #tpu.memory_space<vmem>>, vector<16x32xf32>,
    %c0_104 = arith.constant 0 : index
    %c0_105 = arith.constant 0 : index
    %c0_106 = arith.constant 0 : index
    %177 = vector.load %arg21[%c0_104, %c0_105, %c0_106] : memref<1x16x32xf32, #tpu.memory_space<vmem>>, vector<1x16x32xf32>
    %178 = vector.shape_cast %177 : vector<1x16x32xf32> to vector<16x32xf32>
    %179 = vector.shape_cast %175 : vector<16x32xf32> to vector<1x16x32xf32>
    tpu.vector_store %arg21[%c0_104, %c0_105, %c0_106], %179 {strides = array<i32>} : memref<1x16x32xf32, #tpu.memory_space<vmem>>, vector<1x16x32xf32>,
    %c1_i32 = arith.constant 1 : i32
    %180 = arith.cmpi eq, %arg1, %c1_i32 : i32
    %181 = arith.extui %180 : i1 to i32
    %c0_i32_107 = arith.constant 0 : i32
    %182 = arith.cmpi ne, %181, %c0_i32_107 : i32
    scf.if %182 {
      %c0_108 = arith.constant 0 : index
      %c0_109 = arith.constant 0 : index
      %183 = vector.load %arg19[%c0_108, %c0_109] : memref<1x32xf32, #tpu.memory_space<vmem>>, vector<1x32xf32>
      %c0_110 = arith.constant 0 : index
      %c0_111 = arith.constant 0 : index
      %184 = vector.load %arg20[%c0_110, %c0_111] : memref<1x32xf32, #tpu.memory_space<vmem>>, vector<1x32xf32>
      %cst_112 = arith.constant dense<0.000000e+00> : vector<16xf32>
      %185 = vector.multi_reduction <add>, %175, %cst_112 [1] : vector<16x32xf32> to vector<16xf32>
      %186 = vector.shape_cast %185 : vector<16xf32> to vector<16x1xf32>
      %cst_113 = arith.constant 3.200000e+01 : f32
      %187 = vector.broadcast %cst_113 : f32 to vector<16x1xf32>
      %188 = arith.divf %186, %187 : vector<16x1xf32>
      %189 = vector.broadcast %188 : vector<16x1xf32> to vector<16x32xf32>
      %190 = arith.subf %175, %189 : vector<16x32xf32>
      %191 = arith.mulf %190, %190 : vector<16x32xf32>
      %cst_114 = arith.constant dense<0.000000e+00> : vector<16xf32>
      %192 = vector.multi_reduction <add>, %191, %cst_114 [1] : vector<16x32xf32> to vector<16xf32>
      %193 = vector.shape_cast %192 : vector<16xf32> to vector<16x1xf32>
      %cst_115 = arith.constant 3.200000e+01 : f32
      %194 = vector.broadcast %cst_115 : f32 to vector<16x1xf32>
      %195 = arith.divf %193, %194 : vector<16x1xf32>
      %196 = vector.broadcast %188 : vector<16x1xf32> to vector<16x32xf32>
      %197 = arith.subf %175, %196 : vector<16x32xf32>
      %cst_116 = arith.constant 9.99999974E-6 : f32
      %198 = vector.broadcast %cst_116 : f32 to vector<16x1xf32>
      %199 = arith.addf %195, %198 : vector<16x1xf32>
      %200 = math.rsqrt %199 : vector<16x1xf32>
      %201 = vector.broadcast %200 : vector<16x1xf32> to vector<16x32xf32>
      %202 = arith.mulf %197, %201 : vector<16x32xf32>
      %203 = vector.broadcast %183 : vector<1x32xf32> to vector<16x32xf32>
      %204 = arith.mulf %202, %203 : vector<16x32xf32>
      %205 = vector.broadcast %184 : vector<1x32xf32> to vector<16x32xf32>
      %206 = arith.addf %204, %205 : vector<16x32xf32>
      %c0_117 = arith.constant 0 : index
      %c0_118 = arith.constant 0 : index
      %207 = vector.load %arg22[%c0_117, %c0_118] : memref<16x32xf32, #tpu.memory_space<vmem>>, vector<16x32xf32>
      tpu.vector_store %arg22[%c0_117, %c0_118], %206 {strides = array<i32>} : memref<16x32xf32, #tpu.memory_space<vmem>>, vector<16x32xf32>,
    } else {
    }
    return
  }
  func.func @transform_0(%arg0: i32, %arg1: i32) -> (i32, i32) {
    %c0_i32 = arith.constant 0 : i32
    %c0_i32_0 = arith.constant 0 : i32
    return %arg0, %c0_i32 : i32, i32
  }
  func.func @transform_1(%arg0: i32, %arg1: i32) -> (i32, i32, i32) {
    %c0_i32 = arith.constant 0 : i32
    %c0_i32_0 = arith.constant 0 : i32
    %c0_i32_1 = arith.constant 0 : i32
    return %arg1, %c0_i32, %c0_i32_0 : i32, i32, i32
  }
  func.func @transform_2(%arg0: i32, %arg1: i32) -> (i32, i32, i32) {
    %c0_i32 = arith.constant 0 : i32
    %c0_i32_0 = arith.constant 0 : i32
    %c0_i32_1 = arith.constant 0 : i32
    return %arg1, %c0_i32, %c0_i32_0 : i32, i32, i32
  }
  func.func @transform_3(%arg0: i32, %arg1: i32) -> (i32, i32, i32) {
    %c0_i32 = arith.constant 0 : i32
    %c0_i32_0 = arith.constant 0 : i32
    %c0_i32_1 = arith.constant 0 : i32
    return %arg1, %c0_i32, %c0_i32_0 : i32, i32, i32
  }
  func.func @transform_4(%arg0: i32, %arg1: i32) -> (i32, i32, i32) {
    %c0_i32 = arith.constant 0 : i32
    %c0_i32_0 = arith.constant 0 : i32
    %c0_i32_1 = arith.constant 0 : i32
    return %arg1, %c0_i32, %c0_i32_0 : i32, i32, i32
  }
  func.func @transform_5(%arg0: i32, %arg1: i32) -> (i32, i32, i32) {
    %c0_i32 = arith.constant 0 : i32
    %c0_i32_0 = arith.constant 0 : i32
    %c0_i32_1 = arith.constant 0 : i32
    return %arg1, %c0_i32, %c0_i32_0 : i32, i32, i32
  }
  func.func @transform_6(%arg0: i32, %arg1: i32) -> (i32, i32, i32) {
    %c0_i32 = arith.constant 0 : i32
    %c0_i32_0 = arith.constant 0 : i32
    %c0_i32_1 = arith.constant 0 : i32
    return %arg1, %c0_i32, %c0_i32_0 : i32, i32, i32
  }
  func.func @transform_7(%arg0: i32, %arg1: i32) -> (i32, i32, i32) {
    %c0_i32 = arith.constant 0 : i32
    %c0_i32_0 = arith.constant 0 : i32
    %c0_i32_1 = arith.constant 0 : i32
    return %arg1, %c0_i32, %c0_i32_0 : i32, i32, i32
  }
  func.func @transform_8(%arg0: i32, %arg1: i32) -> (i32, i32, i32) {
    %c0_i32 = arith.constant 0 : i32
    %c0_i32_0 = arith.constant 0 : i32
    %c0_i32_1 = arith.constant 0 : i32
    return %arg1, %c0_i32, %c0_i32_0 : i32, i32, i32
  }
  func.func @transform_9(%arg0: i32, %arg1: i32) -> (i32, i32, i32) {
    %c0_i32 = arith.constant 0 : i32
    %c0_i32_0 = arith.constant 0 : i32
    %c0_i32_1 = arith.constant 0 : i32
    return %arg1, %c0_i32, %c0_i32_0 : i32, i32, i32
  }
  func.func @transform_10(%arg0: i32, %arg1: i32) -> (i32, i32, i32) {
    %c0_i32 = arith.constant 0 : i32
    %c0_i32_0 = arith.constant 0 : i32
    %c0_i32_1 = arith.constant 0 : i32
    return %arg1, %c0_i32, %c0_i32_0 : i32, i32, i32
  }
  func.func @transform_11(%arg0: i32, %arg1: i32) -> (i32, i32, i32) {
    %c0_i32 = arith.constant 0 : i32
    %c0_i32_0 = arith.constant 0 : i32
    %c0_i32_1 = arith.constant 0 : i32
    return %arg1, %c0_i32, %c0_i32_0 : i32, i32, i32
  }
  func.func @transform_12(%arg0: i32, %arg1: i32) -> (i32, i32, i32) {
    %c0_i32 = arith.constant 0 : i32
    %c0_i32_0 = arith.constant 0 : i32
    %c0_i32_1 = arith.constant 0 : i32
    return %arg1, %c0_i32, %c0_i32_0 : i32, i32, i32
  }
  func.func @transform_13(%arg0: i32, %arg1: i32) -> (i32, i32, i32) {
    %c0_i32 = arith.constant 0 : i32
    %c0_i32_0 = arith.constant 0 : i32
    %c0_i32_1 = arith.constant 0 : i32
    return %arg1, %c0_i32, %c0_i32_0 : i32, i32, i32
  }
  func.func @transform_14(%arg0: i32, %arg1: i32) -> (i32, i32, i32) {
    %c0_i32 = arith.constant 0 : i32
    %c0_i32_0 = arith.constant 0 : i32
    %c0_i32_1 = arith.constant 0 : i32
    return %arg1, %c0_i32, %c0_i32_0 : i32, i32, i32
  }
  func.func @transform_15(%arg0: i32, %arg1: i32) -> (i32, i32, i32) {
    %c0_i32 = arith.constant 0 : i32
    %c0_i32_0 = arith.constant 0 : i32
    %c0_i32_1 = arith.constant 0 : i32
    return %arg1, %c0_i32, %c0_i32_0 : i32, i32, i32
  }
  func.func @transform_16(%arg0: i32, %arg1: i32) -> (i32, i32, i32) {
    %c0_i32 = arith.constant 0 : i32
    %c0_i32_0 = arith.constant 0 : i32
    %c0_i32_1 = arith.constant 0 : i32
    return %arg1, %c0_i32, %c0_i32_0 : i32, i32, i32
  }
  func.func @transform_17(%arg0: i32, %arg1: i32) -> (i32, i32) {
    %c0_i32 = arith.constant 0 : i32
    %c0_i32_0 = arith.constant 0 : i32
    %c0_i32_1 = arith.constant 0 : i32
    return %c0_i32, %c0_i32_0 : i32, i32
  }
  func.func @transform_18(%arg0: i32, %arg1: i32) -> (i32, i32) {
    %c0_i32 = arith.constant 0 : i32
    %c0_i32_0 = arith.constant 0 : i32
    %c0_i32_1 = arith.constant 0 : i32
    return %c0_i32, %c0_i32_0 : i32, i32
  }
  func.func @transform_19(%arg0: i32, %arg1: i32) -> (i32, i32, i32) {
    %c0_i32 = arith.constant 0 : i32
    %c0_i32_0 = arith.constant 0 : i32
    return %arg1, %arg0, %c0_i32 : i32, i32, i32
  }
  func.func @transform_20(%arg0: i32, %arg1: i32) -> (i32, i32) {
    %c0_i32 = arith.constant 0 : i32
    %c0_i32_0 = arith.constant 0 : i32
    return %arg0, %c0_i32 : i32, i32
  }
}

</mosaic_0001>

<llo_original>
// kernel: tpu_custom_call.1
$region0: #{tpu_custom_call.1}
  #allocation0 [shape = 'u32[]', space=smem, size = 0x4, offset = 0x4, fixed_abs, tag = 'smem constant byte address 0x4 - core index']
  #allocation1 [shape = 'u32[144,128]{1,0:T(1,128)}', space=vmem, size = 0x12000, scoped, tag = 'internal scratch']
  #allocation2 [shape = 'f32[16,32]{1,0:T(8,128)}', space=vmem, size = 0x2000, scoped, tag = 'scratch operand']
  #allocation3 [shape = 'f32[16,32]{1,0:T(8,128)}', space=vmem, size = 0x2000, scoped, tag = 'scratch operand']
  %s0 = inlined_call_operand.vmem [shape: f32[16,32], index: 0, kind: input, shape index: {}]
  %s1 = inlined_call_operand.vmem [shape: f32[2,1,32], index: 1, kind: input, shape index: {}]
  %s2 = inlined_call_operand.vmem [shape: f32[2,1,32], index: 2, kind: input, shape index: {}]
  %s3 = inlined_call_operand.vmem [shape: f32[2,32,32], index: 3, kind: input, shape index: {}]
  %s4 = inlined_call_operand.vmem [shape: f32[2,1,32], index: 4, kind: input, shape index: {}]
  %s5 = inlined_call_operand.vmem [shape: f32[2,32,32], index: 5, kind: input, shape index: {}]
  %s6 = inlined_call_operand.vmem [shape: f32[2,1,32], index: 6, kind: input, shape index: {}]
  %s7 = inlined_call_operand.vmem [shape: f32[2,32,32], index: 7, kind: input, shape index: {}]
  %s8 = inlined_call_operand.vmem [shape: f32[2,1,32], index: 8, kind: input, shape index: {}]
  %s9 = inlined_call_operand.vmem [shape: f32[2,32,32], index: 9, kind: input, shape index: {}]
  %s10 = inlined_call_operand.vmem [shape: f32[2,1,32], index: 10, kind: input, shape index: {}]
  %s11 = inlined_call_operand.vmem [shape: f32[2,1,32], index: 11, kind: input, shape index: {}]
  %s12 = inlined_call_operand.vmem [shape: f32[2,1,32], index: 12, kind: input, shape index: {}]
  %s13 = inlined_call_operand.vmem [shape: f32[2,32,2176], index: 13, kind: input, shape index: {}]
  %s14 = inlined_call_operand.vmem [shape: f32[2,1,2176], index: 14, kind: input, shape index: {}]
  %s15 = inlined_call_operand.vmem [shape: f32[2,2176,32], index: 15, kind: input, shape index: {}]
  %s16 = inlined_call_operand.vmem [shape: f32[2,1,32], index: 16, kind: input, shape index: {}]
  %s17 = inlined_call_operand.vmem [shape: f32[1,32], index: 17, kind: input, shape index: {}]
  %s18 = inlined_call_operand.vmem [shape: f32[1,32], index: 18, kind: input, shape index: {}]
  %s19 = inlined_call_operand.hbm [shape: f32[2,16,32], index: 19, kind: output, shape index: {0}]
  %s20 = inlined_call_operand.hbm [shape: f32[16,32], index: 20, kind: output, shape index: {1}]
  %21 = xla_tuple %s19, %s20
  %s22 = sld [smem:[#allocation0]]
  $region125: #{tpu_custom_call.1} parent=0
    _
  %s24 = ssub.s32 1, %s22
  %s25 = scalar_select 0, %s24, %s22
  $region1: #{tpu_custom_call.1} parent=0
    #allocation4 [shape = 'u8[16384]{0}', space=vmem, size = 0x4000, scoped, tag = 'output window, operand 0']
    #allocation5 [shape = 's32[2]{0}', space=sflag, size = 0x8, scoped, tag = 'scoped memory for tpu_custom_call.1']
    #allocation6 [shape = 'u8[8192]{0}', space=vmem, size = 0x2000, scoped, tag = 'output window, operand 1, single buffered']
    #allocation7 [shape = 's32[1]{0}', space=sflag, size = 0x4, scoped, tag = 'scoped memory for tpu_custom_call.1']
    %26 = vsyncpa [#allocation5], 0
    %s27 = scalar_lea.sflag [#allocation5], 1
    %28 = vsyncpa %s27, 0
    %29 = vsyncpa [#allocation7], 0
    loop: start=0, step=1, limit=4
    $region2: #{tpu_custom_call.1} parent=1 // loop_pre_header
      _
    $region3: #{tpu_custom_call.1} parent=1 // loop_header
      %s31 = sphi 0, %s35
      %p32 = scmp.ge.s32.totalorder %s31, 4
      %s38 = sphi 0, %s50
      %s39 = sphi 0, %s46
      %s40 = sphi 0, %s38
      %s41 = sphi 0, %s39
      %s42 = sphi 0, %s40
      %s43 = sphi 0, %s41
      %s53 = sphi 0, %s55
      %s56 = sphi 0, %s53
      %s57 = sphi 0, %s56
      %s73 = sphi 0, %s57
      %s79 = sphi 0, %s81
      %s82 = sphi 0, %s79
      %s83 = sphi 0, %s82
      %s99 = sphi 0, %s83
      %s105 = sphi 0, %s107
      %s108 = sphi 0, %s105
      %s109 = sphi 0, %s108
      %s125 = sphi 0, %s109
      %s131 = sphi 0, %s133
      %s134 = sphi 0, %s131
      %s135 = sphi 0, %s134
      %s151 = sphi 0, %s135
      %s157 = sphi 0, %s159
      %s160 = sphi 0, %s157
      %s161 = sphi 0, %s160
      %s177 = sphi 0, %s161
      %s183 = sphi 0, %s185
      %s186 = sphi 0, %s183
      %s187 = sphi 0, %s186
      %s203 = sphi 0, %s187
      %s209 = sphi 0, %s211
      %s212 = sphi 0, %s209
      %s213 = sphi 0, %s212
      %s229 = sphi 0, %s213
      %s235 = sphi 0, %s237
      %s238 = sphi 0, %s235
      %s239 = sphi 0, %s238
      %s255 = sphi 0, %s239
      %s261 = sphi 0, %s263
      %s264 = sphi 0, %s261
      %s265 = sphi 0, %s264
      %s281 = sphi 0, %s265
      %s287 = sphi 0, %s289
      %s290 = sphi 0, %s287
      %s291 = sphi 0, %s290
      %s307 = sphi 0, %s291
      %s313 = sphi 0, %s315
      %s316 = sphi 0, %s313
      %s317 = sphi 0, %s316
      %s333 = sphi 0, %s317
      %s339 = sphi 0, %s341
      %s342 = sphi 0, %s339
      %s343 = sphi 0, %s342
      %s359 = sphi 0, %s343
      %s365 = sphi 0, %s367
      %s368 = sphi 0, %s365
      %s369 = sphi 0, %s368
      %s385 = sphi 0, %s369
      %s391 = sphi 0, %s393
      %s394 = sphi 0, %s391
      %s395 = sphi 0, %s394
      %s411 = sphi 0, %s395
      %s417 = sphi 0, %s419
      %s420 = sphi 0, %s417
      %s421 = sphi 0, %s420
      %s437 = sphi 0, %s421
      %s443 = sphi 0, %s445
      %s446 = sphi 0, %s443
      %s447 = sphi 0, %s446
      %s463 = sphi 0, %s447
      %s469 = sphi 0, %s471
      %s472 = sphi 0, %s469
      %s473 = sphi 0, %s472
      %s489 = sphi 0, %s473
      %s493 = sphi 0, %s493
      %s495 = sphi 0, %s493
      %s496 = sphi 0, %s495
      %s510 = sphi 0, %s496
      %s514 = sphi 0, %s514
      %s516 = sphi 0, %s514
      %s517 = sphi 0, %s516
      %s531 = sphi 0, %s517
      %s539 = sphi 0, %s541
      %s542 = sphi 0, %s539
      %s543 = sphi 0, %s542
      %s559 = sphi 0, %s543
      %s565 = sphi 0, %s567
      %s568 = sphi 0, %s565
      %s569 = sphi 0, %s568
      %s585 = sphi 0, %s569
    $region4: #{tpu_custom_call.1} parent=1 // loop_header_branch
      %34 = sbr.rel (%p32) target = $region8
    $region5: #{tpu_custom_call.1} parent=1 // loop_body
      %s36 = ssub.s32 %s31, 1
      %s37 = ssub.s32 %s31, 2
      %s44 = sadd.s32 1, %s39
      %p45 = scmp.ge.s32.totalorder %s44, 2
      %s46 = scalar_select %p45, 0, %s44
      %s47 = sadd.s32 1, %s38
      %s48 = scalar_select %p45, %s47, %s38
      %p49 = scmp.ge.s32.totalorder %s48, 1
      %s50 = scalar_select %p49, 0, %s48
      %s51 = ssub.s32 %s38, %s50
      %p52 = scmp.eq.s32.totalorder %s51, 0
      %s54 = sadd.s32 %s53, 1
      %s55 = scalar_select %p52, %s53, %s54
      %p58 = pneg %p52
      %p59 = scmp.eq.s32.totalorder %s31, 1
      %p60 = por %p58, %p59
      %p61 = scmp.ne.s32.totalorder %s53, %s56
      %p62 = scmp.eq.s32.totalorder %s31, 0
      %p63 = por %p61, %p62
      %p64 = scmp.ne.s32.totalorder %s53, %s56
      %p65 = scmp.eq.s32.totalorder %s36, 1
      %p66 = por %p64, %p65
      %p67 = scmp.ne.s32.totalorder %s56, %s57
      %p68 = scmp.eq.s32.totalorder %s36, 0
      %p69 = por %p67, %p68
      %p70 = scmp.ne.s32.totalorder %s56, %s57
      %p71 = scmp.eq.s32.totalorder %s37, 1
      %p72 = por %p70, %p71
      %p74 = scmp.ne.s32.totalorder %s57, %s73
      %p75 = scmp.eq.s32.totalorder %s37, 0
      %p76 = por %p74, %p75
      %s77 = ssub.s32 %s39, %s46
      %p78 = scmp.eq.s32.totalorder %s77, 0
      %s80 = sadd.s32 %s79, 1
      %s81 = scalar_select %p78, %s79, %s80
      %p84 = pneg %p78
      %p85 = scmp.eq.s32.totalorder %s31, 1
      %p86 = por %p84, %p85
      %p87 = scmp.ne.s32.totalorder %s79, %s82
      %p88 = scmp.eq.s32.totalorder %s31, 0
      %p89 = por %p87, %p88
      %p90 = scmp.ne.s32.totalorder %s79, %s82
      %p91 = scmp.eq.s32.totalorder %s36, 1
      %p92 = por %p90, %p91
      %p93 = scmp.ne.s32.totalorder %s82, %s83
      %p94 = scmp.eq.s32.totalorder %s36, 0
      %p95 = por %p93, %p94
      %p96 = scmp.ne.s32.totalorder %s82, %s83
      %p97 = scmp.eq.s32.totalorder %s37, 1
      %p98 = por %p96, %p97
      %p100 = scmp.ne.s32.totalorder %s83, %s99
      %p101 = scmp.eq.s32.totalorder %s37, 0
      %p102 = por %p100, %p101
      %s103 = ssub.s32 %s39, %s46
      %p104 = scmp.eq.s32.totalorder %s103, 0
      %s106 = sadd.s32 %s105, 1
      %s107 = scalar_select %p104, %s105, %s106
      %p110 = pneg %p104
      %p111 = scmp.eq.s32.totalorder %s31, 1
      %p112 = por %p110, %p111
      %p113 = scmp.ne.s32.totalorder %s105, %s108
      %p114 = scmp.eq.s32.totalorder %s31, 0
      %p115 = por %p113, %p114
      %p116 = scmp.ne.s32.totalorder %s105, %s108
      %p117 = scmp.eq.s32.totalorder %s36, 1
      %p118 = por %p116, %p117
      %p119 = scmp.ne.s32.totalorder %s108, %s109
      %p120 = scmp.eq.s32.totalorder %s36, 0
      %p121 = por %p119, %p120
      %p122 = scmp.ne.s32.totalorder %s108, %s109
      %p123 = scmp.eq.s32.totalorder %s37, 1
      %p124 = por %p122, %p123
      %p126 = scmp.ne.s32.totalorder %s109, %s125
      %p127 = scmp.eq.s32.totalorder %s37, 0
      %p128 = por %p126, %p127
      %s129 = ssub.s32 %s39, %s46
      %p130 = scmp.eq.s32.totalorder %s129, 0
      %s132 = sadd.s32 %s131, 1
      %s133 = scalar_select %p130, %s131, %s132
      %p136 = pneg %p130
      %p137 = scmp.eq.s32.totalorder %s31, 1
      %p138 = por %p136, %p137
      %p139 = scmp.ne.s32.totalorder %s131, %s134
      %p140 = scmp.eq.s32.totalorder %s31, 0
      %p141 = por %p139, %p140
      %p142 = scmp.ne.s32.totalorder %s131, %s134
      %p143 = scmp.eq.s32.totalorder %s36, 1
      %p144 = por %p142, %p143
      %p145 = scmp.ne.s32.totalorder %s134, %s135
      %p146 = scmp.eq.s32.totalorder %s36, 0
      %p147 = por %p145, %p146
      %p148 = scmp.ne.s32.totalorder %s134, %s135
      %p149 = scmp.eq.s32.totalorder %s37, 1
      %p150 = por %p148, %p149
      %p152 = scmp.ne.s32.totalorder %s135, %s151
      %p153 = scmp.eq.s32.totalorder %s37, 0
      %p154 = por %p152, %p153
      %s155 = ssub.s32 %s39, %s46
      %p156 = scmp.eq.s32.totalorder %s155, 0
      %s158 = sadd.s32 %s157, 1
      %s159 = scalar_select %p156, %s157, %s158
      %p162 = pneg %p156
      %p163 = scmp.eq.s32.totalorder %s31, 1
      %p164 = por %p162, %p163
      %p165 = scmp.ne.s32.totalorder %s157, %s160
      %p166 = scmp.eq.s32.totalorder %s31, 0
      %p167 = por %p165, %p166
      %p168 = scmp.ne.s32.totalorder %s157, %s160
      %p169 = scmp.eq.s32.totalorder %s36, 1
      %p170 = por %p168, %p169
      %p171 = scmp.ne.s32.totalorder %s160, %s161
      %p172 = scmp.eq.s32.totalorder %s36, 0
      %p173 = por %p171, %p172
      %p174 = scmp.ne.s32.totalorder %s160, %s161
      %p175 = scmp.eq.s32.totalorder %s37, 1
      %p176 = por %p174, %p175
      %p178 = scmp.ne.s32.totalorder %s161, %s177
      %p179 = scmp.eq.s32.totalorder %s37, 0
      %p180 = por %p178, %p179
      %s181 = ssub.s32 %s39, %s46
      %p182 = scmp.eq.s32.totalorder %s181, 0
      %s184 = sadd.s32 %s183, 1
      %s185 = scalar_select %p182, %s183, %s184
      %p188 = pneg %p182
      %p189 = scmp.eq.s32.totalorder %s31, 1
      %p190 = por %p188, %p189
      %p191 = scmp.ne.s32.totalorder %s183, %s186
      %p192 = scmp.eq.s32.totalorder %s31, 0
      %p193 = por %p191, %p192
      %p194 = scmp.ne.s32.totalorder %s183, %s186
      %p195 = scmp.eq.s32.totalorder %s36, 1
      %p196 = por %p194, %p195
      %p197 = scmp.ne.s32.totalorder %s186, %s187
      %p198 = scmp.eq.s32.totalorder %s36, 0
      %p199 = por %p197, %p198
      %p200 = scmp.ne.s32.totalorder %s186, %s187
      %p201 = scmp.eq.s32.totalorder %s37, 1
      %p202 = por %p200, %p201
      %p204 = scmp.ne.s32.totalorder %s187, %s203
      %p205 = scmp.eq.s32.totalorder %s37, 0
      %p206 = por %p204, %p205
      %s207 = ssub.s32 %s39, %s46
      %p208 = scmp.eq.s32.totalorder %s207, 0
      %s210 = sadd.s32 %s209, 1
      %s211 = scalar_select %p208, %s209, %s210
      %p214 = pneg %p208
      %p215 = scmp.eq.s32.totalorder %s31, 1
      %p216 = por %p214, %p215
      %p217 = scmp.ne.s32.totalorder %s209, %s212
      %p218 = scmp.eq.s32.totalorder %s31, 0
      %p219 = por %p217, %p218
      %p220 = scmp.ne.s32.totalorder %s209, %s212
      %p221 = scmp.eq.s32.totalorder %s36, 1
      %p222 = por %p220, %p221
      %p223 = scmp.ne.s32.totalorder %s212, %s213
      %p224 = scmp.eq.s32.totalorder %s36, 0
      %p225 = por %p223, %p224
      %p226 = scmp.ne.s32.totalorder %s212, %s213
      %p227 = scmp.eq.s32.totalorder %s37, 1
      %p228 = por %p226, %p227
      %p230 = scmp.ne.s32.totalorder %s213, %s229
      %p231 = scmp.eq.s32.totalorder %s37, 0
      %p232 = por %p230, %p231
      %s233 = ssub.s32 %s39, %s46
      %p234 = scmp.eq.s32.totalorder %s233, 0
      %s236 = sadd.s32 %s235, 1
      %s237 = scalar_select %p234, %s235, %s236
      %p240 = pneg %p234
      %p241 = scmp.eq.s32.totalorder %s31, 1
      %p242 = por %p240, %p241
      %p243 = scmp.ne.s32.totalorder %s235, %s238
      %p244 = scmp.eq.s32.totalorder %s31, 0
      %p245 = por %p243, %p244
      %p246 = scmp.ne.s32.totalorder %s235, %s238
      %p247 = scmp.eq.s32.totalorder %s36, 1
      %p248 = por %p246, %p247
      %p249 = scmp.ne.s32.totalorder %s238, %s239
      %p250 = scmp.eq.s32.totalorder %s36, 0
      %p251 = por %p249, %p250
      %p252 = scmp.ne.s32.totalorder %s238, %s239
      %p253 = scmp.eq.s32.totalorder %s37, 1
      %p254 = por %p252, %p253
      %p256 = scmp.ne.s32.totalorder %s239, %s255
      %p257 = scmp.eq.s32.totalorder %s37, 0
      %p258 = por %p256, %p257
      %s259 = ssub.s32 %s39, %s46
      %p260 = scmp.eq.s32.totalorder %s259, 0
      %s262 = sadd.s32 %s261, 1
      %s263 = scalar_select %p260, %s261, %s262
      %p266 = pneg %p260
      %p267 = scmp.eq.s32.totalorder %s31, 1
      %p268 = por %p266, %p267
      %p269 = scmp.ne.s32.totalorder %s261, %s264
      %p270 = scmp.eq.s32.totalorder %s31, 0
      %p271 = por %p269, %p270
      %p272 = scmp.ne.s32.totalorder %s261, %s264
      %p273 = scmp.eq.s32.totalorder %s36, 1
      %p274 = por %p272, %p273
      %p275 = scmp.ne.s32.totalorder %s264, %s265
      %p276 = scmp.eq.s32.totalorder %s36, 0
      %p277 = por %p275, %p276
      %p278 = scmp.ne.s32.totalorder %s264, %s265
      %p279 = scmp.eq.s32.totalorder %s37, 1
      %p280 = por %p278, %p279
      %p282 = scmp.ne.s32.totalorder %s265, %s281
      %p283 = scmp.eq.s32.totalorder %s37, 0
      %p284 = por %p282, %p283
      %s285 = ssub.s32 %s39, %s46
      %p286 = scmp.eq.s32.totalorder %s285, 0
      %s288 = sadd.s32 %s287, 1
      %s289 = scalar_select %p286, %s287, %s288
      %p292 = pneg %p286
      %p293 = scmp.eq.s32.totalorder %s31, 1
      %p294 = por %p292, %p293
      %p295 = scmp.ne.s32.totalorder %s287, %s290
      %p296 = scmp.eq.s32.totalorder %s31, 0
      %p297 = por %p295, %p296
      %p298 = scmp.ne.s32.totalorder %s287, %s290
      %p299 = scmp.eq.s32.totalorder %s36, 1
      %p300 = por %p298, %p299
      %p301 = scmp.ne.s32.totalorder %s290, %s291
      %p302 = scmp.eq.s32.totalorder %s36, 0
      %p303 = por %p301, %p302
      %p304 = scmp.ne.s32.totalorder %s290, %s291
      %p305 = scmp.eq.s32.totalorder %s37, 1
      %p306 = por %p304, %p305
      %p308 = scmp.ne.s32.totalorder %s291, %s307
      %p309 = scmp.eq.s32.totalorder %s37, 0
      %p310 = por %p308, %p309
      %s311 = ssub.s32 %s39, %s46
      %p312 = scmp.eq.s32.totalorder %s311, 0
      %s314 = sadd.s32 %s313, 1
      %s315 = scalar_select %p312, %s313, %s314
      %p318 = pneg %p312
      %p319 = scmp.eq.s32.totalorder %s31, 1
      %p320 = por %p318, %p319
      %p321 = scmp.ne.s32.totalorder %s313, %s316
      %p322 = scmp.eq.s32.totalorder %s31, 0
      %p323 = por %p321, %p322
      %p324 = scmp.ne.s32.totalorder %s313, %s316
      %p325 = scmp.eq.s32.totalorder %s36, 1
      %p326 = por %p324, %p325
      %p327 = scmp.ne.s32.totalorder %s316, %s317
      %p328 = scmp.eq.s32.totalorder %s36, 0
      %p329 = por %p327, %p328
      %p330 = scmp.ne.s32.totalorder %s316, %s317
      %p331 = scmp.eq.s32.totalorder %s37, 1
      %p332 = por %p330, %p331
      %p334 = scmp.ne.s32.totalorder %s317, %s333
      %p335 = scmp.eq.s32.totalorder %s37, 0
      %p336 = por %p334, %p335
      %s337 = ssub.s32 %s39, %s46
      %p338 = scmp.eq.s32.totalorder %s337, 0
      %s340 = sadd.s32 %s339, 1
      %s341 = scalar_select %p338, %s339, %s340
      %p344 = pneg %p338
      %p345 = scmp.eq.s32.totalorder %s31, 1
      %p346 = por %p344, %p345
      %p347 = scmp.ne.s32.totalorder %s339, %s342
      %p348 = scmp.eq.s32.totalorder %s31, 0
      %p349 = por %p347, %p348
      %p350 = scmp.ne.s32.totalorder %s339, %s342
      %p351 = scmp.eq.s32.totalorder %s36, 1
      %p352 = por %p350, %p351
      %p353 = scmp.ne.s32.totalorder %s342, %s343
      %p354 = scmp.eq.s32.totalorder %s36, 0
      %p355 = por %p353, %p354
      %p356 = scmp.ne.s32.totalorder %s342, %s343
      %p357 = scmp.eq.s32.totalorder %s37, 1
      %p358 = por %p356, %p357
      %p360 = scmp.ne.s32.totalorder %s343, %s359
      %p361 = scmp.eq.s32.totalorder %s37, 0
      %p362 = por %p360, %p361
      %s363 = ssub.s32 %s39, %s46
      %p364 = scmp.eq.s32.totalorder %s363, 0
      %s366 = sadd.s32 %s365, 1
      %s367 = scalar_select %p364, %s365, %s366
      %p370 = pneg %p364
      %p371 = scmp.eq.s32.totalorder %s31, 1
      %p372 = por %p370, %p371
      %p373 = scmp.ne.s32.totalorder %s365, %s368
      %p374 = scmp.eq.s32.totalorder %s31, 0
      %p375 = por %p373, %p374
      %p376 = scmp.ne.s32.totalorder %s365, %s368
      %p377 = scmp.eq.s32.totalorder %s36, 1
      %p378 = por %p376, %p377
      %p379 = scmp.ne.s32.totalorder %s368, %s369
      %p380 = scmp.eq.s32.totalorder %s36, 0
      %p381 = por %p379, %p380
      %p382 = scmp.ne.s32.totalorder %s368, %s369
      %p383 = scmp.eq.s32.totalorder %s37, 1
      %p384 = por %p382, %p383
      %p386 = scmp.ne.s32.totalorder %s369, %s385
      %p387 = scmp.eq.s32.totalorder %s37, 0
      %p388 = por %p386, %p387
      %s389 = ssub.s32 %s39, %s46
      %p390 = scmp.eq.s32.totalorder %s389, 0
      %s392 = sadd.s32 %s391, 1
      %s393 = scalar_select %p390, %s391, %s392
      %p396 = pneg %p390
      %p397 = scmp.eq.s32.totalorder %s31, 1
      %p398 = por %p396, %p397
      %p399 = scmp.ne.s32.totalorder %s391, %s394
      %p400 = scmp.eq.s32.totalorder %s31, 0
      %p401 = por %p399, %p400
      %p402 = scmp.ne.s32.totalorder %s391, %s394
      %p403 = scmp.eq.s32.totalorder %s36, 1
      %p404 = por %p402, %p403
      %p405 = scmp.ne.s32.totalorder %s394, %s395
      %p406 = scmp.eq.s32.totalorder %s36, 0
      %p407 = por %p405, %p406
      %p408 = scmp.ne.s32.totalorder %s394, %s395
      %p409 = scmp.eq.s32.totalorder %s37, 1
      %p410 = por %p408, %p409
      %p412 = scmp.ne.s32.totalorder %s395, %s411
      %p413 = scmp.eq.s32.totalorder %s37, 0
      %p414 = por %p412, %p413
      %s415 = ssub.s32 %s39, %s46
      %p416 = scmp.eq.s32.totalorder %s415, 0
      %s418 = sadd.s32 %s417, 1
      %s419 = scalar_select %p416, %s417, %s418
      %p422 = pneg %p416
      %p423 = scmp.eq.s32.totalorder %s31, 1
      %p424 = por %p422, %p423
      %p425 = scmp.ne.s32.totalorder %s417, %s420
      %p426 = scmp.eq.s32.totalorder %s31, 0
      %p427 = por %p425, %p426
      %p428 = scmp.ne.s32.totalorder %s417, %s420
      %p429 = scmp.eq.s32.totalorder %s36, 1
      %p430 = por %p428, %p429
      %p431 = scmp.ne.s32.totalorder %s420, %s421
      %p432 = scmp.eq.s32.totalorder %s36, 0
      %p433 = por %p431, %p432
      %p434 = scmp.ne.s32.totalorder %s420, %s421
      %p435 = scmp.eq.s32.totalorder %s37, 1
      %p436 = por %p434, %p435
      %p438 = scmp.ne.s32.totalorder %s421, %s437
      %p439 = scmp.eq.s32.totalorder %s37, 0
      %p440 = por %p438, %p439
      %s441 = ssub.s32 %s39, %s46
      %p442 = scmp.eq.s32.totalorder %s441, 0
      %s444 = sadd.s32 %s443, 1
      %s445 = scalar_select %p442, %s443, %s444
      %p448 = pneg %p442
      %p449 = scmp.eq.s32.totalorder %s31, 1
      %p450 = por %p448, %p449
      %p451 = scmp.ne.s32.totalorder %s443, %s446
      %p452 = scmp.eq.s32.totalorder %s31, 0
      %p453 = por %p451, %p452
      %p454 = scmp.ne.s32.totalorder %s443, %s446
      %p455 = scmp.eq.s32.totalorder %s36, 1
      %p456 = por %p454, %p455
      %p457 = scmp.ne.s32.totalorder %s446, %s447
      %p458 = scmp.eq.s32.totalorder %s36, 0
      %p459 = por %p457, %p458
      %p460 = scmp.ne.s32.totalorder %s446, %s447
      %p461 = scmp.eq.s32.totalorder %s37, 1
      %p462 = por %p460, %p461
      %p464 = scmp.ne.s32.totalorder %s447, %s463
      %p465 = scmp.eq.s32.totalorder %s37, 0
      %p466 = por %p464, %p465
      %s467 = ssub.s32 %s39, %s46
      %p468 = scmp.eq.s32.totalorder %s467, 0
      %s470 = sadd.s32 %s469, 1
      %s471 = scalar_select %p468, %s469, %s470
      %p474 = pneg %p468
      %p475 = scmp.eq.s32.totalorder %s31, 1
      %p476 = por %p474, %p475
      %p477 = scmp.ne.s32.totalorder %s469, %s472
      %p478 = scmp.eq.s32.totalorder %s31, 0
      %p479 = por %p477, %p478
      %p480 = scmp.ne.s32.totalorder %s469, %s472
      %p481 = scmp.eq.s32.totalorder %s36, 1
      %p482 = por %p480, %p481
      %p483 = scmp.ne.s32.totalorder %s472, %s473
      %p484 = scmp.eq.s32.totalorder %s36, 0
      %p485 = por %p483, %p484
      %p486 = scmp.ne.s32.totalorder %s472, %s473
      %p487 = scmp.eq.s32.totalorder %s37, 1
      %p488 = por %p486, %p487
      %p490 = scmp.ne.s32.totalorder %s473, %s489
      %p491 = scmp.eq.s32.totalorder %s37, 0
      %p492 = por %p490, %p491
      %s494 = sadd.s32 %s493, 1
      %p497 = scmp.eq.s32.totalorder %s31, 1
      %p498 = scmp.ne.s32.totalorder %s493, %s495
      %p499 = scmp.eq.s32.totalorder %s31, 0
      %p500 = por %p498, %p499
      %p501 = scmp.ne.s32.totalorder %s493, %s495
      %p502 = scmp.eq.s32.totalorder %s36, 1
      %p503 = por %p501, %p502
      %p504 = scmp.ne.s32.totalorder %s495, %s496
      %p505 = scmp.eq.s32.totalorder %s36, 0
      %p506 = por %p504, %p505
      %p507 = scmp.ne.s32.totalorder %s495, %s496
      %p508 = scmp.eq.s32.totalorder %s37, 1
      %p509 = por %p507, %p508
      %p511 = scmp.ne.s32.totalorder %s496, %s510
      %p512 = scmp.eq.s32.totalorder %s37, 0
      %p513 = por %p511, %p512
      %s515 = sadd.s32 %s514, 1
      %p518 = scmp.eq.s32.totalorder %s31, 1
      %p519 = scmp.ne.s32.totalorder %s514, %s516
      %p520 = scmp.eq.s32.totalorder %s31, 0
      %p521 = por %p519, %p520
      %p522 = scmp.ne.s32.totalorder %s514, %s516
      %p523 = scmp.eq.s32.totalorder %s36, 1
      %p524 = por %p522, %p523
      %p525 = scmp.ne.s32.totalorder %s516, %s517
      %p526 = scmp.eq.s32.totalorder %s36, 0
      %p527 = por %p525, %p526
      %p528 = scmp.ne.s32.totalorder %s516, %s517
      %p529 = scmp.eq.s32.totalorder %s37, 1
      %p530 = por %p528, %p529
      %p532 = scmp.ne.s32.totalorder %s517, %s531
      %p533 = scmp.eq.s32.totalorder %s37, 0
      %p534 = por %p532, %p533
      %s535 = ssub.s32 %s39, %s46
      %s536 = ssub.s32 %s38, %s50
      %s537 = sor.u32 %s535, %s536
      %p538 = scmp.eq.s32.totalorder %s537, 0
      %s540 = sadd.s32 %s539, 1
      %s541 = scalar_select %p538, %s539, %s540
      %p544 = pneg %p538
      %p545 = scmp.eq.s32.totalorder %s31, 1
      %p546 = por %p544, %p545
      %p547 = scmp.ne.s32.totalorder %s539, %s542
      %p548 = scmp.eq.s32.totalorder %s31, 0
      %p549 = por %p547, %p548
      %p550 = scmp.ne.s32.totalorder %s539, %s542
      %p551 = scmp.eq.s32.totalorder %s36, 1
      %p552 = por %p550, %p551
      %p553 = scmp.ne.s32.totalorder %s542, %s543
      %p554 = scmp.eq.s32.totalorder %s36, 0
      %p555 = por %p553, %p554
      %p556 = scmp.ne.s32.totalorder %s542, %s543
      %p557 = scmp.eq.s32.totalorder %s37, 1
      %p558 = por %p556, %p557
      %p560 = scmp.ne.s32.totalorder %s543, %s559
      %p561 = scmp.eq.s32.totalorder %s37, 0
      %p562 = por %p560, %p561
      %s563 = ssub.s32 %s38, %s50
      %p564 = scmp.eq.s32.totalorder %s563, 0
      %s566 = sadd.s32 %s565, 1
      %s567 = scalar_select %p564, %s565, %s566
      %p570 = pneg %p564
      %p571 = scmp.eq.s32.totalorder %s31, 1
      %p572 = por %p570, %p571
      %p573 = scmp.ne.s32.totalorder %s565, %s568
      %p574 = scmp.eq.s32.totalorder %s31, 0
      %p575 = por %p573, %p574
      %p576 = scmp.ne.s32.totalorder %s565, %s568
      %p577 = scmp.eq.s32.totalorder %s36, 1
      %p578 = por %p576, %p577
      %p579 = scmp.ne.s32.totalorder %s568, %s569
      %p580 = scmp.eq.s32.totalorder %s36, 0
      %p581 = por %p579, %p580
      %p582 = scmp.ne.s32.totalorder %s568, %s569
      %p583 = scmp.eq.s32.totalorder %s37, 1
      %p584 = por %p582, %p583
      %p586 = scmp.ne.s32.totalorder %s569, %s585
      %p587 = scmp.eq.s32.totalorder %s37, 0
      %p588 = por %p586, %p587
      %p589 = scmp.le.s32.totalorder 1, %s31
      %p590 = scmp.lt.s32.totalorder %s31, 3
      %p591 = pnand %p589, %p590
      %p592 = pneg %p591
      // Predicated region
      $region9: #{tpu_custom_call.1} parent=5 // pred_check
        _
      $region10: #{tpu_custom_call.1} parent=5 // pred_check_branch
        %594 = sbr.rel (%p591) target = $region12
      $region11: #{tpu_custom_call.1} parent=5 // pred_region
        %s595 = ssub.s32 %s31, 1
        // Predicated region
        $region13: #{tpu_custom_call.1} parent=11 // pred_check
          %p596 = pneg %p69
        $region14: #{tpu_custom_call.1} parent=11 // pred_check_branch
          %598 = sbr.rel (%p596) target = $region16
        $region15: #{tpu_custom_call.1} parent=11 // pred_region
          %s599 = smul.u32 2, %s40
          %p600 = scmp.lt.s32.totalorder %s599, 1
          %s601 = scalar_select %p600, %s599, 1
          %s602 = smul.addr %s601, 8
          %s603 = scalar_lea.vmem %s0, %s602
          %s604 = smul.u32 2, %s40
        $region16: #{tpu_custom_call.1} parent=11 // pred_fallthru
          _
        // Predicated region
        $region17: #{tpu_custom_call.1} parent=11 // pred_check
          %p605 = pneg %p506
        $region18: #{tpu_custom_call.1} parent=11 // pred_check_branch
          %607 = sbr.rel (%p605) target = $region20
        $region19: #{tpu_custom_call.1} parent=11 // pred_region
          _
        $region20: #{tpu_custom_call.1} parent=11 // pred_fallthru
          _
        // Predicated region
        $region21: #{tpu_custom_call.1} parent=11 // pred_check
          %p608 = pneg %p527
        $region22: #{tpu_custom_call.1} parent=11 // pred_check_branch
          %610 = sbr.rel (%p608) target = $region24
        $region23: #{tpu_custom_call.1} parent=11 // pred_region
          _
        $region24: #{tpu_custom_call.1} parent=11 // pred_fallthru
          _
      $region12: #{tpu_custom_call.1} parent=5 // pred_fallthru
        _
      %p611 = scmp.lt.s32.totalorder %s31, 2
      // Predicated region
      $region25: #{tpu_custom_call.1} parent=5 // pred_check
        %p612 = pneg %p611
      $region26: #{tpu_custom_call.1} parent=5 // pred_check_branch
        %614 = sbr.rel (%p612) target = $region28
      $region27: #{tpu_custom_call.1} parent=5 // pred_region
        // Predicated region
        $region29: #{tpu_custom_call.1} parent=27 // pred_check
          %p615 = pneg %p89
        $region30: #{tpu_custom_call.1} parent=27 // pred_check_branch
          %617 = sbr.rel (%p615) target = $region32
        $region31: #{tpu_custom_call.1} parent=27 // pred_region
          %p618 = scmp.lt.s32.totalorder %s39, 1
          %s619 = scalar_select %p618, %s39, 1
          %s620 = scalar_lea.vmem %s1, %s619
        $region32: #{tpu_custom_call.1} parent=27 // pred_fallthru
          _
        // Predicated region
        $region33: #{tpu_custom_call.1} parent=27 // pred_check
          %p621 = pneg %p115
        $region34: #{tpu_custom_call.1} parent=27 // pred_check_branch
          %623 = sbr.rel (%p621) target = $region36
        $region35: #{tpu_custom_call.1} parent=27 // pred_region
          %p624 = scmp.lt.s32.totalorder %s39, 1
          %s625 = scalar_select %p624, %s39, 1
          %s626 = scalar_lea.vmem %s2, %s625
        $region36: #{tpu_custom_call.1} parent=27 // pred_fallthru
          _
        // Predicated region
        $region37: #{tpu_custom_call.1} parent=27 // pred_check
          %p627 = pneg %p141
        $region38: #{tpu_custom_call.1} parent=27 // pred_check_branch
          %629 = sbr.rel (%p627) target = $region40
        $region39: #{tpu_custom_call.1} parent=27 // pred_region
          %p630 = scmp.lt.s32.totalorder %s39, 1
          %s631 = scalar_select %p630, %s39, 1
          %s632 = smul.addr %s631, 4
          %s633 = smul.addr %s632, 8
          %s634 = scalar_lea.vmem %s3, %s633
        $region40: #{tpu_custom_call.1} parent=27 // pred_fallthru
          _
        // Predicated region
        $region41: #{tpu_custom_call.1} parent=27 // pred_check
          %p635 = pneg %p167
        $region42: #{tpu_custom_call.1} parent=27 // pred_check_branch
          %637 = sbr.rel (%p635) target = $region44
        $region43: #{tpu_custom_call.1} parent=27 // pred_region
          %p638 = scmp.lt.s32.totalorder %s39, 1
          %s639 = scalar_select %p638, %s39, 1
          %s640 = scalar_lea.vmem %s4, %s639
        $region44: #{tpu_custom_call.1} parent=27 // pred_fallthru
          _
        // Predicated region
        $region45: #{tpu_custom_call.1} parent=27 // pred_check
          %p641 = pneg %p193
        $region46: #{tpu_custom_call.1} parent=27 // pred_check_branch
          %643 = sbr.rel (%p641) target = $region48
        $region47: #{tpu_custom_call.1} parent=27 // pred_region
          %p644 = scmp.lt.s32.totalorder %s39, 1
          %s645 = scalar_select %p644, %s39, 1
          %s646 = smul.addr %s645, 4
          %s647 = smul.addr %s646, 8
          %s648 = scalar_lea.vmem %s5, %s647
        $region48: #{tpu_custom_call.1} parent=27 // pred_fallthru
          _
        // Predicated region
        $region49: #{tpu_custom_call.1} parent=27 // pred_check
          %p649 = pneg %p219
        $region50: #{tpu_custom_call.1} parent=27 // pred_check_branch
          %651 = sbr.rel (%p649) target = $region52
        $region51: #{tpu_custom_call.1} parent=27 // pred_region
          %p652 = scmp.lt.s32.totalorder %s39, 1
          %s653 = scalar_select %p652, %s39, 1
          %s654 = scalar_lea.vmem %s6, %s653
        $region52: #{tpu_custom_call.1} parent=27 // pred_fallthru
          _
        // Predicated region
        $region53: #{tpu_custom_call.1} parent=27 // pred_check
          %p655 = pneg %p245
        $region54: #{tpu_custom_call.1} parent=27 // pred_check_branch
          %657 = sbr.rel (%p655) target = $region56
        $region55: #{tpu_custom_call.1} parent=27 // pred_region
          %p658 = scmp.lt.s32.totalorder %s39, 1
          %s659 = scalar_select %p658, %s39, 1
          %s660 = smul.addr %s659, 4
          %s661 = smul.addr %s660, 8
          %s662 = scalar_lea.vmem %s7, %s661
        $region56: #{tpu_custom_call.1} parent=27 // pred_fallthru
          _
        // Predicated region
        $region57: #{tpu_custom_call.1} parent=27 // pred_check
          %p663 = pneg %p271
        $region58: #{tpu_custom_call.1} parent=27 // pred_check_branch
          %665 = sbr.rel (%p663) target = $region60
        $region59: #{tpu_custom_call.1} parent=27 // pred_region
          %p666 = scmp.lt.s32.totalorder %s39, 1
          %s667 = scalar_select %p666, %s39, 1
          %s668 = scalar_lea.vmem %s8, %s667
        $region60: #{tpu_custom_call.1} parent=27 // pred_fallthru
          _
        // Predicated region
        $region61: #{tpu_custom_call.1} parent=27 // pred_check
          %p669 = pneg %p297
        $region62: #{tpu_custom_call.1} parent=27 // pred_check_branch
          %671 = sbr.rel (%p669) target = $region64
        $region63: #{tpu_custom_call.1} parent=27 // pred_region
          %p672 = scmp.lt.s32.totalorder %s39, 1
          %s673 = scalar_select %p672, %s39, 1
          %s674 = smul.addr %s673, 4
          %s675 = smul.addr %s674, 8
          %s676 = scalar_lea.vmem %s9, %s675
        $region64: #{tpu_custom_call.1} parent=27 // pred_fallthru
          _
        // Predicated region
        $region65: #{tpu_custom_call.1} parent=27 // pred_check
          %p677 = pneg %p323
        $region66: #{tpu_custom_call.1} parent=27 // pred_check_branch
          %679 = sbr.rel (%p677) target = $region68
        $region67: #{tpu_custom_call.1} parent=27 // pred_region
          %p680 = scmp.lt.s32.totalorder %s39, 1
          %s681 = scalar_select %p680, %s39, 1
          %s682 = scalar_lea.vmem %s10, %s681
        $region68: #{tpu_custom_call.1} parent=27 // pred_fallthru
          _
        // Predicated region
        $region69: #{tpu_custom_call.1} parent=27 // pred_check
          %p683 = pneg %p349
        $region70: #{tpu_custom_call.1} parent=27 // pred_check_branch
          %685 = sbr.rel (%p683) target = $region72
        $region71: #{tpu_custom_call.1} parent=27 // pred_region
          %p686 = scmp.lt.s32.totalorder %s39, 1
          %s687 = scalar_select %p686, %s39, 1
          %s688 = scalar_lea.vmem %s11, %s687
        $region72: #{tpu_custom_call.1} parent=27 // pred_fallthru
          _
        // Predicated region
        $region73: #{tpu_custom_call.1} parent=27 // pred_check
          %p689 = pneg %p375
        $region74: #{tpu_custom_call.1} parent=27 // pred_check_branch
          %691 = sbr.rel (%p689) target = $region76
        $region75: #{tpu_custom_call.1} parent=27 // pred_region
          %p692 = scmp.lt.s32.totalorder %s39, 1
          %s693 = scalar_select %p692, %s39, 1
          %s694 = scalar_lea.vmem %s12, %s693
        $region76: #{tpu_custom_call.1} parent=27 // pred_fallthru
          _
        // Predicated region
        $region77: #{tpu_custom_call.1} parent=27 // pred_check
          %p695 = pneg %p401
        $region78: #{tpu_custom_call.1} parent=27 // pred_check_branch
          %697 = sbr.rel (%p695) target = $region80
        $region79: #{tpu_custom_call.1} parent=27 // pred_region
          %p698 = scmp.lt.s32.totalorder %s39, 1
          %s699 = scalar_select %p698, %s39, 1
          %s700 = smul.addr %s699, 68
          %s701 = smul.addr %s700, 8
          %s702 = scalar_lea.vmem %s13, %s701
        $region80: #{tpu_custom_call.1} parent=27 // pred_fallthru
          _
        // Predicated region
        $region81: #{tpu_custom_call.1} parent=27 // pred_check
          %p703 = pneg %p427
        $region82: #{tpu_custom_call.1} parent=27 // pred_check_branch
          %705 = sbr.rel (%p703) target = $region84
        $region83: #{tpu_custom_call.1} parent=27 // pred_region
          %p706 = scmp.lt.s32.totalorder %s39, 1
          %s707 = scalar_select %p706, %s39, 1
          %s708 = smul.addr %s707, 17
          %s709 = scalar_lea.vmem %s14, %s708
        $region84: #{tpu_custom_call.1} parent=27 // pred_fallthru
          _
        // Predicated region
        $region85: #{tpu_custom_call.1} parent=27 // pred_check
          %p710 = pneg %p453
        $region86: #{tpu_custom_call.1} parent=27 // pred_check_branch
          %712 = sbr.rel (%p710) target = $region88
        $region87: #{tpu_custom_call.1} parent=27 // pred_region
          %p713 = scmp.lt.s32.totalorder %s39, 1
          %s714 = scalar_select %p713, %s39, 1
          %s715 = smul.addr %s714, 272
          %s716 = smul.addr %s715, 8
          %s717 = scalar_lea.vmem %s15, %s716
        $region88: #{tpu_custom_call.1} parent=27 // pred_fallthru
          _
        // Predicated region
        $region89: #{tpu_custom_call.1} parent=27 // pred_check
          %p718 = pneg %p479
        $region90: #{tpu_custom_call.1} parent=27 // pred_check_branch
          %720 = sbr.rel (%p718) target = $region92
        $region91: #{tpu_custom_call.1} parent=27 // pred_region
          %p721 = scmp.lt.s32.totalorder %s39, 1
          %s722 = scalar_select %p721, %s39, 1
          %s723 = scalar_lea.vmem %s16, %s722
        $region92: #{tpu_custom_call.1} parent=27 // pred_fallthru
          _
      $region28: #{tpu_custom_call.1} parent=5 // pred_fallthru
        _
      %p724 = scmp.le.s32.totalorder 1, %s31
      %p725 = scmp.lt.s32.totalorder %s31, 3
      %p726 = pnand %p724, %p725
      %p727 = pneg %p726
      // Predicated region
      $region93: #{tpu_custom_call.1} parent=5 // pred_check
        _
      $region94: #{tpu_custom_call.1} parent=5 // pred_check_branch
        %729 = sbr.rel (%p726) target = $region96
      $region95: #{tpu_custom_call.1} parent=5 // pred_region
        %s730 = ssub.s32 %s31, 1
        %s731 = smul.u32 2, %s40
        %p732 = scmp.lt.s32.totalorder %s731, 1
        %s733 = scalar_select %p732, %s731, 1
        %s734 = smul.addr %s733, 8
        %s735 = scalar_lea.vmem %s0, %s734
        %p736 = pneg %p69
        %p737 = pneg %p66
        %p738 = scmp.lt.s32.totalorder %s41, 1
        %s739 = scalar_select %p738, %s41, 1
        %s740 = scalar_lea.vmem %s1, %s739
        %p741 = pneg %p95
        %p742 = pneg %p92
        %p743 = scmp.lt.s32.totalorder %s41, 1
        %s744 = scalar_select %p743, %s41, 1
        %s745 = scalar_lea.vmem %s2, %s744
        %p746 = pneg %p121
        %p747 = pneg %p118
        %p748 = scmp.lt.s32.totalorder %s41, 1
        %s749 = scalar_select %p748, %s41, 1
        %s750 = smul.addr %s749, 4
        %s751 = smul.addr %s750, 8
        %s752 = scalar_lea.vmem %s3, %s751
        %p753 = pneg %p147
        %p754 = pneg %p144
        %p755 = scmp.lt.s32.totalorder %s41, 1
        %s756 = scalar_select %p755, %s41, 1
        %s757 = scalar_lea.vmem %s4, %s756
        %p758 = pneg %p173
        %p759 = pneg %p170
        %p760 = scmp.lt.s32.totalorder %s41, 1
        %s761 = scalar_select %p760, %s41, 1
        %s762 = smul.addr %s761, 4
        %s763 = smul.addr %s762, 8
        %s764 = scalar_lea.vmem %s5, %s763
        %p765 = pneg %p199
        %p766 = pneg %p196
        %p767 = scmp.lt.s32.totalorder %s41, 1
        %s768 = scalar_select %p767, %s41, 1
        %s769 = scalar_lea.vmem %s6, %s768
        %p770 = pneg %p225
        %p771 = pneg %p222
        %p772 = scmp.lt.s32.totalorder %s41, 1
        %s773 = scalar_select %p772, %s41, 1
        %s774 = smul.addr %s773, 4
        %s775 = smul.addr %s774, 8
        %s776 = scalar_lea.vmem %s7, %s775
        %p777 = pneg %p251
        %p778 = pneg %p248
        %p779 = scmp.lt.s32.totalorder %s41, 1
        %s780 = scalar_select %p779, %s41, 1
        %s781 = scalar_lea.vmem %s8, %s780
        %p782 = pneg %p277
        %p783 = pneg %p274
        %p784 = scmp.lt.s32.totalorder %s41, 1
        %s785 = scalar_select %p784, %s41, 1
        %s786 = smul.addr %s785, 4
        %s787 = smul.addr %s786, 8
        %s788 = scalar_lea.vmem %s9, %s787
        %p789 = pneg %p303
        %p790 = pneg %p300
        %p791 = scmp.lt.s32.totalorder %s41, 1
        %s792 = scalar_select %p791, %s41, 1
        %s793 = scalar_lea.vmem %s10, %s792
        %p794 = pneg %p329
        %p795 = pneg %p326
        %p796 = scmp.lt.s32.totalorder %s41, 1
        %s797 = scalar_select %p796, %s41, 1
        %s798 = scalar_lea.vmem %s11, %s797
        %p799 = pneg %p355
        %p800 = pneg %p352
        %p801 = scmp.lt.s32.totalorder %s41, 1
        %s802 = scalar_select %p801, %s41, 1
        %s803 = scalar_lea.vmem %s12, %s802
        %p804 = pneg %p381
        %p805 = pneg %p378
        %p806 = scmp.lt.s32.totalorder %s41, 1
        %s807 = scalar_select %p806, %s41, 1
        %s808 = smul.addr %s807, 68
        %s809 = smul.addr %s808, 8
        %s810 = scalar_lea.vmem %s13, %s809
        %p811 = pneg %p407
        %p812 = pneg %p404
        %p813 = scmp.lt.s32.totalorder %s41, 1
        %s814 = scalar_select %p813, %s41, 1
        %s815 = smul.addr %s814, 17
        %s816 = scalar_lea.vmem %s14, %s815
        %p817 = pneg %p433
        %p818 = pneg %p430
        %p819 = scmp.lt.s32.totalorder %s41, 1
        %s820 = scalar_select %p819, %s41, 1
        %s821 = smul.addr %s820, 272
        %s822 = smul.addr %s821, 8
        %s823 = scalar_lea.vmem %s15, %s822
        %p824 = pneg %p459
        %p825 = pneg %p456
        %p826 = scmp.lt.s32.totalorder %s41, 1
        %s827 = scalar_select %p826, %s41, 1
        %s828 = scalar_lea.vmem %s16, %s827
        %p829 = pneg %p485
        %p830 = pneg %p482
        %p831 = pneg %p506
        %p832 = pneg %p503
        %p833 = pneg %p527
        %p834 = pneg %p524
        %p835 = pneg %p555
        %p836 = pneg %p552
        %s837 = sand.u32 %s542, 1
        %s838 = scalar_lea.sflag [#allocation5], %s837
        %s839 = sand.u32 %s542, 1
        %s840 = smul.addr %s839, 16
        %s841 = scalar_lea.vmem [#allocation4], %s840
        %p842 = pneg %p581
        %p843 = pneg %p578
        %s844 = smul.u32 2, %s40
        %p845 = scmp.lt.s32.totalorder %s844, 1
        %s846 = scalar_select %p845, %s844, 1
        %s847 = smul.addr %s846, 8
        %s848 = scalar_lea.vmem %s0, %s847
        %s849 = smul.u32 2, %s40
        %p850 = scmp.lt.s32.totalorder %s41, 1
        %s851 = scalar_select %p850, %s41, 1
        %s852 = scalar_lea.vmem %s1, %s851
        %p853 = scmp.lt.s32.totalorder %s41, 1
        %s854 = scalar_select %p853, %s41, 1
        %s855 = scalar_lea.vmem %s2, %s854
        %p856 = scmp.lt.s32.totalorder %s41, 1
        %s857 = scalar_select %p856, %s41, 1
        %s858 = smul.addr %s857, 4
        %s859 = smul.addr %s858, 8
        %s860 = scalar_lea.vmem %s3, %s859
        %p861 = scmp.lt.s32.totalorder %s41, 1
        %s862 = scalar_select %p861, %s41, 1
        %s863 = scalar_lea.vmem %s4, %s862
        %p864 = scmp.lt.s32.totalorder %s41, 1
        %s865 = scalar_select %p864, %s41, 1
        %s866 = smul.addr %s865, 4
        %s867 = smul.addr %s866, 8
        %s868 = scalar_lea.vmem %s5, %s867
        %p869 = scmp.lt.s32.totalorder %s41, 1
        %s870 = scalar_select %p869, %s41, 1
        %s871 = scalar_lea.vmem %s6, %s870
        %p872 = scmp.lt.s32.totalorder %s41, 1
        %s873 = scalar_select %p872, %s41, 1
        %s874 = smul.addr %s873, 4
        %s875 = smul.addr %s874, 8
        %s876 = scalar_lea.vmem %s7, %s875
        %p877 = scmp.lt.s32.totalorder %s41, 1
        %s878 = scalar_select %p877, %s41, 1
        %s879 = scalar_lea.vmem %s8, %s878
        %p880 = scmp.lt.s32.totalorder %s41, 1
        %s881 = scalar_select %p880, %s41, 1
        %s882 = smul.addr %s881, 4
        %s883 = smul.addr %s882, 8
        %s884 = scalar_lea.vmem %s9, %s883
        %p885 = scmp.lt.s32.totalorder %s41, 1
        %s886 = scalar_select %p885, %s41, 1
        %s887 = scalar_lea.vmem %s10, %s886
        %p888 = scmp.lt.s32.totalorder %s41, 1
        %s889 = scalar_select %p888, %s41, 1
        %s890 = scalar_lea.vmem %s11, %s889
        %p891 = scmp.lt.s32.totalorder %s41, 1
        %s892 = scalar_select %p891, %s41, 1
        %s893 = scalar_lea.vmem %s12, %s892
        %p894 = scmp.lt.s32.totalorder %s41, 1
        %s895 = scalar_select %p894, %s41, 1
        %s896 = smul.addr %s895, 68
        %s897 = smul.addr %s896, 8
        %s898 = scalar_lea.vmem %s13, %s897
        %p899 = scmp.lt.s32.totalorder %s41, 1
        %s900 = scalar_select %p899, %s41, 1
        %s901 = smul.addr %s900, 17
        %s902 = scalar_lea.vmem %s14, %s901
        %p903 = scmp.lt.s32.totalorder %s41, 1
        %s904 = scalar_select %p903, %s41, 1
        %s905 = smul.addr %s904, 272
        %s906 = smul.addr %s905, 8
        %s907 = scalar_lea.vmem %s15, %s906
        %p908 = scmp.lt.s32.totalorder %s41, 1
        %s909 = scalar_select %p908, %s41, 1
        %s910 = scalar_lea.vmem %s16, %s909
        %s911 = smul.u32 2, %s40
        %s912 = smul.u32 2, %s40
        %p913 = scmp.eq.s32.totalorder %s41, 0
        // Predicated region
        $region97: #{tpu_custom_call.1} parent=95 // pred_check
          %p914 = pneg %p913
        $region98: #{tpu_custom_call.1} parent=95 // pred_check_branch
          %916 = sbr.rel (%p914) target = $region100
        $region99: #{tpu_custom_call.1} parent=95 // pred_region
          %v917 = vld [vmem:[%s848] sm:$0xff]
          %v918 = vld [vmem:[%s848 + $0x8] sm:$0xff]
          %vm919 = vcmask 261120
          %920 = vst.msk [vmem:[#allocation2] sm:$0xff] %vm919, %v917
          %921 = vst.msk [vmem:[#allocation2 + $0x8] sm:$0xff] %vm919, %v918
        $region100: #{tpu_custom_call.1} parent=95 // pred_fallthru
          _
        %v922 = vld [vmem:[#allocation2] sm:$0xff]
        %v923 = vld [vmem:[#allocation2 + $0x8] sm:$0xff]
        %v924 = vld [vmem:[%s852] sm:$0x1]
        %v925 = vld [vmem:[%s855] sm:$0x1]
        %vm926 = vcmask 261120
        %v927 = vsel %vm926, %v922, 0.0
        %928 = vadd.xlane.f32.xlu0 %v927
        %v929 = vpop.xlane.xlu0 %928
        %v930 = vsel %vm926, %v923, 0.0
        %931 = vadd.xlane.f32.xlu0 %v930
        %v932 = vpop.xlane.xlu0 %931
        %v933 = vrcp.pop 32.0
        %v934 = vmul.f32 %v929, %v933
        %v935 = vmul.f32 %v932, %v933
        %v936 = vsub.f32 %v922, %v934
        %v937 = vsub.f32 %v923, %v935
        %v938 = vmul.f32 %v936, %v936
        %v939 = vmul.f32 %v937, %v937
        %v940 = vsel %vm926, %v938, 0.0
        %941 = vadd.xlane.f32.xlu0 %v940
        %v942 = vpop.xlane.xlu0 %941
        %v943 = vsel %vm926, %v939, 0.0
        %944 = vadd.xlane.f32.xlu0 %v943
        %v945 = vpop.xlane.xlu0 %944
        %v946 = vmul.f32 %v942, %v933
        %v947 = vmul.f32 %v945, %v933
        %v948 = vadd.f32 %v946, 1e-05
        %v949 = vadd.f32 %v947, 1e-05
        %v950 = vrsqrt.pop %v948
        %v951 = vrsqrt.pop %v949
        %v952 = vmul.f32 %v936, %v950
        %v953 = vmul.f32 %v937, %v951
        %v955 = vlaneseq
        %v956 = vshrl.u32 %v955, 7
        %v957 = vsub.s32 0, %v956
        %v958 = vrot.slane %v924, %v957
        %v960 = vmul.f32 %v952, %v958
        %v961 = vmul.f32 %v953, %v958
        %v963 = vlaneseq
        %v964 = vshrl.u32 %v963, 7
        %v965 = vsub.s32 0, %v964
        %v966 = vrot.slane %v925, %v965
        %v968 = vadd.f32 %v960, %v966
        %v969 = vadd.f32 %v961, %v966
        %v970 = vld [vmem:[%s860] sm:$0xff]
        %v971 = vld [vmem:[%s860 + $0x8] sm:$0xff]
        %v972 = vld [vmem:[%s860 + $0x10] sm:$0xff]
        %v973 = vld [vmem:[%s860 + $0x18] sm:$0xff]
        %v974 = vld [vmem:[%s863] sm:$0x1]
        %v976 = vlaneseq
        %v977 = vshrl.u32 %v976, 7
        %v978 = vsub.s32 0, %v977
        %v979 = vrot.slane %v974, %v978
        %v982 = vsel %vm926, %v968, 0
        %v985 = vsel %vm926, %v969, 0
        %987 = vmatprep.subr.mxu0 0.0
        %988 = vmatpush1.msra.mxu0 0.0
        %989 = vmatprep.subr.mxu0 0.0
        %990 = vmatpush1.msra.mxu0 0.0
        %991 = vmatprep.subr.mxu0 0.0
        %992 = vmatpush1.msra.mxu0 0.0
        %993 = vmatprep.subr.mxu0 0.0
        %994 = vmatpush1.msra.mxu0 0.0
        %995 = vmatprep.subr.mxu0 0.0
        %996 = vmatpush1.msra.mxu0 0.0
        %997 = vmatprep.subr.mxu0 0.0
        %998 = vmatpush1.msra.mxu0 0.0
        %999 = vmatprep.subr.mxu0 0.0
        %1000 = vmatpush1.msra.mxu0 0.0
        %1001 = vmatprep.subr.mxu0 0.0
        %1002 = vmatpush1.msra.mxu0 0.0
        %1003 = vmatprep.subr.mxu0 0.0
        %1004 = vmatpush1.msra.mxu0 0.0
        %1005 = vmatprep.subr.mxu0 0.0
        %1006 = vmatpush1.msra.mxu0 0.0
        %1007 = vmatprep.subr.mxu0 0.0
        %1008 = vmatpush1.msra.mxu0 0.0
        %1009 = vmatprep.subr.mxu0 0.0
        %1010 = vmatpush1.msra.mxu0 0.0
        %1011 = vmatprep.subr.mxu0 0.0
        %1012 = vmatpush1.msra.mxu0 %v973
        %1013 = vmatprep.subr.mxu0 0.0
        %1014 = vmatpush1.msra.mxu0 %v972
        %1015 = vmatprep.subr.mxu0 0.0
        %1016 = vmatpush1.msra.mxu0 %v971
        %1017 = vmatprep.subr.mxu0 0.0
        %1018 = vmatpush1.msra.mxu0 %v970
        %1019 = vmatprep.subr.mxu0 0.0
        %1020 = vmatpush2.msra.mxu0 0.0
        %1021 = vmatprep.subr.mxu0 0.0
        %1022 = vmatpush2.msra.mxu0 0.0
        %1023 = vmatprep.subr.mxu0 0.0
        %1024 = vmatpush2.msra.mxu0 0.0
        %1025 = vmatprep.subr.mxu0 0.0
        %1026 = vmatpush2.msra.mxu0 0.0
        %1027 = vmatprep.subr.mxu0 0.0
        %1028 = vmatpush2.msra.mxu0 0.0
        %1029 = vmatprep.subr.mxu0 0.0
        %1030 = vmatpush2.msra.mxu0 0.0
        %1031 = vmatprep.subr.mxu0 0.0
        %1032 = vmatpush2.msra.mxu0 0.0
        %1033 = vmatprep.subr.mxu0 0.0
        %1034 = vmatpush2.msra.mxu0 0.0
        %1035 = vmatprep.subr.mxu0 0.0
        %1036 = vmatpush2.msra.mxu0 0.0
        %1037 = vmatprep.subr.mxu0 0.0
        %1038 = vmatpush2.msra.mxu0 0.0
        %1039 = vmatprep.subr.mxu0 0.0
        %1040 = vmatpush2.msra.mxu0 0.0
        %1041 = vmatprep.subr.mxu0 0.0
        %1042 = vmatpush2.msra.mxu0 0.0
        %1043 = vmatprep.subr.mxu0 0.0
        %1044 = vmatpush2.msra.mxu0 0.0
        %1045 = vmatprep.subr.mxu0 0.0
        %1046 = vmatpush2.msra.mxu0 0.0
        %1047 = vmatprep.subr.mxu0 0.0
        %1048 = vmatpush2.msra.mxu0 0.0
        %1049 = vmatprep.subr.mxu0 0.0
        %1050 = vmatpush2.msra.mxu0 0.0
        %1051 = vmatprep.mubr.f32.mxu0 0.0
        %1052 = vmatmul.mubr.f32.gmra.mxu0 %v982
        %v1053 = vpop.f32.mrf.mxu0
        %v1054 = vadd.f32 %v979, %v1053
        %v1055 = vpop.f32.mrf.mxu0
        %1056 = vmatprep.mubr.f32.mxu0 0.0
        %1057 = vmatmul.mubr.f32.gmra.mxu0 %v985
        %v1058 = vpop.f32.mrf.mxu0
        %v1059 = vadd.f32 %v979, %v1058
        %v1060 = vpop.f32.mrf.mxu0
        %1061 = vdwg.mxu0
        %v1062 = vld [vmem:[%s868] sm:$0xff]
        %v1063 = vld [vmem:[%s868 + $0x8] sm:$0xff]
        %v1064 = vld [vmem:[%s868 + $0x10] sm:$0xff]
        %v1065 = vld [vmem:[%s868 + $0x18] sm:$0xff]
        %v1066 = vld [vmem:[%s871] sm:$0x1]
        %v1068 = vlaneseq
        %v1069 = vshrl.u32 %v1068, 7
        %v1070 = vsub.s32 0, %v1069
        %v1071 = vrot.slane %v1066, %v1070
        %1073 = vmatprep.subr.mxu0 0.0
        %1074 = vmatpush1.msra.mxu0 0.0
        %1075 = vmatprep.subr.mxu0 0.0
        %1076 = vmatpush1.msra.mxu0 0.0
        %1077 = vmatprep.subr.mxu0 0.0
        %1078 = vmatpush1.msra.mxu0 0.0
        %1079 = vmatprep.subr.mxu0 0.0
        %1080 = vmatpush1.msra.mxu0 0.0
        %1081 = vmatprep.subr.mxu0 0.0
        %1082 = vmatpush1.msra.mxu0 0.0
        %1083 = vmatprep.subr.mxu0 0.0
        %1084 = vmatpush1.msra.mxu0 0.0
        %1085 = vmatprep.subr.mxu0 0.0
        %1086 = vmatpush1.msra.mxu0 0.0
        %1087 = vmatprep.subr.mxu0 0.0
        %1088 = vmatpush1.msra.mxu0 0.0
        %1089 = vmatprep.subr.mxu0 0.0
        %1090 = vmatpush1.msra.mxu0 0.0
        %1091 = vmatprep.subr.mxu0 0.0
        %1092 = vmatpush1.msra.mxu0 0.0
        %1093 = vmatprep.subr.mxu0 0.0
        %1094 = vmatpush1.msra.mxu0 0.0
        %1095 = vmatprep.subr.mxu0 0.0
        %1096 = vmatpush1.msra.mxu0 0.0
        %1097 = vmatprep.subr.mxu0 0.0
        %1098 = vmatpush1.msra.mxu0 %v1065
        %1099 = vmatprep.subr.mxu0 0.0
        %1100 = vmatpush1.msra.mxu0 %v1064
        %1101 = vmatprep.subr.mxu0 0.0
        %1102 = vmatpush1.msra.mxu0 %v1063
        %1103 = vmatprep.subr.mxu0 0.0
        %1104 = vmatpush1.msra.mxu0 %v1062
        %1105 = vmatprep.subr.mxu0 0.0
        %1106 = vmatpush2.msra.mxu0 0.0
        %1107 = vmatprep.subr.mxu0 0.0
        %1108 = vmatpush2.msra.mxu0 0.0
        %1109 = vmatprep.subr.mxu0 0.0
        %1110 = vmatpush2.msra.mxu0 0.0
        %1111 = vmatprep.subr.mxu0 0.0
        %1112 = vmatpush2.msra.mxu0 0.0
        %1113 = vmatprep.subr.mxu0 0.0
        %1114 = vmatpush2.msra.mxu0 0.0
        %1115 = vmatprep.subr.mxu0 0.0
        %1116 = vmatpush2.msra.mxu0 0.0
        %1117 = vmatprep.subr.mxu0 0.0
        %1118 = vmatpush2.msra.mxu0 0.0
        %1119 = vmatprep.subr.mxu0 0.0
        %1120 = vmatpush2.msra.mxu0 0.0
        %1121 = vmatprep.subr.mxu0 0.0
        %1122 = vmatpush2.msra.mxu0 0.0
        %1123 = vmatprep.subr.mxu0 0.0
        %1124 = vmatpush2.msra.mxu0 0.0
        %1125 = vmatprep.subr.mxu0 0.0
        %1126 = vmatpush2.msra.mxu0 0.0
        %1127 = vmatprep.subr.mxu0 0.0
        %1128 = vmatpush2.msra.mxu0 0.0
        %1129 = vmatprep.subr.mxu0 0.0
        %1130 = vmatpush2.msra.mxu0 0.0
        %1131 = vmatprep.subr.mxu0 0.0
        %1132 = vmatpush2.msra.mxu0 0.0
        %1133 = vmatprep.subr.mxu0 0.0
        %1134 = vmatpush2.msra.mxu0 0.0
        %1135 = vmatprep.subr.mxu0 0.0
        %1136 = vmatpush2.msra.mxu0 0.0
        %1137 = vmatprep.mubr.f32.mxu0 0.0
        %1138 = vmatmul.mubr.f32.gmra.mxu0 %v982
        %v1139 = vpop.f32.mrf.mxu0
        %v1140 = vadd.f32 %v1071, %v1139
        %v1141 = vpop.f32.mrf.mxu0
        %1142 = vmatprep.mubr.f32.mxu0 0.0
        %1143 = vmatmul.mubr.f32.gmra.mxu0 %v985
        %v1144 = vpop.f32.mrf.mxu0
        %v1145 = vadd.f32 %v1071, %v1144
        %v1146 = vpop.f32.mrf.mxu0
        %1147 = vdwg.mxu0
        %v1148 = vld [vmem:[%s876] sm:$0xff]
        %v1149 = vld [vmem:[%s876 + $0x8] sm:$0xff]
        %v1150 = vld [vmem:[%s876 + $0x10] sm:$0xff]
        %v1151 = vld [vmem:[%s876 + $0x18] sm:$0xff]
        %v1152 = vld [vmem:[%s879] sm:$0x1]
        %v1154 = vlaneseq
        %v1155 = vshrl.u32 %v1154, 7
        %v1156 = vsub.s32 0, %v1155
        %v1157 = vrot.slane %v1152, %v1156
        %1159 = vmatprep.subr.mxu0 0.0
        %1160 = vmatpush1.msra.mxu0 0.0
        %1161 = vmatprep.subr.mxu0 0.0
        %1162 = vmatpush1.msra.mxu0 0.0
        %1163 = vmatprep.subr.mxu0 0.0
        %1164 = vmatpush1.msra.mxu0 0.0
        %1165 = vmatprep.subr.mxu0 0.0
        %1166 = vmatpush1.msra.mxu0 0.0
        %1167 = vmatprep.subr.mxu0 0.0
        %1168 = vmatpush1.msra.mxu0 0.0
        %1169 = vmatprep.subr.mxu0 0.0
        %1170 = vmatpush1.msra.mxu0 0.0
        %1171 = vmatprep.subr.mxu0 0.0
        %1172 = vmatpush1.msra.mxu0 0.0
        %1173 = vmatprep.subr.mxu0 0.0
        %1174 = vmatpush1.msra.mxu0 0.0
        %1175 = vmatprep.subr.mxu0 0.0
        %1176 = vmatpush1.msra.mxu0 0.0
        %1177 = vmatprep.subr.mxu0 0.0
        %1178 = vmatpush1.msra.mxu0 0.0
        %1179 = vmatprep.subr.mxu0 0.0
        %1180 = vmatpush1.msra.mxu0 0.0
        %1181 = vmatprep.subr.mxu0 0.0
        %1182 = vmatpush1.msra.mxu0 0.0
        %1183 = vmatprep.subr.mxu0 0.0
        %1184 = vmatpush1.msra.mxu0 %v1151
        %1185 = vmatprep.subr.mxu0 0.0
        %1186 = vmatpush1.msra.mxu0 %v1150
        %1187 = vmatprep.subr.mxu0 0.0
        %1188 = vmatpush1.msra.mxu0 %v1149
        %1189 = vmatprep.subr.mxu0 0.0
        %1190 = vmatpush1.msra.mxu0 %v1148
        %1191 = vmatprep.subr.mxu0 0.0
        %1192 = vmatpush2.msra.mxu0 0.0
        %1193 = vmatprep.subr.mxu0 0.0
        %1194 = vmatpush2.msra.mxu0 0.0
        %1195 = vmatprep.subr.mxu0 0.0
        %1196 = vmatpush2.msra.mxu0 0.0
        %1197 = vmatprep.subr.mxu0 0.0
        %1198 = vmatpush2.msra.mxu0 0.0
        %1199 = vmatprep.subr.mxu0 0.0
        %1200 = vmatpush2.msra.mxu0 0.0
        %1201 = vmatprep.subr.mxu0 0.0
        %1202 = vmatpush2.msra.mxu0 0.0
        %1203 = vmatprep.subr.mxu0 0.0
        %1204 = vmatpush2.msra.mxu0 0.0
        %1205 = vmatprep.subr.mxu0 0.0
        %1206 = vmatpush2.msra.mxu0 0.0
        %1207 = vmatprep.subr.mxu0 0.0
        %1208 = vmatpush2.msra.mxu0 0.0
        %1209 = vmatprep.subr.mxu0 0.0
        %1210 = vmatpush2.msra.mxu0 0.0
        %1211 = vmatprep.subr.mxu0 0.0
        %1212 = vmatpush2.msra.mxu0 0.0
        %1213 = vmatprep.subr.mxu0 0.0
        %1214 = vmatpush2.msra.mxu0 0.0
        %1215 = vmatprep.subr.mxu0 0.0
        %1216 = vmatpush2.msra.mxu0 0.0
        %1217 = vmatprep.subr.mxu0 0.0
        %1218 = vmatpush2.msra.mxu0 0.0
        %1219 = vmatprep.subr.mxu0 0.0
        %1220 = vmatpush2.msra.mxu0 0.0
        %1221 = vmatprep.subr.mxu0 0.0
        %1222 = vmatpush2.msra.mxu0 0.0
        %1223 = vmatprep.mubr.f32.mxu0 0.0
        %1224 = vmatmul.mubr.f32.gmra.mxu0 %v982
        %v1225 = vpop.f32.mrf.mxu0
        %v1226 = vadd.f32 %v1157, %v1225
        %v1227 = vpop.f32.mrf.mxu0
        %1228 = vmatprep.mubr.f32.mxu0 0.0
        %1229 = vmatmul.mubr.f32.gmra.mxu0 %v985
        %v1230 = vpop.f32.mrf.mxu0
        %v1231 = vadd.f32 %v1157, %v1230
        %v1232 = vpop.f32.mrf.mxu0
        %1233 = vdwg.mxu0
        %v1234 = vmul.f32 %v1054, 0.25
        %v1235 = vmul.f32 %v1059, 0.25
        %1238 = vrot.lane.b32.xlu0 %v1234, 112
        %v1239 = vpop.permute.xlu0 %1238
        %1240 = vrot.lane.b32.xlu0 %v1235, 112
        %v1241 = vpop.permute.xlu0 %1240
        %1244 = vrot.lane.b32.xlu0 %v1140, 112
        %v1245 = vpop.permute.xlu0 %1244
        %1246 = vrot.lane.b32.xlu0 %v1145, 112
        %v1247 = vpop.permute.xlu0 %1246
        %1250 = vrot.lane.b32.xlu0 %v1226, 112
        %v1251 = vpop.permute.xlu0 %1250
        %1252 = vrot.lane.b32.xlu0 %v1231, 112
        %v1253 = vpop.permute.xlu0 %1252
        %vm1256 = vcmask 130048
        %v1257 = vsel %vm1256, %v1234, 0
        %v1259 = vsel %vm1256, %v1140, 0
        %1261 = vmatprep.subr.mxu0 0.0
        %1262 = vmatpush1.xpose.msra.mxu0 0.0
        %1263 = vmatprep.subr.mxu0 0.0
        %1264 = vmatpush1.xpose.msra.mxu0 0.0
        %1265 = vmatprep.subr.mxu0 0.0
        %1266 = vmatpush1.xpose.msra.mxu0 0.0
        %1267 = vmatprep.subr.mxu0 0.0
        %1268 = vmatpush1.xpose.msra.mxu0 0.0
        %1269 = vmatprep.subr.mxu0 0.0
        %1270 = vmatpush1.xpose.msra.mxu0 0.0
        %1271 = vmatprep.subr.mxu0 0.0
        %1272 = vmatpush1.xpose.msra.mxu0 0.0
        %1273 = vmatprep.subr.mxu0 0.0
        %1274 = vmatpush1.xpose.msra.mxu0 0.0
        %1275 = vmatprep.subr.mxu0 0.0
        %1276 = vmatpush1.xpose.msra.mxu0 0.0
        %1277 = vmatprep.subr.mxu0 0.0
        %1278 = vmatpush1.xpose.msra.mxu0 0.0
        %1279 = vmatprep.subr.mxu0 0.0
        %1280 = vmatpush1.xpose.msra.mxu0 0.0
        %1281 = vmatprep.subr.mxu0 0.0
        %1282 = vmatpush1.xpose.msra.mxu0 0.0
        %1283 = vmatprep.subr.mxu0 0.0
        %1284 = vmatpush1.xpose.msra.mxu0 0.0
        %1285 = vmatprep.subr.mxu0 0.0
        %1286 = vmatpush1.xpose.msra.mxu0 0.0
        %1287 = vmatprep.subr.mxu0 0.0
        %1288 = vmatpush1.xpose.msra.mxu0 0.0
        %1289 = vmatprep.subr.mxu0 0.0
        %1290 = vmatpush1.xpose.msra.mxu0 0.0
        %1291 = vmatprep.subr.mxu0 0.0
        %1292 = vmatpush1.xpose.msra.mxu0 %v1259
        %1293 = vmatprep.subr.mxu0 0.0
        %1294 = vmatpush2.xpose.msra.mxu0 0.0
        %1295 = vmatprep.subr.mxu0 0.0
        %1296 = vmatpush2.xpose.msra.mxu0 0.0
        %1297 = vmatprep.subr.mxu0 0.0
        %1298 = vmatpush2.xpose.msra.mxu0 0.0
        %1299 = vmatprep.subr.mxu0 0.0
        %1300 = vmatpush2.xpose.msra.mxu0 0.0
        %1301 = vmatprep.subr.mxu0 0.0
        %1302 = vmatpush2.xpose.msra.mxu0 0.0
        %1303 = vmatprep.subr.mxu0 0.0
        %1304 = vmatpush2.xpose.msra.mxu0 0.0
        %1305 = vmatprep.subr.mxu0 0.0
        %1306 = vmatpush2.xpose.msra.mxu0 0.0
        %1307 = vmatprep.subr.mxu0 0.0
        %1308 = vmatpush2.xpose.msra.mxu0 0.0
        %1309 = vmatprep.subr.mxu0 0.0
        %1310 = vmatpush2.xpose.msra.mxu0 0.0
        %1311 = vmatprep.subr.mxu0 0.0
        %1312 = vmatpush2.xpose.msra.mxu0 0.0
        %1313 = vmatprep.subr.mxu0 0.0
        %1314 = vmatpush2.xpose.msra.mxu0 0.0
        %1315 = vmatprep.subr.mxu0 0.0
        %1316 = vmatpush2.xpose.msra.mxu0 0.0
        %1317 = vmatprep.subr.mxu0 0.0
        %1318 = vmatpush2.xpose.msra.mxu0 0.0
        %1319 = vmatprep.subr.mxu0 0.0
        %1320 = vmatpush2.xpose.msra.mxu0 0.0
        %1321 = vmatprep.subr.mxu0 0.0
        %1322 = vmatpush2.xpose.msra.mxu0 0.0
        %1323 = vmatprep.subr.mxu0 0.0
        %1324 = vmatpush2.xpose.msra.mxu0 0.0
        %1325 = vmatprep.mubr.f32.mxu0 0.0
        %1326 = vmatmul.mubr.f32.gmra.mxu0 %v1257
        %v1327 = vpop.f32.mrf.mxu0
        %v1328 = vadd.f32 0.0, %v1327
        %v1329 = vpop.f32.mrf.mxu0
        %1330 = vdwg.mxu0
        %v1331 = vsel %vm1256, %v1235, 0
        %v1333 = vsel %vm1256, %v1145, 0
        %1335 = vmatprep.subr.mxu0 0.0
        %1336 = vmatpush1.xpose.msra.mxu0 0.0
        %1337 = vmatprep.subr.mxu0 0.0
        %1338 = vmatpush1.xpose.msra.mxu0 0.0
        %1339 = vmatprep.subr.mxu0 0.0
        %1340 = vmatpush1.xpose.msra.mxu0 0.0
        %1341 = vmatprep.subr.mxu0 0.0
        %1342 = vmatpush1.xpose.msra.mxu0 0.0
        %1343 = vmatprep.subr.mxu0 0.0
        %1344 = vmatpush1.xpose.msra.mxu0 0.0
        %1345 = vmatprep.subr.mxu0 0.0
        %1346 = vmatpush1.xpose.msra.mxu0 0.0
        %1347 = vmatprep.subr.mxu0 0.0
        %1348 = vmatpush1.xpose.msra.mxu0 0.0
        %1349 = vmatprep.subr.mxu0 0.0
        %1350 = vmatpush1.xpose.msra.mxu0 0.0
        %1351 = vmatprep.subr.mxu0 0.0
        %1352 = vmatpush1.xpose.msra.mxu0 0.0
        %1353 = vmatprep.subr.mxu0 0.0
        %1354 = vmatpush1.xpose.msra.mxu0 0.0
        %1355 = vmatprep.subr.mxu0 0.0
        %1356 = vmatpush1.xpose.msra.mxu0 0.0
        %1357 = vmatprep.subr.mxu0 0.0
        %1358 = vmatpush1.xpose.msra.mxu0 0.0
        %1359 = vmatprep.subr.mxu0 0.0
        %1360 = vmatpush1.xpose.msra.mxu0 0.0
        %1361 = vmatprep.subr.mxu0 0.0
        %1362 = vmatpush1.xpose.msra.mxu0 0.0
        %1363 = vmatprep.subr.mxu0 0.0
        %1364 = vmatpush1.xpose.msra.mxu0 0.0
        %1365 = vmatprep.subr.mxu0 0.0
        %1366 = vmatpush1.xpose.msra.mxu0 %v1333
        %1367 = vmatprep.subr.mxu0 0.0
        %1368 = vmatpush2.xpose.msra.mxu0 0.0
        %1369 = vmatprep.subr.mxu0 0.0
        %1370 = vmatpush2.xpose.msra.mxu0 0.0
        %1371 = vmatprep.subr.mxu0 0.0
        %1372 = vmatpush2.xpose.msra.mxu0 0.0
        %1373 = vmatprep.subr.mxu0 0.0
        %1374 = vmatpush2.xpose.msra.mxu0 0.0
        %1375 = vmatprep.subr.mxu0 0.0
        %1376 = vmatpush2.xpose.msra.mxu0 0.0
        %1377 = vmatprep.subr.mxu0 0.0
        %1378 = vmatpush2.xpose.msra.mxu0 0.0
        %1379 = vmatprep.subr.mxu0 0.0
        %1380 = vmatpush2.xpose.msra.mxu0 0.0
        %1381 = vmatprep.subr.mxu0 0.0
        %1382 = vmatpush2.xpose.msra.mxu0 0.0
        %1383 = vmatprep.subr.mxu0 0.0
        %1384 = vmatpush2.xpose.msra.mxu0 0.0
        %1385 = vmatprep.subr.mxu0 0.0
        %1386 = vmatpush2.xpose.msra.mxu0 0.0
        %1387 = vmatprep.subr.mxu0 0.0
        %1388 = vmatpush2.xpose.msra.mxu0 0.0
        %1389 = vmatprep.subr.mxu0 0.0
        %1390 = vmatpush2.xpose.msra.mxu0 0.0
        %1391 = vmatprep.subr.mxu0 0.0
        %1392 = vmatpush2.xpose.msra.mxu0 0.0
        %1393 = vmatprep.subr.mxu0 0.0
        %1394 = vmatpush2.xpose.msra.mxu0 0.0
        %1395 = vmatprep.subr.mxu0 0.0
        %1396 = vmatpush2.xpose.msra.mxu0 0.0
        %1397 = vmatprep.subr.mxu0 0.0
        %1398 = vmatpush2.xpose.msra.mxu0 0.0
        %1399 = vmatprep.mubr.f32.mxu0 0.0
        %1400 = vmatmul.mubr.f32.gmra.mxu0 %v1331
        %v1401 = vpop.f32.mrf.mxu0
        %v1402 = vadd.f32 0.0, %v1401
        %v1403 = vpop.f32.mrf.mxu0
        %1404 = vdwg.mxu0
        %v1405 = vsel %vm1256, %v1239, 0
        %v1407 = vsel %vm1256, %v1245, 0
        %1409 = vmatprep.subr.mxu0 0.0
        %1410 = vmatpush1.xpose.msra.mxu0 0.0
        %1411 = vmatprep.subr.mxu0 0.0
        %1412 = vmatpush1.xpose.msra.mxu0 0.0
        %1413 = vmatprep.subr.mxu0 0.0
        %1414 = vmatpush1.xpose.msra.mxu0 0.0
        %1415 = vmatprep.subr.mxu0 0.0
        %1416 = vmatpush1.xpose.msra.mxu0 0.0
        %1417 = vmatprep.subr.mxu0 0.0
        %1418 = vmatpush1.xpose.msra.mxu0 0.0
        %1419 = vmatprep.subr.mxu0 0.0
        %1420 = vmatpush1.xpose.msra.mxu0 0.0
        %1421 = vmatprep.subr.mxu0 0.0
        %1422 = vmatpush1.xpose.msra.mxu0 0.0
        %1423 = vmatprep.subr.mxu0 0.0
        %1424 = vmatpush1.xpose.msra.mxu0 0.0
        %1425 = vmatprep.subr.mxu0 0.0
        %1426 = vmatpush1.xpose.msra.mxu0 0.0
        %1427 = vmatprep.subr.mxu0 0.0
        %1428 = vmatpush1.xpose.msra.mxu0 0.0
        %1429 = vmatprep.subr.mxu0 0.0
        %1430 = vmatpush1.xpose.msra.mxu0 0.0
        %1431 = vmatprep.subr.mxu0 0.0
        %1432 = vmatpush1.xpose.msra.mxu0 0.0
        %1433 = vmatprep.subr.mxu0 0.0
        %1434 = vmatpush1.xpose.msra.mxu0 0.0
        %1435 = vmatprep.subr.mxu0 0.0
        %1436 = vmatpush1.xpose.msra.mxu0 0.0
        %1437 = vmatprep.subr.mxu0 0.0
        %1438 = vmatpush1.xpose.msra.mxu0 0.0
        %1439 = vmatprep.subr.mxu0 0.0
        %1440 = vmatpush1.xpose.msra.mxu0 %v1407
        %1441 = vmatprep.subr.mxu0 0.0
        %1442 = vmatpush2.xpose.msra.mxu0 0.0
        %1443 = vmatprep.subr.mxu0 0.0
        %1444 = vmatpush2.xpose.msra.mxu0 0.0
        %1445 = vmatprep.subr.mxu0 0.0
        %1446 = vmatpush2.xpose.msra.mxu0 0.0
        %1447 = vmatprep.subr.mxu0 0.0
        %1448 = vmatpush2.xpose.msra.mxu0 0.0
        %1449 = vmatprep.subr.mxu0 0.0
        %1450 = vmatpush2.xpose.msra.mxu0 0.0
        %1451 = vmatprep.subr.mxu0 0.0
        %1452 = vmatpush2.xpose.msra.mxu0 0.0
        %1453 = vmatprep.subr.mxu0 0.0
        %1454 = vmatpush2.xpose.msra.mxu0 0.0
        %1455 = vmatprep.subr.mxu0 0.0
        %1456 = vmatpush2.xpose.msra.mxu0 0.0
        %1457 = vmatprep.subr.mxu0 0.0
        %1458 = vmatpush2.xpose.msra.mxu0 0.0
        %1459 = vmatprep.subr.mxu0 0.0
        %1460 = vmatpush2.xpose.msra.mxu0 0.0
        %1461 = vmatprep.subr.mxu0 0.0
        %1462 = vmatpush2.xpose.msra.mxu0 0.0
        %1463 = vmatprep.subr.mxu0 0.0
        %1464 = vmatpush2.xpose.msra.mxu0 0.0
        %1465 = vmatprep.subr.mxu0 0.0
        %1466 = vmatpush2.xpose.msra.mxu0 0.0
        %1467 = vmatprep.subr.mxu0 0.0
        %1468 = vmatpush2.xpose.msra.mxu0 0.0
        %1469 = vmatprep.subr.mxu0 0.0
        %1470 = vmatpush2.xpose.msra.mxu0 0.0
        %1471 = vmatprep.subr.mxu0 0.0
        %1472 = vmatpush2.xpose.msra.mxu0 0.0
        %1473 = vmatprep.mubr.f32.mxu0 0.0
        %1474 = vmatmul.mubr.f32.gmra.mxu0 %v1405
        %v1475 = vpop.f32.mrf.mxu0
        %v1476 = vadd.f32 0.0, %v1475
        %v1477 = vpop.f32.mrf.mxu0
        %1478 = vdwg.mxu0
        %v1479 = vsel %vm1256, %v1241, 0
        %v1481 = vsel %vm1256, %v1247, 0
        %1483 = vmatprep.subr.mxu0 0.0
        %1484 = vmatpush1.xpose.msra.mxu0 0.0
        %1485 = vmatprep.subr.mxu0 0.0
        %1486 = vmatpush1.xpose.msra.mxu0 0.0
        %1487 = vmatprep.subr.mxu0 0.0
        %1488 = vmatpush1.xpose.msra.mxu0 0.0
        %1489 = vmatprep.subr.mxu0 0.0
        %1490 = vmatpush1.xpose.msra.mxu0 0.0
        %1491 = vmatprep.subr.mxu0 0.0
        %1492 = vmatpush1.xpose.msra.mxu0 0.0
        %1493 = vmatprep.subr.mxu0 0.0
        %1494 = vmatpush1.xpose.msra.mxu0 0.0
        %1495 = vmatprep.subr.mxu0 0.0
        %1496 = vmatpush1.xpose.msra.mxu0 0.0
        %1497 = vmatprep.subr.mxu0 0.0
        %1498 = vmatpush1.xpose.msra.mxu0 0.0
        %1499 = vmatprep.subr.mxu0 0.0
        %1500 = vmatpush1.xpose.msra.mxu0 0.0
        %1501 = vmatprep.subr.mxu0 0.0
        %1502 = vmatpush1.xpose.msra.mxu0 0.0
        %1503 = vmatprep.subr.mxu0 0.0
        %1504 = vmatpush1.xpose.msra.mxu0 0.0
        %1505 = vmatprep.subr.mxu0 0.0
        %1506 = vmatpush1.xpose.msra.mxu0 0.0
        %1507 = vmatprep.subr.mxu0 0.0
        %1508 = vmatpush1.xpose.msra.mxu0 0.0
        %1509 = vmatprep.subr.mxu0 0.0
        %1510 = vmatpush1.xpose.msra.mxu0 0.0
        %1511 = vmatprep.subr.mxu0 0.0
        %1512 = vmatpush1.xpose.msra.mxu0 0.0
        %1513 = vmatprep.subr.mxu0 0.0
        %1514 = vmatpush1.xpose.msra.mxu0 %v1481
        %1515 = vmatprep.subr.mxu0 0.0
        %1516 = vmatpush2.xpose.msra.mxu0 0.0
        %1517 = vmatprep.subr.mxu0 0.0
        %1518 = vmatpush2.xpose.msra.mxu0 0.0
        %1519 = vmatprep.subr.mxu0 0.0
        %1520 = vmatpush2.xpose.msra.mxu0 0.0
        %1521 = vmatprep.subr.mxu0 0.0
        %1522 = vmatpush2.xpose.msra.mxu0 0.0
        %1523 = vmatprep.subr.mxu0 0.0
        %1524 = vmatpush2.xpose.msra.mxu0 0.0
        %1525 = vmatprep.subr.mxu0 0.0
        %1526 = vmatpush2.xpose.msra.mxu0 0.0
        %1527 = vmatprep.subr.mxu0 0.0
        %1528 = vmatpush2.xpose.msra.mxu0 0.0
        %1529 = vmatprep.subr.mxu0 0.0
        %1530 = vmatpush2.xpose.msra.mxu0 0.0
        %1531 = vmatprep.subr.mxu0 0.0
        %1532 = vmatpush2.xpose.msra.mxu0 0.0
        %1533 = vmatprep.subr.mxu0 0.0
        %1534 = vmatpush2.xpose.msra.mxu0 0.0
        %1535 = vmatprep.subr.mxu0 0.0
        %1536 = vmatpush2.xpose.msra.mxu0 0.0
        %1537 = vmatprep.subr.mxu0 0.0
        %1538 = vmatpush2.xpose.msra.mxu0 0.0
        %1539 = vmatprep.subr.mxu0 0.0
        %1540 = vmatpush2.xpose.msra.mxu0 0.0
        %1541 = vmatprep.subr.mxu0 0.0
        %1542 = vmatpush2.xpose.msra.mxu0 0.0
        %1543 = vmatprep.subr.mxu0 0.0
        %1544 = vmatpush2.xpose.msra.mxu0 0.0
        %1545 = vmatprep.subr.mxu0 0.0
        %1546 = vmatpush2.xpose.msra.mxu0 0.0
        %1547 = vmatprep.mubr.f32.mxu0 0.0
        %1548 = vmatmul.mubr.f32.gmra.mxu0 %v1479
        %v1549 = vpop.f32.mrf.mxu0
        %v1550 = vadd.f32 0.0, %v1549
        %v1551 = vpop.f32.mrf.mxu0
        %1552 = vdwg.mxu0
        %vm1553 = vcmask 64512
        %v1554 = vsel %vm1553, %v1328, -inf
        %1555 = vmax.xlane.f32.xlu0 %v1554
        %v1556 = vpop.xlane.xlu0 %1555
        %v1557 = vsel %vm1553, %v1402, -inf
        %1558 = vmax.xlane.f32.xlu0 %v1557
        %v1559 = vpop.xlane.xlu0 %1558
        %v1560 = vsel %vm1553, %v1476, -inf
        %1561 = vmax.xlane.f32.xlu0 %v1560
        %v1562 = vpop.xlane.xlu0 %1561
        %v1563 = vsel %vm1553, %v1550, -inf
        %1564 = vmax.xlane.f32.xlu0 %v1563
        %v1565 = vpop.xlane.xlu0 %1564
        %v1566 = vmax.f32 %v1556, -1e+30
        %v1567 = vmax.f32 %v1559, -1e+30
        %v1568 = vmax.f32 %v1562, -1e+30
        %v1569 = vmax.f32 %v1565, -1e+30
        %v1570 = vsub.f32 -1e+30, %v1566
        %v1571 = vsub.f32 -1e+30, %v1567
        %v1572 = vsub.f32 -1e+30, %v1568
        %v1573 = vsub.f32 -1e+30, %v1569
        %v1574 = vmul.f32 %v1570, 1.442695
        %v1575 = vpow.pop %v1574
        %v1576 = vmul.f32 %v1571, 1.442695
        %v1577 = vpow.pop %v1576
        %v1578 = vmul.f32 %v1572, 1.442695
        %v1579 = vpow.pop %v1578
        %v1580 = vmul.f32 %v1573, 1.442695
        %v1581 = vpow.pop %v1580
        %v1582 = vsub.f32 %v1328, %v1566
        %v1583 = vsub.f32 %v1402, %v1567
        %v1584 = vsub.f32 %v1476, %v1568
        %v1585 = vsub.f32 %v1550, %v1569
        %v1586 = vmul.f32 %v1582, 1.442695
        %v1587 = vpow.pop %v1586
        %v1588 = vmul.f32 %v1583, 1.442695
        %v1589 = vpow.pop %v1588
        %v1590 = vmul.f32 %v1584, 1.442695
        %v1591 = vpow.pop %v1590
        %v1592 = vmul.f32 %v1585, 1.442695
        %v1593 = vpow.pop %v1592
        %v1594 = vmul.f32 %v1575, 0.0
        %v1595 = vmul.f32 %v1577, 0.0
        %v1596 = vmul.f32 %v1579, 0.0
        %v1597 = vmul.f32 %v1581, 0.0
        %v1598 = vsel %vm1553, %v1587, 0.0
        %1599 = vadd.xlane.f32.xlu0 %v1598
        %v1600 = vpop.xlane.xlu0 %1599
        %v1601 = vsel %vm1553, %v1589, 0.0
        %1602 = vadd.xlane.f32.xlu0 %v1601
        %v1603 = vpop.xlane.xlu0 %1602
        %v1604 = vsel %vm1553, %v1591, 0.0
        %1605 = vadd.xlane.f32.xlu0 %v1604
        %v1606 = vpop.xlane.xlu0 %1605
        %v1607 = vsel %vm1553, %v1593, 0.0
        %1608 = vadd.xlane.f32.xlu0 %v1607
        %v1609 = vpop.xlane.xlu0 %1608
        %v1610 = vadd.f32 %v1594, %v1600
        %v1611 = vadd.f32 %v1595, %v1603
        %v1612 = vadd.f32 %v1596, %v1606
        %v1613 = vadd.f32 %v1597, %v1609
        %v1615 = vsel %vm1553, %v1587, 0
        %1617 = vmatprep.subr.mxu0 0.0
        %1618 = vmatpush1.msra.mxu0 0.0
        %1619 = vmatprep.subr.mxu0 0.0
        %1620 = vmatpush1.msra.mxu0 0.0
        %1621 = vmatprep.subr.mxu0 0.0
        %1622 = vmatpush1.msra.mxu0 0.0
        %1623 = vmatprep.subr.mxu0 0.0
        %1624 = vmatpush1.msra.mxu0 0.0
        %1625 = vmatprep.subr.mxu0 0.0
        %1626 = vmatpush1.msra.mxu0 0.0
        %1627 = vmatprep.subr.mxu0 0.0
        %1628 = vmatpush1.msra.mxu0 0.0
        %1629 = vmatprep.subr.mxu0 0.0
        %1630 = vmatpush1.msra.mxu0 0.0
        %1631 = vmatprep.subr.mxu0 0.0
        %1632 = vmatpush1.msra.mxu0 0.0
        %1633 = vmatprep.subr.mxu0 0.0
        %1634 = vmatpush1.msra.mxu0 0.0
        %1635 = vmatprep.subr.mxu0 0.0
        %1636 = vmatpush1.msra.mxu0 0.0
        %1637 = vmatprep.subr.mxu0 0.0
        %1638 = vmatpush1.msra.mxu0 0.0
        %1639 = vmatprep.subr.mxu0 0.0
        %1640 = vmatpush1.msra.mxu0 0.0
        %1641 = vmatprep.subr.mxu0 0.0
        %1642 = vmatpush1.msra.mxu0 0.0
        %1643 = vmatprep.subr.mxu0 0.0
        %1644 = vmatpush1.msra.mxu0 0.0
        %1645 = vmatprep.subr.mxu0 0.0
        %1646 = vmatpush1.msra.mxu0 0.0
        %1647 = vmatprep.subr.mxu0 0.0
        %1648 = vmatpush1.msra.mxu0 %v1226
        %1649 = vmatprep.subr.mxu0 0.0
        %1650 = vmatpush2.msra.mxu0 0.0
        %1651 = vmatprep.subr.mxu0 0.0
        %1652 = vmatpush2.msra.mxu0 0.0
        %1653 = vmatprep.subr.mxu0 0.0
        %1654 = vmatpush2.msra.mxu0 0.0
        %1655 = vmatprep.subr.mxu0 0.0
        %1656 = vmatpush2.msra.mxu0 0.0
        %1657 = vmatprep.subr.mxu0 0.0
        %1658 = vmatpush2.msra.mxu0 0.0
        %1659 = vmatprep.subr.mxu0 0.0
        %1660 = vmatpush2.msra.mxu0 0.0
        %1661 = vmatprep.subr.mxu0 0.0
        %1662 = vmatpush2.msra.mxu0 0.0
        %1663 = vmatprep.subr.mxu0 0.0
        %1664 = vmatpush2.msra.mxu0 0.0
        %1665 = vmatprep.subr.mxu0 0.0
        %1666 = vmatpush2.msra.mxu0 0.0
        %1667 = vmatprep.subr.mxu0 0.0
        %1668 = vmatpush2.msra.mxu0 0.0
        %1669 = vmatprep.subr.mxu0 0.0
        %1670 = vmatpush2.msra.mxu0 0.0
        %1671 = vmatprep.subr.mxu0 0.0
        %1672 = vmatpush2.msra.mxu0 0.0
        %1673 = vmatprep.subr.mxu0 0.0
        %1674 = vmatpush2.msra.mxu0 0.0
        %1675 = vmatprep.subr.mxu0 0.0
        %1676 = vmatpush2.msra.mxu0 0.0
        %1677 = vmatprep.subr.mxu0 0.0
        %1678 = vmatpush2.msra.mxu0 0.0
        %1679 = vmatprep.subr.mxu0 0.0
        %1680 = vmatpush2.msra.mxu0 0.0
        %1681 = vmatprep.mubr.f32.mxu0 0.0
        %1682 = vmatmul.mubr.f32.gmra.mxu0 %v1615
        %v1683 = vpop.f32.mrf.mxu0
        %v1684 = vadd.f32 0.0, %v1683
        %v1685 = vpop.f32.mrf.mxu0
        %1686 = vdwg.mxu0
        %v1688 = vsel %vm1553, %v1589, 0
        %1690 = vmatprep.subr.mxu0 0.0
        %1691 = vmatpush1.msra.mxu0 0.0
        %1692 = vmatprep.subr.mxu0 0.0
        %1693 = vmatpush1.msra.mxu0 0.0
        %1694 = vmatprep.subr.mxu0 0.0
        %1695 = vmatpush1.msra.mxu0 0.0
        %1696 = vmatprep.subr.mxu0 0.0
        %1697 = vmatpush1.msra.mxu0 0.0
        %1698 = vmatprep.subr.mxu0 0.0
        %1699 = vmatpush1.msra.mxu0 0.0
        %1700 = vmatprep.subr.mxu0 0.0
        %1701 = vmatpush1.msra.mxu0 0.0
        %1702 = vmatprep.subr.mxu0 0.0
        %1703 = vmatpush1.msra.mxu0 0.0
        %1704 = vmatprep.subr.mxu0 0.0
        %1705 = vmatpush1.msra.mxu0 0.0
        %1706 = vmatprep.subr.mxu0 0.0
        %1707 = vmatpush1.msra.mxu0 0.0
        %1708 = vmatprep.subr.mxu0 0.0
        %1709 = vmatpush1.msra.mxu0 0.0
        %1710 = vmatprep.subr.mxu0 0.0
        %1711 = vmatpush1.msra.mxu0 0.0
        %1712 = vmatprep.subr.mxu0 0.0
        %1713 = vmatpush1.msra.mxu0 0.0
        %1714 = vmatprep.subr.mxu0 0.0
        %1715 = vmatpush1.msra.mxu0 0.0
        %1716 = vmatprep.subr.mxu0 0.0
        %1717 = vmatpush1.msra.mxu0 0.0
        %1718 = vmatprep.subr.mxu0 0.0
        %1719 = vmatpush1.msra.mxu0 0.0
        %1720 = vmatprep.subr.mxu0 0.0
        %1721 = vmatpush1.msra.mxu0 %v1231
        %1722 = vmatprep.subr.mxu0 0.0
        %1723 = vmatpush2.msra.mxu0 0.0
        %1724 = vmatprep.subr.mxu0 0.0
        %1725 = vmatpush2.msra.mxu0 0.0
        %1726 = vmatprep.subr.mxu0 0.0
        %1727 = vmatpush2.msra.mxu0 0.0
        %1728 = vmatprep.subr.mxu0 0.0
        %1729 = vmatpush2.msra.mxu0 0.0
        %1730 = vmatprep.subr.mxu0 0.0
        %1731 = vmatpush2.msra.mxu0 0.0
        %1732 = vmatprep.subr.mxu0 0.0
        %1733 = vmatpush2.msra.mxu0 0.0
        %1734 = vmatprep.subr.mxu0 0.0
        %1735 = vmatpush2.msra.mxu0 0.0
        %1736 = vmatprep.subr.mxu0 0.0
        %1737 = vmatpush2.msra.mxu0 0.0
        %1738 = vmatprep.subr.mxu0 0.0
        %1739 = vmatpush2.msra.mxu0 0.0
        %1740 = vmatprep.subr.mxu0 0.0
        %1741 = vmatpush2.msra.mxu0 0.0
        %1742 = vmatprep.subr.mxu0 0.0
        %1743 = vmatpush2.msra.mxu0 0.0
        %1744 = vmatprep.subr.mxu0 0.0
        %1745 = vmatpush2.msra.mxu0 0.0
        %1746 = vmatprep.subr.mxu0 0.0
        %1747 = vmatpush2.msra.mxu0 0.0
        %1748 = vmatprep.subr.mxu0 0.0
        %1749 = vmatpush2.msra.mxu0 0.0
        %1750 = vmatprep.subr.mxu0 0.0
        %1751 = vmatpush2.msra.mxu0 0.0
        %1752 = vmatprep.subr.mxu0 0.0
        %1753 = vmatpush2.msra.mxu0 0.0
        %1754 = vmatprep.mubr.f32.mxu0 0.0
        %1755 = vmatmul.mubr.f32.gmra.mxu0 %v1688
        %v1756 = vpop.f32.mrf.mxu0
        %v1757 = vadd.f32 0.0, %v1756
        %v1758 = vpop.f32.mrf.mxu0
        %1759 = vdwg.mxu0
        %v1761 = vsel %vm1553, %v1591, 0
        %1763 = vmatprep.subr.mxu0 0.0
        %1764 = vmatpush1.msra.mxu0 0.0
        %1765 = vmatprep.subr.mxu0 0.0
        %1766 = vmatpush1.msra.mxu0 0.0
        %1767 = vmatprep.subr.mxu0 0.0
        %1768 = vmatpush1.msra.mxu0 0.0
        %1769 = vmatprep.subr.mxu0 0.0
        %1770 = vmatpush1.msra.mxu0 0.0
        %1771 = vmatprep.subr.mxu0 0.0
        %1772 = vmatpush1.msra.mxu0 0.0
        %1773 = vmatprep.subr.mxu0 0.0
        %1774 = vmatpush1.msra.mxu0 0.0
        %1775 = vmatprep.subr.mxu0 0.0
        %1776 = vmatpush1.msra.mxu0 0.0
        %1777 = vmatprep.subr.mxu0 0.0
        %1778 = vmatpush1.msra.mxu0 0.0
        %1779 = vmatprep.subr.mxu0 0.0
        %1780 = vmatpush1.msra.mxu0 0.0
        %1781 = vmatprep.subr.mxu0 0.0
        %1782 = vmatpush1.msra.mxu0 0.0
        %1783 = vmatprep.subr.mxu0 0.0
        %1784 = vmatpush1.msra.mxu0 0.0
        %1785 = vmatprep.subr.mxu0 0.0
        %1786 = vmatpush1.msra.mxu0 0.0
        %1787 = vmatprep.subr.mxu0 0.0
        %1788 = vmatpush1.msra.mxu0 0.0
        %1789 = vmatprep.subr.mxu0 0.0
        %1790 = vmatpush1.msra.mxu0 0.0
        %1791 = vmatprep.subr.mxu0 0.0
        %1792 = vmatpush1.msra.mxu0 0.0
        %1793 = vmatprep.subr.mxu0 0.0
        %1794 = vmatpush1.msra.mxu0 %v1251
        %1795 = vmatprep.subr.mxu0 0.0
        %1796 = vmatpush2.msra.mxu0 0.0
        %1797 = vmatprep.subr.mxu0 0.0
        %1798 = vmatpush2.msra.mxu0 0.0
        %1799 = vmatprep.subr.mxu0 0.0
        %1800 = vmatpush2.msra.mxu0 0.0
        %1801 = vmatprep.subr.mxu0 0.0
        %1802 = vmatpush2.msra.mxu0 0.0
        %1803 = vmatprep.subr.mxu0 0.0
        %1804 = vmatpush2.msra.mxu0 0.0
        %1805 = vmatprep.subr.mxu0 0.0
        %1806 = vmatpush2.msra.mxu0 0.0
        %1807 = vmatprep.subr.mxu0 0.0
        %1808 = vmatpush2.msra.mxu0 0.0
        %1809 = vmatprep.subr.mxu0 0.0
        %1810 = vmatpush2.msra.mxu0 0.0
        %1811 = vmatprep.subr.mxu0 0.0
        %1812 = vmatpush2.msra.mxu0 0.0
        %1813 = vmatprep.subr.mxu0 0.0
        %1814 = vmatpush2.msra.mxu0 0.0
        %1815 = vmatprep.subr.mxu0 0.0
        %1816 = vmatpush2.msra.mxu0 0.0
        %1817 = vmatprep.subr.mxu0 0.0
        %1818 = vmatpush2.msra.mxu0 0.0
        %1819 = vmatprep.subr.mxu0 0.0
        %1820 = vmatpush2.msra.mxu0 0.0
        %1821 = vmatprep.subr.mxu0 0.0
        %1822 = vmatpush2.msra.mxu0 0.0
        %1823 = vmatprep.subr.mxu0 0.0
        %1824 = vmatpush2.msra.mxu0 0.0
        %1825 = vmatprep.subr.mxu0 0.0
        %1826 = vmatpush2.msra.mxu0 0.0
        %1827 = vmatprep.mubr.f32.mxu0 0.0
        %1828 = vmatmul.mubr.f32.gmra.mxu0 %v1761
        %v1829 = vpop.f32.mrf.mxu0
        %v1830 = vadd.f32 0.0, %v1829
        %v1831 = vpop.f32.mrf.mxu0
        %1832 = vdwg.mxu0
        %v1834 = vsel %vm1553, %v1593, 0
        %1836 = vmatprep.subr.mxu0 0.0
        %1837 = vmatpush1.msra.mxu0 0.0
        %1838 = vmatprep.subr.mxu0 0.0
        %1839 = vmatpush1.msra.mxu0 0.0
        %1840 = vmatprep.subr.mxu0 0.0
        %1841 = vmatpush1.msra.mxu0 0.0
        %1842 = vmatprep.subr.mxu0 0.0
        %1843 = vmatpush1.msra.mxu0 0.0
        %1844 = vmatprep.subr.mxu0 0.0
        %1845 = vmatpush1.msra.mxu0 0.0
        %1846 = vmatprep.subr.mxu0 0.0
        %1847 = vmatpush1.msra.mxu0 0.0
        %1848 = vmatprep.subr.mxu0 0.0
        %1849 = vmatpush1.msra.mxu0 0.0
        %1850 = vmatprep.subr.mxu0 0.0
        %1851 = vmatpush1.msra.mxu0 0.0
        %1852 = vmatprep.subr.mxu0 0.0
        %1853 = vmatpush1.msra.mxu0 0.0
        %1854 = vmatprep.subr.mxu0 0.0
        %1855 = vmatpush1.msra.mxu0 0.0
        %1856 = vmatprep.subr.mxu0 0.0
        %1857 = vmatpush1.msra.mxu0 0.0
        %1858 = vmatprep.subr.mxu0 0.0
        %1859 = vmatpush1.msra.mxu0 0.0
        %1860 = vmatprep.subr.mxu0 0.0
        %1861 = vmatpush1.msra.mxu0 0.0
        %1862 = vmatprep.subr.mxu0 0.0
        %1863 = vmatpush1.msra.mxu0 0.0
        %1864 = vmatprep.subr.mxu0 0.0
        %1865 = vmatpush1.msra.mxu0 0.0
        %1866 = vmatprep.subr.mxu0 0.0
        %1867 = vmatpush1.msra.mxu0 %v1253
        %1868 = vmatprep.subr.mxu0 0.0
        %1869 = vmatpush2.msra.mxu0 0.0
        %1870 = vmatprep.subr.mxu0 0.0
        %1871 = vmatpush2.msra.mxu0 0.0
        %1872 = vmatprep.subr.mxu0 0.0
        %1873 = vmatpush2.msra.mxu0 0.0
        %1874 = vmatprep.subr.mxu0 0.0
        %1875 = vmatpush2.msra.mxu0 0.0
        %1876 = vmatprep.subr.mxu0 0.0
        %1877 = vmatpush2.msra.mxu0 0.0
        %1878 = vmatprep.subr.mxu0 0.0
        %1879 = vmatpush2.msra.mxu0 0.0
        %1880 = vmatprep.subr.mxu0 0.0
        %1881 = vmatpush2.msra.mxu0 0.0
        %1882 = vmatprep.subr.mxu0 0.0
        %1883 = vmatpush2.msra.mxu0 0.0
        %1884 = vmatprep.subr.mxu0 0.0
        %1885 = vmatpush2.msra.mxu0 0.0
        %1886 = vmatprep.subr.mxu0 0.0
        %1887 = vmatpush2.msra.mxu0 0.0
        %1888 = vmatprep.subr.mxu0 0.0
        %1889 = vmatpush2.msra.mxu0 0.0
        %1890 = vmatprep.subr.mxu0 0.0
        %1891 = vmatpush2.msra.mxu0 0.0
        %1892 = vmatprep.subr.mxu0 0.0
        %1893 = vmatpush2.msra.mxu0 0.0
        %1894 = vmatprep.subr.mxu0 0.0
        %1895 = vmatpush2.msra.mxu0 0.0
        %1896 = vmatprep.subr.mxu0 0.0
        %1897 = vmatpush2.msra.mxu0 0.0
        %1898 = vmatprep.subr.mxu0 0.0
        %1899 = vmatpush2.msra.mxu0 0.0
        %1900 = vmatprep.mubr.f32.mxu0 0.0
        %1901 = vmatmul.mubr.f32.gmra.mxu0 %v1834
        %v1902 = vpop.f32.mrf.mxu0
        %v1903 = vadd.f32 0.0, %v1902
        %v1904 = vpop.f32.mrf.mxu0
        %1905 = vdwg.mxu0
        %v1906 = vadd.f32 %v1594, %v1684
        %v1907 = vadd.f32 %v1595, %v1757
        %v1908 = vadd.f32 %v1596, %v1830
        %v1909 = vadd.f32 %v1597, %v1903
        %v1910 = vrcp.pop %v1610
        %v1911 = vmul.f32 1.0, %v1910
        %v1912 = vrcp.pop %v1611
        %v1913 = vmul.f32 1.0, %v1912
        %v1914 = vrcp.pop %v1612
        %v1915 = vmul.f32 1.0, %v1914
        %v1916 = vrcp.pop %v1613
        %v1917 = vmul.f32 1.0, %v1916
        %v1918 = vmul.f32 %v1906, %v1911
        %v1919 = vmul.f32 %v1907, %v1913
        %v1920 = vmul.f32 %v1908, %v1915
        %v1921 = vmul.f32 %v1909, %v1917
        %1922 = vst.msk [vmem:[#allocation3] sm:$0xff] %vm1256, %v1918
        %1923 = vst.msk [vmem:[#allocation3 + $0x8] sm:$0xff] %vm1256, %v1919
        %1926 = vrot.lane.b32.xlu0 %v1920, 16
        %v1927 = vpop.permute.xlu0 %1926
        %1928 = vrot.lane.b32.xlu0 %v1921, 16
        %v1929 = vpop.permute.xlu0 %1928
        %vm1932 = vcmask 261248
        %1933 = vst.msk [vmem:[#allocation3] sm:$0xff] %vm1932, %v1927
        %1934 = vst.msk [vmem:[#allocation3 + $0x8] sm:$0xff] %vm1932, %v1929
        %v1935 = vld [vmem:[#allocation3] sm:$0xff]
        %v1936 = vld [vmem:[#allocation3 + $0x8] sm:$0xff]
        %v1937 = vld [vmem:[%s884] sm:$0xff]
        %v1938 = vld [vmem:[%s884 + $0x8] sm:$0xff]
        %v1939 = vld [vmem:[%s884 + $0x10] sm:$0xff]
        %v1940 = vld [vmem:[%s884 + $0x18] sm:$0xff]
        %v1942 = vsel %vm926, %v1935, 0
        %v1945 = vsel %vm926, %v1936, 0
        %1947 = vmatprep.subr.mxu0 0.0
        %1948 = vmatpush1.msra.mxu0 0.0
        %1949 = vmatprep.subr.mxu0 0.0
        %1950 = vmatpush1.msra.mxu0 0.0
        %1951 = vmatprep.subr.mxu0 0.0
        %1952 = vmatpush1.msra.mxu0 0.0
        %1953 = vmatprep.subr.mxu0 0.0
        %1954 = vmatpush1.msra.mxu0 0.0
        %1955 = vmatprep.subr.mxu0 0.0
        %1956 = vmatpush1.msra.mxu0 0.0
        %1957 = vmatprep.subr.mxu0 0.0
        %1958 = vmatpush1.msra.mxu0 0.0
        %1959 = vmatprep.subr.mxu0 0.0
        %1960 = vmatpush1.msra.mxu0 0.0
        %1961 = vmatprep.subr.mxu0 0.0
        %1962 = vmatpush1.msra.mxu0 0.0
        %1963 = vmatprep.subr.mxu0 0.0
        %1964 = vmatpush1.msra.mxu0 0.0
        %1965 = vmatprep.subr.mxu0 0.0
        %1966 = vmatpush1.msra.mxu0 0.0
        %1967 = vmatprep.subr.mxu0 0.0
        %1968 = vmatpush1.msra.mxu0 0.0
        %1969 = vmatprep.subr.mxu0 0.0
        %1970 = vmatpush1.msra.mxu0 0.0
        %1971 = vmatprep.subr.mxu0 0.0
        %1972 = vmatpush1.msra.mxu0 %v1940
        %1973 = vmatprep.subr.mxu0 0.0
        %1974 = vmatpush1.msra.mxu0 %v1939
        %1975 = vmatprep.subr.mxu0 0.0
        %1976 = vmatpush1.msra.mxu0 %v1938
        %1977 = vmatprep.subr.mxu0 0.0
        %1978 = vmatpush1.msra.mxu0 %v1937
        %1979 = vmatprep.subr.mxu0 0.0
        %1980 = vmatpush2.msra.mxu0 0.0
        %1981 = vmatprep.subr.mxu0 0.0
        %1982 = vmatpush2.msra.mxu0 0.0
        %1983 = vmatprep.subr.mxu0 0.0
        %1984 = vmatpush2.msra.mxu0 0.0
        %1985 = vmatprep.subr.mxu0 0.0
        %1986 = vmatpush2.msra.mxu0 0.0
        %1987 = vmatprep.subr.mxu0 0.0
        %1988 = vmatpush2.msra.mxu0 0.0
        %1989 = vmatprep.subr.mxu0 0.0
        %1990 = vmatpush2.msra.mxu0 0.0
        %1991 = vmatprep.subr.mxu0 0.0
        %1992 = vmatpush2.msra.mxu0 0.0
        %1993 = vmatprep.subr.mxu0 0.0
        %1994 = vmatpush2.msra.mxu0 0.0
        %1995 = vmatprep.subr.mxu0 0.0
        %1996 = vmatpush2.msra.mxu0 0.0
        %1997 = vmatprep.subr.mxu0 0.0
        %1998 = vmatpush2.msra.mxu0 0.0
        %1999 = vmatprep.subr.mxu0 0.0
        %2000 = vmatpush2.msra.mxu0 0.0
        %2001 = vmatprep.subr.mxu0 0.0
        %2002 = vmatpush2.msra.mxu0 0.0
        %2003 = vmatprep.subr.mxu0 0.0
        %2004 = vmatpush2.msra.mxu0 0.0
        %2005 = vmatprep.subr.mxu0 0.0
        %2006 = vmatpush2.msra.mxu0 0.0
        %2007 = vmatprep.subr.mxu0 0.0
        %2008 = vmatpush2.msra.mxu0 0.0
        %2009 = vmatprep.subr.mxu0 0.0
        %2010 = vmatpush2.msra.mxu0 0.0
        %2011 = vmatprep.mubr.f32.mxu0 0.0
        %2012 = vmatmul.mubr.f32.gmra.mxu0 %v1942
        %v2013 = vpop.f32.mrf.mxu0
        %v2014 = vadd.f32 0.0, %v2013
        %v2015 = vpop.f32.mrf.mxu0
        %2016 = vmatprep.mubr.f32.mxu0 0.0
        %2017 = vmatmul.mubr.f32.gmra.mxu0 %v1945
        %v2018 = vpop.f32.mrf.mxu0
        %v2019 = vadd.f32 0.0, %v2018
        %v2020 = vpop.f32.mrf.mxu0
        %2021 = vdwg.mxu0
        %v2022 = vadd.f32 %v922, %v2014
        %v2023 = vadd.f32 %v923, %v2019
        %v2024 = vld [vmem:[%s887] sm:$0x1]
        %v2026 = vlaneseq
        %v2027 = vshrl.u32 %v2026, 7
        %v2028 = vsub.s32 0, %v2027
        %v2029 = vrot.slane %v2024, %v2028
        %v2031 = vadd.f32 %v2022, %v2029
        %v2032 = vadd.f32 %v2023, %v2029
        %v2033 = vld [vmem:[%s890] sm:$0x1]
        %v2034 = vld [vmem:[%s893] sm:$0x1]
        %v2035 = vsel %vm926, %v2031, 0.0
        %2036 = vadd.xlane.f32.xlu0 %v2035
        %v2037 = vpop.xlane.xlu0 %2036
        %v2038 = vsel %vm926, %v2032, 0.0
        %2039 = vadd.xlane.f32.xlu0 %v2038
        %v2040 = vpop.xlane.xlu0 %2039
        %v2041 = vmul.f32 %v2037, %v933
        %v2042 = vmul.f32 %v2040, %v933
        %v2043 = vsub.f32 %v2031, %v2041
        %v2044 = vsub.f32 %v2032, %v2042
        %v2045 = vmul.f32 %v2043, %v2043
        %v2046 = vmul.f32 %v2044, %v2044
        %v2047 = vsel %vm926, %v2045, 0.0
        %2048 = vadd.xlane.f32.xlu0 %v2047
        %v2049 = vpop.xlane.xlu0 %2048
        %v2050 = vsel %vm926, %v2046, 0.0
        %2051 = vadd.xlane.f32.xlu0 %v2050
        %v2052 = vpop.xlane.xlu0 %2051
        %v2053 = vmul.f32 %v2049, %v933
        %v2054 = vmul.f32 %v2052, %v933
        %v2055 = vadd.f32 %v2053, 1e-05
        %v2056 = vadd.f32 %v2054, 1e-05
        %v2057 = vrsqrt.pop %v2055
        %v2058 = vrsqrt.pop %v2056
        %v2059 = vmul.f32 %v2043, %v2057
        %v2060 = vmul.f32 %v2044, %v2058
        %v2062 = vlaneseq
        %v2063 = vshrl.u32 %v2062, 7
        %v2064 = vsub.s32 0, %v2063
        %v2065 = vrot.slane %v2033, %v2064
        %v2067 = vmul.f32 %v2059, %v2065
        %v2068 = vmul.f32 %v2060, %v2065
        %v2070 = vlaneseq
        %v2071 = vshrl.u32 %v2070, 7
        %v2072 = vsub.s32 0, %v2071
        %v2073 = vrot.slane %v2034, %v2072
        %v2075 = vadd.f32 %v2067, %v2073
        %v2076 = vadd.f32 %v2068, %v2073
        %v2077 = vld [vmem:[%s898] sm:$0xff]
        %v2078 = vld [vmem:[%s898 + $0x8] sm:$0xff]
        %v2079 = vld [vmem:[%s898 + $0x10] sm:$0xff]
        %v2080 = vld [vmem:[%s898 + $0x18] sm:$0xff]
        %v2081 = vld [vmem:[%s898 + $0x20] sm:$0xff]
        %v2082 = vld [vmem:[%s898 + $0x28] sm:$0xff]
        %v2083 = vld [vmem:[%s898 + $0x30] sm:$0xff]
        %v2084 = vld [vmem:[%s898 + $0x38] sm:$0xff]
        %v2085 = vld [vmem:[%s898 + $0x88] sm:$0xff]
        %v2086 = vld [vmem:[%s898 + $0x90] sm:$0xff]
        %v2087 = vld [vmem:[%s898 + $0x98] sm:$0xff]
        %v2088 = vld [vmem:[%s898 + $0xa0] sm:$0xff]
        %v2089 = vld [vmem:[%s898 + $0xa8] sm:$0xff]
        %v2090 = vld [vmem:[%s898 + $0xb0] sm:$0xff]
        %v2091 = vld [vmem:[%s898 + $0xb8] sm:$0xff]
        %v2092 = vld [vmem:[%s898 + $0xc0] sm:$0xff]
        %v2093 = vld [vmem:[%s898 + $0x110] sm:$0xff]
        %v2094 = vld [vmem:[%s898 + $0x118] sm:$0xff]
        %v2095 = vld [vmem:[%s898 + $0x120] sm:$0xff]
        %v2096 = vld [vmem:[%s898 + $0x128] sm:$0xff]
        %v2097 = vld [vmem:[%s898 + $0x130] sm:$0xff]
        %v2098 = vld [vmem:[%s898 + $0x138] sm:$0xff]
        %v2099 = vld [vmem:[%s898 + $0x140] sm:$0xff]
        %v2100 = vld [vmem:[%s898 + $0x148] sm:$0xff]
        %v2101 = vld [vmem:[%s898 + $0x198] sm:$0xff]
        %v2102 = vld [vmem:[%s898 + $0x1a0] sm:$0xff]
        %v2103 = vld [vmem:[%s898 + $0x1a8] sm:$0xff]
        %v2104 = vld [vmem:[%s898 + $0x1b0] sm:$0xff]
        %v2105 = vld [vmem:[%s898 + $0x1b8] sm:$0xff]
        %v2106 = vld [vmem:[%s898 + $0x1c0] sm:$0xff]
        %v2107 = vld [vmem:[%s898 + $0x1c8] sm:$0xff]
        %v2108 = vld [vmem:[%s898 + $0x1d0] sm:$0xff]
        %v2109 = vld [vmem:[%s902] sm:$0xff]
        %v2111 = vlaneseq
        %v2112 = vshrl.u32 %v2111, 7
        %v2113 = vsub.s32 0, %v2112
        %v2114 = vrot.slane %v2109, %v2113
        %v2115 = vlaneseq
        %v2116 = vshrl.u32 %v2115, 7
        %v2117 = vsub.s32 1, %v2116
        %v2118 = vrot.slane %v2109, %v2117
        %v2119 = vlaneseq
        %v2120 = vshrl.u32 %v2119, 7
        %v2121 = vsub.s32 2, %v2120
        %v2122 = vrot.slane %v2109, %v2121
        %v2123 = vlaneseq
        %v2124 = vshrl.u32 %v2123, 7
        %v2125 = vsub.s32 3, %v2124
        %v2126 = vrot.slane %v2109, %v2125
        %v2127 = vlaneseq
        %v2128 = vshrl.u32 %v2127, 7
        %v2129 = vsub.s32 4, %v2128
        %v2130 = vrot.slane %v2109, %v2129
        %v2131 = vlaneseq
        %v2132 = vshrl.u32 %v2131, 7
        %v2133 = vsub.s32 5, %v2132
        %v2134 = vrot.slane %v2109, %v2133
        %v2135 = vlaneseq
        %v2136 = vshrl.u32 %v2135, 7
        %v2137 = vsub.s32 6, %v2136
        %v2138 = vrot.slane %v2109, %v2137
        %v2139 = vlaneseq
        %v2140 = vshrl.u32 %v2139, 7
        %v2141 = vsub.s32 7, %v2140
        %v2142 = vrot.slane %v2109, %v2141
        %v2152 = vsel %vm926, %v2075, 0
        %v2155 = vsel %vm926, %v2076, 0
        %2157 = vmatprep.subr.mxu0 0.0
        %2158 = vmatpush1.msra.mxu0 0.0
        %2159 = vmatprep.subr.mxu0 0.0
        %2160 = vmatpush1.msra.mxu0 0.0
        %2161 = vmatprep.subr.mxu0 0.0
        %2162 = vmatpush1.msra.mxu0 0.0
        %2163 = vmatprep.subr.mxu0 0.0
        %2164 = vmatpush1.msra.mxu0 0.0
        %2165 = vmatprep.subr.mxu0 0.0
        %2166 = vmatpush1.msra.mxu0 0.0
        %2167 = vmatprep.subr.mxu0 0.0
        %2168 = vmatpush1.msra.mxu0 0.0
        %2169 = vmatprep.subr.mxu0 0.0
        %2170 = vmatpush1.msra.mxu0 0.0
        %2171 = vmatprep.subr.mxu0 0.0
        %2172 = vmatpush1.msra.mxu0 0.0
        %2173 = vmatprep.subr.mxu0 0.0
        %2174 = vmatpush1.msra.mxu0 0.0
        %2175 = vmatprep.subr.mxu0 0.0
        %2176 = vmatpush1.msra.mxu0 0.0
        %2177 = vmatprep.subr.mxu0 0.0
        %2178 = vmatpush1.msra.mxu0 0.0
        %2179 = vmatprep.subr.mxu0 0.0
        %2180 = vmatpush1.msra.mxu0 0.0
        %2181 = vmatprep.subr.mxu0 %v2102
        %2182 = vmatpush1.msra.mxu0 %v2101
        %2183 = vmatprep.subr.mxu0 %v2094
        %2184 = vmatpush1.msra.mxu0 %v2093
        %2185 = vmatprep.subr.mxu0 %v2086
        %2186 = vmatpush1.msra.mxu0 %v2085
        %2187 = vmatprep.subr.mxu0 %v2078
        %2188 = vmatpush1.msra.mxu0 %v2077
        %2189 = vmatprep.subr.mxu0 0.0
        %2190 = vmatpush2.msra.mxu0 0.0
        %2191 = vmatprep.subr.mxu0 0.0
        %2192 = vmatpush2.msra.mxu0 0.0
        %2193 = vmatprep.subr.mxu0 0.0
        %2194 = vmatpush2.msra.mxu0 0.0
        %2195 = vmatprep.subr.mxu0 0.0
        %2196 = vmatpush2.msra.mxu0 0.0
        %2197 = vmatprep.subr.mxu0 0.0
        %2198 = vmatpush2.msra.mxu0 0.0
        %2199 = vmatprep.subr.mxu0 0.0
        %2200 = vmatpush2.msra.mxu0 0.0
        %2201 = vmatprep.subr.mxu0 0.0
        %2202 = vmatpush2.msra.mxu0 0.0
        %2203 = vmatprep.subr.mxu0 0.0
        %2204 = vmatpush2.msra.mxu0 0.0
        %2205 = vmatprep.subr.mxu0 0.0
        %2206 = vmatpush2.msra.mxu0 0.0
        %2207 = vmatprep.subr.mxu0 0.0
        %2208 = vmatpush2.msra.mxu0 0.0
        %2209 = vmatprep.subr.mxu0 0.0
        %2210 = vmatpush2.msra.mxu0 0.0
        %2211 = vmatprep.subr.mxu0 0.0
        %2212 = vmatpush2.msra.mxu0 0.0
        %2213 = vmatprep.subr.mxu0 0.0
        %2214 = vmatpush2.msra.mxu0 0.0
        %2215 = vmatprep.subr.mxu0 0.0
        %2216 = vmatpush2.msra.mxu0 0.0
        %2217 = vmatprep.subr.mxu0 0.0
        %2218 = vmatpush2.msra.mxu0 0.0
        %2219 = vmatprep.subr.mxu0 0.0
        %2220 = vmatpush2.msra.mxu0 0.0
        %2221 = vmatprep.mubr.f32.mxu0 0.0
        %2222 = vmatmul.mubr.f32.gmra.mxu0 %v2152
        %v2223 = vpop.f32.mrf.mxu0
        %v2224 = vadd.f32 %v2114, %v2223
        %v2225 = vpop.f32.mrf.mxu0
        %v2226 = vadd.f32 %v2118, %v2225
        %2227 = vmatprep.mubr.f32.mxu0 0.0
        %2228 = vmatmul.mubr.f32.gmra.mxu0 %v2155
        %v2229 = vpop.f32.mrf.mxu0
        %v2230 = vadd.f32 %v2114, %v2229
        %v2231 = vpop.f32.mrf.mxu0
        %v2232 = vadd.f32 %v2118, %v2231
        %2233 = vdwg.mxu0
        %2234 = vmatprep.subr.mxu0 0.0
        %2235 = vmatpush1.msra.mxu0 0.0
        %2236 = vmatprep.subr.mxu0 0.0
        %2237 = vmatpush1.msra.mxu0 0.0
        %2238 = vmatprep.subr.mxu0 0.0
        %2239 = vmatpush1.msra.mxu0 0.0
        %2240 = vmatprep.subr.mxu0 0.0
        %2241 = vmatpush1.msra.mxu0 0.0
        %2242 = vmatprep.subr.mxu0 0.0
        %2243 = vmatpush1.msra.mxu0 0.0
        %2244 = vmatprep.subr.mxu0 0.0
        %2245 = vmatpush1.msra.mxu0 0.0
        %2246 = vmatprep.subr.mxu0 0.0
        %2247 = vmatpush1.msra.mxu0 0.0
        %2248 = vmatprep.subr.mxu0 0.0
        %2249 = vmatpush1.msra.mxu0 0.0
        %2250 = vmatprep.subr.mxu0 0.0
        %2251 = vmatpush1.msra.mxu0 0.0
        %2252 = vmatprep.subr.mxu0 0.0
        %2253 = vmatpush1.msra.mxu0 0.0
        %2254 = vmatprep.subr.mxu0 0.0
        %2255 = vmatpush1.msra.mxu0 0.0
        %2256 = vmatprep.subr.mxu0 0.0
        %2257 = vmatpush1.msra.mxu0 0.0
        %2258 = vmatprep.subr.mxu0 %v2104
        %2259 = vmatpush1.msra.mxu0 %v2103
        %2260 = vmatprep.subr.mxu0 %v2096
        %2261 = vmatpush1.msra.mxu0 %v2095
        %2262 = vmatprep.subr.mxu0 %v2088
        %2263 = vmatpush1.msra.mxu0 %v2087
        %2264 = vmatprep.subr.mxu0 %v2080
        %2265 = vmatpush1.msra.mxu0 %v2079
        %2266 = vmatprep.subr.mxu0 0.0
        %2267 = vmatpush2.msra.mxu0 0.0
        %2268 = vmatprep.subr.mxu0 0.0
        %2269 = vmatpush2.msra.mxu0 0.0
        %2270 = vmatprep.subr.mxu0 0.0
        %2271 = vmatpush2.msra.mxu0 0.0
        %2272 = vmatprep.subr.mxu0 0.0
        %2273 = vmatpush2.msra.mxu0 0.0
        %2274 = vmatprep.subr.mxu0 0.0
        %2275 = vmatpush2.msra.mxu0 0.0
        %2276 = vmatprep.subr.mxu0 0.0
        %2277 = vmatpush2.msra.mxu0 0.0
        %2278 = vmatprep.subr.mxu0 0.0
        %2279 = vmatpush2.msra.mxu0 0.0
        %2280 = vmatprep.subr.mxu0 0.0
        %2281 = vmatpush2.msra.mxu0 0.0
        %2282 = vmatprep.subr.mxu0 0.0
        %2283 = vmatpush2.msra.mxu0 0.0
        %2284 = vmatprep.subr.mxu0 0.0
        %2285 = vmatpush2.msra.mxu0 0.0
        %2286 = vmatprep.subr.mxu0 0.0
        %2287 = vmatpush2.msra.mxu0 0.0
        %2288 = vmatprep.subr.mxu0 0.0
        %2289 = vmatpush2.msra.mxu0 0.0
        %2290 = vmatprep.subr.mxu0 0.0
        %2291 = vmatpush2.msra.mxu0 0.0
        %2292 = vmatprep.subr.mxu0 0.0
        %2293 = vmatpush2.msra.mxu0 0.0
        %2294 = vmatprep.subr.mxu0 0.0
        %2295 = vmatpush2.msra.mxu0 0.0
        %2296 = vmatprep.subr.mxu0 0.0
        %2297 = vmatpush2.msra.mxu0 0.0
        %2298 = vmatprep.mubr.f32.mxu0 0.0
        %2299 = vmatmul.mubr.f32.gmra.mxu0 %v2152
        %v2300 = vpop.f32.mrf.mxu0
        %v2301 = vadd.f32 %v2122, %v2300
        %v2302 = vpop.f32.mrf.mxu0
        %v2303 = vadd.f32 %v2126, %v2302
        %2304 = vmatprep.mubr.f32.mxu0 0.0
        %2305 = vmatmul.mubr.f32.gmra.mxu0 %v2155
        %v2306 = vpop.f32.mrf.mxu0
        %v2307 = vadd.f32 %v2122, %v2306
        %v2308 = vpop.f32.mrf.mxu0
        %v2309 = vadd.f32 %v2126, %v2308
        %2310 = vdwg.mxu0
        %2311 = vmatprep.subr.mxu0 0.0
        %2312 = vmatpush1.msra.mxu0 0.0
        %2313 = vmatprep.subr.mxu0 0.0
        %2314 = vmatpush1.msra.mxu0 0.0
        %2315 = vmatprep.subr.mxu0 0.0
        %2316 = vmatpush1.msra.mxu0 0.0
        %2317 = vmatprep.subr.mxu0 0.0
        %2318 = vmatpush1.msra.mxu0 0.0
        %2319 = vmatprep.subr.mxu0 0.0
        %2320 = vmatpush1.msra.mxu0 0.0
        %2321 = vmatprep.subr.mxu0 0.0
        %2322 = vmatpush1.msra.mxu0 0.0
        %2323 = vmatprep.subr.mxu0 0.0
        %2324 = vmatpush1.msra.mxu0 0.0
        %2325 = vmatprep.subr.mxu0 0.0
        %2326 = vmatpush1.msra.mxu0 0.0
        %2327 = vmatprep.subr.mxu0 0.0
        %2328 = vmatpush1.msra.mxu0 0.0
        %2329 = vmatprep.subr.mxu0 0.0
        %2330 = vmatpush1.msra.mxu0 0.0
        %2331 = vmatprep.subr.mxu0 0.0
        %2332 = vmatpush1.msra.mxu0 0.0
        %2333 = vmatprep.subr.mxu0 0.0
        %2334 = vmatpush1.msra.mxu0 0.0
        %2335 = vmatprep.subr.mxu0 %v2106
        %2336 = vmatpush1.msra.mxu0 %v2105
        %2337 = vmatprep.subr.mxu0 %v2098
        %2338 = vmatpush1.msra.mxu0 %v2097
        %2339 = vmatprep.subr.mxu0 %v2090
        %2340 = vmatpush1.msra.mxu0 %v2089
        %2341 = vmatprep.subr.mxu0 %v2082
        %2342 = vmatpush1.msra.mxu0 %v2081
        %2343 = vmatprep.subr.mxu0 0.0
        %2344 = vmatpush2.msra.mxu0 0.0
        %2345 = vmatprep.subr.mxu0 0.0
        %2346 = vmatpush2.msra.mxu0 0.0
        %2347 = vmatprep.subr.mxu0 0.0
        %2348 = vmatpush2.msra.mxu0 0.0
        %2349 = vmatprep.subr.mxu0 0.0
        %2350 = vmatpush2.msra.mxu0 0.0
        %2351 = vmatprep.subr.mxu0 0.0
        %2352 = vmatpush2.msra.mxu0 0.0
        %2353 = vmatprep.subr.mxu0 0.0
        %2354 = vmatpush2.msra.mxu0 0.0
        %2355 = vmatprep.subr.mxu0 0.0
        %2356 = vmatpush2.msra.mxu0 0.0
        %2357 = vmatprep.subr.mxu0 0.0
        %2358 = vmatpush2.msra.mxu0 0.0
        %2359 = vmatprep.subr.mxu0 0.0
        %2360 = vmatpush2.msra.mxu0 0.0
        %2361 = vmatprep.subr.mxu0 0.0
        %2362 = vmatpush2.msra.mxu0 0.0
        %2363 = vmatprep.subr.mxu0 0.0
        %2364 = vmatpush2.msra.mxu0 0.0
        %2365 = vmatprep.subr.mxu0 0.0
        %2366 = vmatpush2.msra.mxu0 0.0
        %2367 = vmatprep.subr.mxu0 0.0
        %2368 = vmatpush2.msra.mxu0 0.0
        %2369 = vmatprep.subr.mxu0 0.0
        %2370 = vmatpush2.msra.mxu0 0.0
        %2371 = vmatprep.subr.mxu0 0.0
        %2372 = vmatpush2.msra.mxu0 0.0
        %2373 = vmatprep.subr.mxu0 0.0
        %2374 = vmatpush2.msra.mxu0 0.0
        %2375 = vmatprep.mubr.f32.mxu0 0.0
        %2376 = vmatmul.mubr.f32.gmra.mxu0 %v2152
        %v2377 = vpop.f32.mrf.mxu0
        %v2378 = vadd.f32 %v2130, %v2377
        %v2379 = vpop.f32.mrf.mxu0
        %v2380 = vadd.f32 %v2134, %v2379
        %2381 = vmatprep.mubr.f32.mxu0 0.0
        %2382 = vmatmul.mubr.f32.gmra.mxu0 %v2155
        %v2383 = vpop.f32.mrf.mxu0
        %v2384 = vadd.f32 %v2130, %v2383
        %v2385 = vpop.f32.mrf.mxu0
        %v2386 = vadd.f32 %v2134, %v2385
        %2387 = vdwg.mxu0
        %2388 = vmatprep.subr.mxu0 0.0
        %2389 = vmatpush1.msra.mxu0 0.0
        %2390 = vmatprep.subr.mxu0 0.0
        %2391 = vmatpush1.msra.mxu0 0.0
        %2392 = vmatprep.subr.mxu0 0.0
        %2393 = vmatpush1.msra.mxu0 0.0
        %2394 = vmatprep.subr.mxu0 0.0
        %2395 = vmatpush1.msra.mxu0 0.0
        %2396 = vmatprep.subr.mxu0 0.0
        %2397 = vmatpush1.msra.mxu0 0.0
        %2398 = vmatprep.subr.mxu0 0.0
        %2399 = vmatpush1.msra.mxu0 0.0
        %2400 = vmatprep.subr.mxu0 0.0
        %2401 = vmatpush1.msra.mxu0 0.0
        %2402 = vmatprep.subr.mxu0 0.0
        %2403 = vmatpush1.msra.mxu0 0.0
        %2404 = vmatprep.subr.mxu0 0.0
        %2405 = vmatpush1.msra.mxu0 0.0
        %2406 = vmatprep.subr.mxu0 0.0
        %2407 = vmatpush1.msra.mxu0 0.0
        %2408 = vmatprep.subr.mxu0 0.0
        %2409 = vmatpush1.msra.mxu0 0.0
        %2410 = vmatprep.subr.mxu0 0.0
        %2411 = vmatpush1.msra.mxu0 0.0
        %2412 = vmatprep.subr.mxu0 %v2108
        %2413 = vmatpush1.msra.mxu0 %v2107
        %2414 = vmatprep.subr.mxu0 %v2100
        %2415 = vmatpush1.msra.mxu0 %v2099
        %2416 = vmatprep.subr.mxu0 %v2092
        %2417 = vmatpush1.msra.mxu0 %v2091
        %2418 = vmatprep.subr.mxu0 %v2084
        %2419 = vmatpush1.msra.mxu0 %v2083
        %2420 = vmatprep.subr.mxu0 0.0
        %2421 = vmatpush2.msra.mxu0 0.0
        %2422 = vmatprep.subr.mxu0 0.0
        %2423 = vmatpush2.msra.mxu0 0.0
        %2424 = vmatprep.subr.mxu0 0.0
        %2425 = vmatpush2.msra.mxu0 0.0
        %2426 = vmatprep.subr.mxu0 0.0
        %2427 = vmatpush2.msra.mxu0 0.0
        %2428 = vmatprep.subr.mxu0 0.0
        %2429 = vmatpush2.msra.mxu0 0.0
        %2430 = vmatprep.subr.mxu0 0.0
        %2431 = vmatpush2.msra.mxu0 0.0
        %2432 = vmatprep.subr.mxu0 0.0
        %2433 = vmatpush2.msra.mxu0 0.0
        %2434 = vmatprep.subr.mxu0 0.0
        %2435 = vmatpush2.msra.mxu0 0.0
        %2436 = vmatprep.subr.mxu0 0.0
        %2437 = vmatpush2.msra.mxu0 0.0
        %2438 = vmatprep.subr.mxu0 0.0
        %2439 = vmatpush2.msra.mxu0 0.0
        %2440 = vmatprep.subr.mxu0 0.0
        %2441 = vmatpush2.msra.mxu0 0.0
        %2442 = vmatprep.subr.mxu0 0.0
        %2443 = vmatpush2.msra.mxu0 0.0
        %2444 = vmatprep.subr.mxu0 0.0
        %2445 = vmatpush2.msra.mxu0 0.0
        %2446 = vmatprep.subr.mxu0 0.0
        %2447 = vmatpush2.msra.mxu0 0.0
        %2448 = vmatprep.subr.mxu0 0.0
        %2449 = vmatpush2.msra.mxu0 0.0
        %2450 = vmatprep.subr.mxu0 0.0
        %2451 = vmatpush2.msra.mxu0 0.0
        %2452 = vmatprep.mubr.f32.mxu0 0.0
        %2453 = vmatmul.mubr.f32.gmra.mxu0 %v2152
        %v2454 = vpop.f32.mrf.mxu0
        %v2455 = vadd.f32 %v2138, %v2454
        %v2456 = vpop.f32.mrf.mxu0
        %v2457 = vadd.f32 %v2142, %v2456
        %2458 = vmatprep.mubr.f32.mxu0 0.0
        %2459 = vmatmul.mubr.f32.gmra.mxu0 %v2155
        %v2460 = vpop.f32.mrf.mxu0
        %v2461 = vadd.f32 %v2138, %v2460
        %v2462 = vpop.f32.mrf.mxu0
        %v2463 = vadd.f32 %v2142, %v2462
        %2464 = vdwg.mxu0
        %v2465 = vmax.f32 %v2224, 0.0
        %v2466 = vmax.f32 %v2226, 0.0
        %v2467 = vmax.f32 %v2301, 0.0
        %v2468 = vmax.f32 %v2303, 0.0
        %v2469 = vmax.f32 %v2378, 0.0
        %v2470 = vmax.f32 %v2380, 0.0
        %v2471 = vmax.f32 %v2455, 0.0
        %v2472 = vmax.f32 %v2457, 0.0
        %v2473 = vmax.f32 %v2230, 0.0
        %v2474 = vmax.f32 %v2232, 0.0
        %v2475 = vmax.f32 %v2307, 0.0
        %v2476 = vmax.f32 %v2309, 0.0
        %v2477 = vmax.f32 %v2384, 0.0
        %v2478 = vmax.f32 %v2386, 0.0
        %v2479 = vmax.f32 %v2461, 0.0
        %v2480 = vmax.f32 %v2463, 0.0
        %v2481 = vld [vmem:[%s907] sm:$0xff]
        %v2482 = vld [vmem:[%s907 + $0x8] sm:$0xff]
        %v2483 = vld [vmem:[%s907 + $0x10] sm:$0xff]
        %v2484 = vld [vmem:[%s907 + $0x18] sm:$0xff]
        %v2485 = vld [vmem:[%s907 + $0x20] sm:$0xff]
        %v2486 = vld [vmem:[%s907 + $0x28] sm:$0xff]
        %v2487 = vld [vmem:[%s907 + $0x30] sm:$0xff]
        %v2488 = vld [vmem:[%s907 + $0x38] sm:$0xff]
        %v2489 = vld [vmem:[%s907 + $0x40] sm:$0xff]
        %v2490 = vld [vmem:[%s907 + $0x48] sm:$0xff]
        %v2491 = vld [vmem:[%s907 + $0x50] sm:$0xff]
        %v2492 = vld [vmem:[%s907 + $0x58] sm:$0xff]
        %v2493 = vld [vmem:[%s907 + $0x60] sm:$0xff]
        %v2494 = vld [vmem:[%s907 + $0x68] sm:$0xff]
        %v2495 = vld [vmem:[%s907 + $0x70] sm:$0xff]
        %v2496 = vld [vmem:[%s907 + $0x78] sm:$0xff]
        %v2497 = vld [vmem:[%s907 + $0x80] sm:$0xff]
        %v2498 = vld [vmem:[%s907 + $0x88] sm:$0xff]
        %v2499 = vld [vmem:[%s907 + $0x90] sm:$0xff]
        %v2500 = vld [vmem:[%s907 + $0x98] sm:$0xff]
        %v2501 = vld [vmem:[%s907 + $0xa0] sm:$0xff]
        %v2502 = vld [vmem:[%s907 + $0xa8] sm:$0xff]
        %v2503 = vld [vmem:[%s907 + $0xb0] sm:$0xff]
        %v2504 = vld [vmem:[%s907 + $0xb8] sm:$0xff]
        %v2505 = vld [vmem:[%s907 + $0xc0] sm:$0xff]
        %v2506 = vld [vmem:[%s907 + $0xc8] sm:$0xff]
        %v2507 = vld [vmem:[%s907 + $0xd0] sm:$0xff]
        %v2508 = vld [vmem:[%s907 + $0xd8] sm:$0xff]
        %v2509 = vld [vmem:[%s907 + $0xe0] sm:$0xff]
        %v2510 = vld [vmem:[%s907 + $0xe8] sm:$0xff]
        %v2511 = vld [vmem:[%s907 + $0xf0] sm:$0xff]
        %v2512 = vld [vmem:[%s907 + $0xf8] sm:$0xff]
        %v2513 = vld [vmem:[%s907 + $0x100] sm:$0xff]
        %v2514 = vld [vmem:[%s907 + $0x108] sm:$0xff]
        %v2515 = vld [vmem:[%s907 + $0x110] sm:$0xff]
        %v2516 = vld [vmem:[%s907 + $0x118] sm:$0xff]
        %v2517 = vld [vmem:[%s907 + $0x120] sm:$0xff]
        %v2518 = vld [vmem:[%s907 + $0x128] sm:$0xff]
        %v2519 = vld [vmem:[%s907 + $0x130] sm:$0xff]
        %v2520 = vld [vmem:[%s907 + $0x138] sm:$0xff]
        %v2521 = vld [vmem:[%s907 + $0x140] sm:$0xff]
        %v2522 = vld [vmem:[%s907 + $0x148] sm:$0xff]
        %v2523 = vld [vmem:[%s907 + $0x150] sm:$0xff]
        %v2524 = vld [vmem:[%s907 + $0x158] sm:$0xff]
        %v2525 = vld [vmem:[%s907 + $0x160] sm:$0xff]
        %v2526 = vld [vmem:[%s907 + $0x168] sm:$0xff]
        %v2527 = vld [vmem:[%s907 + $0x170] sm:$0xff]
        %v2528 = vld [vmem:[%s907 + $0x178] sm:$0xff]
        %v2529 = vld [vmem:[%s907 + $0x180] sm:$0xff]
        %v2530 = vld [vmem:[%s907 + $0x188] sm:$0xff]
        %v2531 = vld [vmem:[%s907 + $0x190] sm:$0xff]
        %v2532 = vld [vmem:[%s907 + $0x198] sm:$0xff]
        %v2533 = vld [vmem:[%s907 + $0x1a0] sm:$0xff]
        %v2534 = vld [vmem:[%s907 + $0x1a8] sm:$0xff]
        %v2535 = vld [vmem:[%s907 + $0x1b0] sm:$0xff]
        %v2536 = vld [vmem:[%s907 + $0x1b8] sm:$0xff]
        %v2537 = vld [vmem:[%s907 + $0x1c0] sm:$0xff]
        %v2538 = vld [vmem:[%s907 + $0x1c8] sm:$0xff]
        %v2539 = vld [vmem:[%s907 + $0x1d0] sm:$0xff]
        %v2540 = vld [vmem:[%s907 + $0x1d8] sm:$0xff]
        %v2541 = vld [vmem:[%s907 + $0x1e0] sm:$0xff]
        %v2542 = vld [vmem:[%s907 + $0x1e8] sm:$0xff]
        %v2543 = vld [vmem:[%s907 + $0x1f0] sm:$0xff]
        %v2544 = vld [vmem:[%s907 + $0x1f8] sm:$0xff]
        %v2545 = vld [vmem:[%s907 + $0x200] sm:$0xff]
        %v2546 = vld [vmem:[%s907 + $0x208] sm:$0xff]
        %v2547 = vld [vmem:[%s907 + $0x210] sm:$0xff]
        %v2548 = vld [vmem:[%s907 + $0x218] sm:$0xff]
        %v2549 = vld [vmem:[%s907 + $0x220] sm:$0xff]
        %v2550 = vld [vmem:[%s907 + $0x228] sm:$0xff]
        %v2551 = vld [vmem:[%s907 + $0x230] sm:$0xff]
        %v2552 = vld [vmem:[%s907 + $0x238] sm:$0xff]
        %v2553 = vld [vmem:[%s907 + $0x240] sm:$0xff]
        %v2554 = vld [vmem:[%s907 + $0x248] sm:$0xff]
        %v2555 = vld [vmem:[%s907 + $0x250] sm:$0xff]
        %v2556 = vld [vmem:[%s907 + $0x258] sm:$0xff]
        %v2557 = vld [vmem:[%s907 + $0x260] sm:$0xff]
        %v2558 = vld [vmem:[%s907 + $0x268] sm:$0xff]
        %v2559 = vld [vmem:[%s907 + $0x270] sm:$0xff]
        %v2560 = vld [vmem:[%s907 + $0x278] sm:$0xff]
        %v2561 = vld [vmem:[%s907 + $0x280] sm:$0xff]
        %v2562 = vld [vmem:[%s907 + $0x288] sm:$0xff]
        %v2563 = vld [vmem:[%s907 + $0x290] sm:$0xff]
        %v2564 = vld [vmem:[%s907 + $0x298] sm:$0xff]
        %v2565 = vld [vmem:[%s907 + $0x2a0] sm:$0xff]
        %v2566 = vld [vmem:[%s907 + $0x2a8] sm:$0xff]
        %v2567 = vld [vmem:[%s907 + $0x2b0] sm:$0xff]
        %v2568 = vld [vmem:[%s907 + $0x2b8] sm:$0xff]
        %v2569 = vld [vmem:[%s907 + $0x2c0] sm:$0xff]
        %v2570 = vld [vmem:[%s907 + $0x2c8] sm:$0xff]
        %v2571 = vld [vmem:[%s907 + $0x2d0] sm:$0xff]
        %v2572 = vld [vmem:[%s907 + $0x2d8] sm:$0xff]
        %v2573 = vld [vmem:[%s907 + $0x2e0] sm:$0xff]
        %v2574 = vld [vmem:[%s907 + $0x2e8] sm:$0xff]
        %v2575 = vld [vmem:[%s907 + $0x2f0] sm:$0xff]
        %v2576 = vld [vmem:[%s907 + $0x2f8] sm:$0xff]
        %v2577 = vld [vmem:[%s907 + $0x300] sm:$0xff]
        %v2578 = vld [vmem:[%s907 + $0x308] sm:$0xff]
        %v2579 = vld [vmem:[%s907 + $0x310] sm:$0xff]
        %v2580 = vld [vmem:[%s907 + $0x318] sm:$0xff]
        %v2581 = vld [vmem:[%s907 + $0x320] sm:$0xff]
        %v2582 = vld [vmem:[%s907 + $0x328] sm:$0xff]
        %v2583 = vld [vmem:[%s907 + $0x330] sm:$0xff]
        %v2584 = vld [vmem:[%s907 + $0x338] sm:$0xff]
        %v2585 = vld [vmem:[%s907 + $0x340] sm:$0xff]
        %v2586 = vld [vmem:[%s907 + $0x348] sm:$0xff]
        %v2587 = vld [vmem:[%s907 + $0x350] sm:$0xff]
        %v2588 = vld [vmem:[%s907 + $0x358] sm:$0xff]
        %v2589 = vld [vmem:[%s907 + $0x360] sm:$0xff]
        %v2590 = vld [vmem:[%s907 + $0x368] sm:$0xff]
        %v2591 = vld [vmem:[%s907 + $0x370] sm:$0xff]
        %v2592 = vld [vmem:[%s907 + $0x378] sm:$0xff]
        %v2593 = vld [vmem:[%s907 + $0x380] sm:$0xff]
        %v2594 = vld [vmem:[%s907 + $0x388] sm:$0xff]
        %v2595 = vld [vmem:[%s907 + $0x390] sm:$0xff]
        %v2596 = vld [vmem:[%s907 + $0x398] sm:$0xff]
        %v2597 = vld [vmem:[%s907 + $0x3a0] sm:$0xff]
        %v2598 = vld [vmem:[%s907 + $0x3a8] sm:$0xff]
        %v2599 = vld [vmem:[%s907 + $0x3b0] sm:$0xff]
        %v2600 = vld [vmem:[%s907 + $0x3b8] sm:$0xff]
        %v2601 = vld [vmem:[%s907 + $0x3c0] sm:$0xff]
        %v2602 = vld [vmem:[%s907 + $0x3c8] sm:$0xff]
        %v2603 = vld [vmem:[%s907 + $0x3d0] sm:$0xff]
        %v2604 = vld [vmem:[%s907 + $0x3d8] sm:$0xff]
        %v2605 = vld [vmem:[%s907 + $0x3e0] sm:$0xff]
        %v2606 = vld [vmem:[%s907 + $0x3e8] sm:$0xff]
        %v2607 = vld [vmem:[%s907 + $0x3f0] sm:$0xff]
        %v2608 = vld [vmem:[%s907 + $0x3f8] sm:$0xff]
        %v2609 = vld [vmem:[%s898 + $0x40] sm:$0xff]
        %v2610 = vld [vmem:[%s898 + $0x48] sm:$0xff]
        %v2611 = vld [vmem:[%s898 + $0x50] sm:$0xff]
        %v2612 = vld [vmem:[%s898 + $0x58] sm:$0xff]
        %v2613 = vld [vmem:[%s898 + $0x60] sm:$0xff]
        %v2614 = vld [vmem:[%s898 + $0x68] sm:$0xff]
        %v2615 = vld [vmem:[%s898 + $0x70] sm:$0xff]
        %v2616 = vld [vmem:[%s898 + $0x78] sm:$0xff]
        %v2617 = vld [vmem:[%s898 + $0xc8] sm:$0xff]
        %v2618 = vld [vmem:[%s898 + $0xd0] sm:$0xff]
        %v2619 = vld [vmem:[%s898 + $0xd8] sm:$0xff]
        %v2620 = vld [vmem:[%s898 + $0xe0] sm:$0xff]
        %v2621 = vld [vmem:[%s898 + $0xe8] sm:$0xff]
        %v2622 = vld [vmem:[%s898 + $0xf0] sm:$0xff]
        %v2623 = vld [vmem:[%s898 + $0xf8] sm:$0xff]
        %v2624 = vld [vmem:[%s898 + $0x100] sm:$0xff]
        %v2625 = vld [vmem:[%s898 + $0x150] sm:$0xff]
        %v2626 = vld [vmem:[%s898 + $0x158] sm:$0xff]
        %v2627 = vld [vmem:[%s898 + $0x160] sm:$0xff]
        %v2628 = vld [vmem:[%s898 + $0x168] sm:$0xff]
        %v2629 = vld [vmem:[%s898 + $0x170] sm:$0xff]
        %v2630 = vld [vmem:[%s898 + $0x178] sm:$0xff]
        %v2631 = vld [vmem:[%s898 + $0x180] sm:$0xff]
        %v2632 = vld [vmem:[%s898 + $0x188] sm:$0xff]
        %v2633 = vld [vmem:[%s898 + $0x1d8] sm:$0xff]
        %v2634 = vld [vmem:[%s898 + $0x1e0] sm:$0xff]
        %v2635 = vld [vmem:[%s898 + $0x1e8] sm:$0xff]
        %v2636 = vld [vmem:[%s898 + $0x1f0] sm:$0xff]
        %v2637 = vld [vmem:[%s898 + $0x1f8] sm:$0xff]
        %v2638 = vld [vmem:[%s898 + $0x200] sm:$0xff]
        %v2639 = vld [vmem:[%s898 + $0x208] sm:$0xff]
        %v2640 = vld [vmem:[%s898 + $0x210] sm:$0xff]
        %v2641 = vld [vmem:[%s902 + $0x8] sm:$0xff]
        %v2643 = vlaneseq
        %v2644 = vshrl.u32 %v2643, 7
        %v2645 = vsub.s32 0, %v2644
        %v2646 = vrot.slane %v2641, %v2645
        %v2647 = vlaneseq
        %v2648 = vshrl.u32 %v2647, 7
        %v2649 = vsub.s32 1, %v2648
        %v2650 = vrot.slane %v2641, %v2649
        %v2651 = vlaneseq
        %v2652 = vshrl.u32 %v2651, 7
        %v2653 = vsub.s32 2, %v2652
        %v2654 = vrot.slane %v2641, %v2653
        %v2655 = vlaneseq
        %v2656 = vshrl.u32 %v2655, 7
        %v2657 = vsub.s32 3, %v2656
        %v2658 = vrot.slane %v2641, %v2657
        %v2659 = vlaneseq
        %v2660 = vshrl.u32 %v2659, 7
        %v2661 = vsub.s32 4, %v2660
        %v2662 = vrot.slane %v2641, %v2661
        %v2663 = vlaneseq
        %v2664 = vshrl.u32 %v2663, 7
        %v2665 = vsub.s32 5, %v2664
        %v2666 = vrot.slane %v2641, %v2665
        %v2667 = vlaneseq
        %v2668 = vshrl.u32 %v2667, 7
        %v2669 = vsub.s32 6, %v2668
        %v2670 = vrot.slane %v2641, %v2669
        %v2671 = vlaneseq
        %v2672 = vshrl.u32 %v2671, 7
        %v2673 = vsub.s32 7, %v2672
        %v2674 = vrot.slane %v2641, %v2673
        %2683 = vmatprep.subr.mxu0 0.0
        %2684 = vmatpush1.msra.mxu0 0.0
        %2685 = vmatprep.subr.mxu0 0.0
        %2686 = vmatpush1.msra.mxu0 0.0
        %2687 = vmatprep.subr.mxu0 0.0
        %2688 = vmatpush1.msra.mxu0 0.0
        %2689 = vmatprep.subr.mxu0 0.0
        %2690 = vmatpush1.msra.mxu0 0.0
        %2691 = vmatprep.subr.mxu0 0.0
        %2692 = vmatpush1.msra.mxu0 0.0
        %2693 = vmatprep.subr.mxu0 0.0
        %2694 = vmatpush1.msra.mxu0 0.0
        %2695 = vmatprep.subr.mxu0 0.0
        %2696 = vmatpush1.msra.mxu0 0.0
        %2697 = vmatprep.subr.mxu0 0.0
        %2698 = vmatpush1.msra.mxu0 0.0
        %2699 = vmatprep.subr.mxu0 0.0
        %2700 = vmatpush1.msra.mxu0 0.0
        %2701 = vmatprep.subr.mxu0 0.0
        %2702 = vmatpush1.msra.mxu0 0.0
        %2703 = vmatprep.subr.mxu0 0.0
        %2704 = vmatpush1.msra.mxu0 0.0
        %2705 = vmatprep.subr.mxu0 0.0
        %2706 = vmatpush1.msra.mxu0 0.0
        %2707 = vmatprep.subr.mxu0 %v2634
        %2708 = vmatpush1.msra.mxu0 %v2633
        %2709 = vmatprep.subr.mxu0 %v2626
        %2710 = vmatpush1.msra.mxu0 %v2625
        %2711 = vmatprep.subr.mxu0 %v2618
        %2712 = vmatpush1.msra.mxu0 %v2617
        %2713 = vmatprep.subr.mxu0 %v2610
        %2714 = vmatpush1.msra.mxu0 %v2609
        %2715 = vmatprep.subr.mxu0 0.0
        %2716 = vmatpush2.msra.mxu0 0.0
        %2717 = vmatprep.subr.mxu0 0.0
        %2718 = vmatpush2.msra.mxu0 0.0
        %2719 = vmatprep.subr.mxu0 0.0
        %2720 = vmatpush2.msra.mxu0 0.0
        %2721 = vmatprep.subr.mxu0 0.0
        %2722 = vmatpush2.msra.mxu0 0.0
        %2723 = vmatprep.subr.mxu0 0.0
        %2724 = vmatpush2.msra.mxu0 0.0
        %2725 = vmatprep.subr.mxu0 0.0
        %2726 = vmatpush2.msra.mxu0 0.0
        %2727 = vmatprep.subr.mxu0 0.0
        %2728 = vmatpush2.msra.mxu0 0.0
        %2729 = vmatprep.subr.mxu0 0.0
        %2730 = vmatpush2.msra.mxu0 0.0
        %2731 = vmatprep.subr.mxu0 0.0
        %2732 = vmatpush2.msra.mxu0 0.0
        %2733 = vmatprep.subr.mxu0 0.0
        %2734 = vmatpush2.msra.mxu0 0.0
        %2735 = vmatprep.subr.mxu0 0.0
        %2736 = vmatpush2.msra.mxu0 0.0
        %2737 = vmatprep.subr.mxu0 0.0
        %2738 = vmatpush2.msra.mxu0 0.0
        %2739 = vmatprep.subr.mxu0 0.0
        %2740 = vmatpush2.msra.mxu0 0.0
        %2741 = vmatprep.subr.mxu0 0.0
        %2742 = vmatpush2.msra.mxu0 0.0
        %2743 = vmatprep.subr.mxu0 0.0
        %2744 = vmatpush2.msra.mxu0 0.0
        %2745 = vmatprep.subr.mxu0 0.0
        %2746 = vmatpush2.msra.mxu0 0.0
        %2747 = vmatprep.mubr.f32.mxu0 0.0
        %2748 = vmatmul.mubr.f32.gmra.mxu0 %v2152
        %v2749 = vpop.f32.mrf.mxu0
        %v2750 = vadd.f32 %v2646, %v2749
        %v2751 = vpop.f32.mrf.mxu0
        %v2752 = vadd.f32 %v2650, %v2751
        %2753 = vmatprep.mubr.f32.mxu0 0.0
        %2754 = vmatmul.mubr.f32.gmra.mxu0 %v2155
        %v2755 = vpop.f32.mrf.mxu0
        %v2756 = vadd.f32 %v2646, %v2755
        %v2757 = vpop.f32.mrf.mxu0
        %v2758 = vadd.f32 %v2650, %v2757
        %2759 = vdwg.mxu0
        %2760 = vmatprep.subr.mxu0 0.0
        %2761 = vmatpush1.msra.mxu0 0.0
        %2762 = vmatprep.subr.mxu0 0.0
        %2763 = vmatpush1.msra.mxu0 0.0
        %2764 = vmatprep.subr.mxu0 0.0
        %2765 = vmatpush1.msra.mxu0 0.0
        %2766 = vmatprep.subr.mxu0 0.0
        %2767 = vmatpush1.msra.mxu0 0.0
        %2768 = vmatprep.subr.mxu0 0.0
        %2769 = vmatpush1.msra.mxu0 0.0
        %2770 = vmatprep.subr.mxu0 0.0
        %2771 = vmatpush1.msra.mxu0 0.0
        %2772 = vmatprep.subr.mxu0 0.0
        %2773 = vmatpush1.msra.mxu0 0.0
        %2774 = vmatprep.subr.mxu0 0.0
        %2775 = vmatpush1.msra.mxu0 0.0
        %2776 = vmatprep.subr.mxu0 0.0
        %2777 = vmatpush1.msra.mxu0 0.0
        %2778 = vmatprep.subr.mxu0 0.0
        %2779 = vmatpush1.msra.mxu0 0.0
        %2780 = vmatprep.subr.mxu0 0.0
        %2781 = vmatpush1.msra.mxu0 0.0
        %2782 = vmatprep.subr.mxu0 0.0
        %2783 = vmatpush1.msra.mxu0 0.0
        %2784 = vmatprep.subr.mxu0 %v2636
        %2785 = vmatpush1.msra.mxu0 %v2635
        %2786 = vmatprep.subr.mxu0 %v2628
        %2787 = vmatpush1.msra.mxu0 %v2627
        %2788 = vmatprep.subr.mxu0 %v2620
        %2789 = vmatpush1.msra.mxu0 %v2619
        %2790 = vmatprep.subr.mxu0 %v2612
        %2791 = vmatpush1.msra.mxu0 %v2611
        %2792 = vmatprep.subr.mxu0 0.0
        %2793 = vmatpush2.msra.mxu0 0.0
        %2794 = vmatprep.subr.mxu0 0.0
        %2795 = vmatpush2.msra.mxu0 0.0
        %2796 = vmatprep.subr.mxu0 0.0
        %2797 = vmatpush2.msra.mxu0 0.0
        %2798 = vmatprep.subr.mxu0 0.0
        %2799 = vmatpush2.msra.mxu0 0.0
        %2800 = vmatprep.subr.mxu0 0.0
        %2801 = vmatpush2.msra.mxu0 0.0
        %2802 = vmatprep.subr.mxu0 0.0
        %2803 = vmatpush2.msra.mxu0 0.0
        %2804 = vmatprep.subr.mxu0 0.0
        %2805 = vmatpush2.msra.mxu0 0.0
        %2806 = vmatprep.subr.mxu0 0.0
        %2807 = vmatpush2.msra.mxu0 0.0
        %2808 = vmatprep.subr.mxu0 0.0
        %2809 = vmatpush2.msra.mxu0 0.0
        %2810 = vmatprep.subr.mxu0 0.0
        %2811 = vmatpush2.msra.mxu0 0.0
        %2812 = vmatprep.subr.mxu0 0.0
        %2813 = vmatpush2.msra.mxu0 0.0
        %2814 = vmatprep.subr.mxu0 0.0
        %2815 = vmatpush2.msra.mxu0 0.0
        %2816 = vmatprep.subr.mxu0 0.0
        %2817 = vmatpush2.msra.mxu0 0.0
        %2818 = vmatprep.subr.mxu0 0.0
        %2819 = vmatpush2.msra.mxu0 0.0
        %2820 = vmatprep.subr.mxu0 0.0
        %2821 = vmatpush2.msra.mxu0 0.0
        %2822 = vmatprep.subr.mxu0 0.0
        %2823 = vmatpush2.msra.mxu0 0.0
        %2824 = vmatprep.mubr.f32.mxu0 0.0
        %2825 = vmatmul.mubr.f32.gmra.mxu0 %v2152
        %v2826 = vpop.f32.mrf.mxu0
        %v2827 = vadd.f32 %v2654, %v2826
        %v2828 = vpop.f32.mrf.mxu0
        %v2829 = vadd.f32 %v2658, %v2828
        %2830 = vmatprep.mubr.f32.mxu0 0.0
        %2831 = vmatmul.mubr.f32.gmra.mxu0 %v2155
        %v2832 = vpop.f32.mrf.mxu0
        %v2833 = vadd.f32 %v2654, %v2832
        %v2834 = vpop.f32.mrf.mxu0
        %v2835 = vadd.f32 %v2658, %v2834
        %2836 = vdwg.mxu0
        %2837 = vmatprep.subr.mxu0 0.0
        %2838 = vmatpush1.msra.mxu0 0.0
        %2839 = vmatprep.subr.mxu0 0.0
        %2840 = vmatpush1.msra.mxu0 0.0
        %2841 = vmatprep.subr.mxu0 0.0
        %2842 = vmatpush1.msra.mxu0 0.0
        %2843 = vmatprep.subr.mxu0 0.0
        %2844 = vmatpush1.msra.mxu0 0.0
        %2845 = vmatprep.subr.mxu0 0.0
        %2846 = vmatpush1.msra.mxu0 0.0
        %2847 = vmatprep.subr.mxu0 0.0
        %2848 = vmatpush1.msra.mxu0 0.0
        %2849 = vmatprep.subr.mxu0 0.0
        %2850 = vmatpush1.msra.mxu0 0.0
        %2851 = vmatprep.subr.mxu0 0.0
        %2852 = vmatpush1.msra.mxu0 0.0
        %2853 = vmatprep.subr.mxu0 0.0
        %2854 = vmatpush1.msra.mxu0 0.0
        %2855 = vmatprep.subr.mxu0 0.0
        %2856 = vmatpush1.msra.mxu0 0.0
        %2857 = vmatprep.subr.mxu0 0.0
        %2858 = vmatpush1.msra.mxu0 0.0
        %2859 = vmatprep.subr.mxu0 0.0
        %2860 = vmatpush1.msra.mxu0 0.0
        %2861 = vmatprep.subr.mxu0 %v2638
        %2862 = vmatpush1.msra.mxu0 %v2637
        %2863 = vmatprep.subr.mxu0 %v2630
        %2864 = vmatpush1.msra.mxu0 %v2629
        %2865 = vmatprep.subr.mxu0 %v2622
        %2866 = vmatpush1.msra.mxu0 %v2621
        %2867 = vmatprep.subr.mxu0 %v2614
        %2868 = vmatpush1.msra.mxu0 %v2613
        %2869 = vmatprep.subr.mxu0 0.0
        %2870 = vmatpush2.msra.mxu0 0.0
        %2871 = vmatprep.subr.mxu0 0.0
        %2872 = vmatpush2.msra.mxu0 0.0
        %2873 = vmatprep.subr.mxu0 0.0
        %2874 = vmatpush2.msra.mxu0 0.0
        %2875 = vmatprep.subr.mxu0 0.0
        %2876 = vmatpush2.msra.mxu0 0.0
        %2877 = vmatprep.subr.mxu0 0.0
        %2878 = vmatpush2.msra.mxu0 0.0
        %2879 = vmatprep.subr.mxu0 0.0
        %2880 = vmatpush2.msra.mxu0 0.0
        %2881 = vmatprep.subr.mxu0 0.0
        %2882 = vmatpush2.msra.mxu0 0.0
        %2883 = vmatprep.subr.mxu0 0.0
        %2884 = vmatpush2.msra.mxu0 0.0
        %2885 = vmatprep.subr.mxu0 0.0
        %2886 = vmatpush2.msra.mxu0 0.0
        %2887 = vmatprep.subr.mxu0 0.0
        %2888 = vmatpush2.msra.mxu0 0.0
        %2889 = vmatprep.subr.mxu0 0.0
        %2890 = vmatpush2.msra.mxu0 0.0
        %2891 = vmatprep.subr.mxu0 0.0
        %2892 = vmatpush2.msra.mxu0 0.0
        %2893 = vmatprep.subr.mxu0 0.0
        %2894 = vmatpush2.msra.mxu0 0.0
        %2895 = vmatprep.subr.mxu0 0.0
        %2896 = vmatpush2.msra.mxu0 0.0
        %2897 = vmatprep.subr.mxu0 0.0
        %2898 = vmatpush2.msra.mxu0 0.0
        %2899 = vmatprep.subr.mxu0 0.0
        %2900 = vmatpush2.msra.mxu0 0.0
        %2901 = vmatprep.mubr.f32.mxu0 0.0
        %2902 = vmatmul.mubr.f32.gmra.mxu0 %v2152
        %v2903 = vpop.f32.mrf.mxu0
        %v2904 = vadd.f32 %v2662, %v2903
        %v2905 = vpop.f32.mrf.mxu0
        %v2906 = vadd.f32 %v2666, %v2905
        %2907 = vmatprep.mubr.f32.mxu0 0.0
        %2908 = vmatmul.mubr.f32.gmra.mxu0 %v2155
        %v2909 = vpop.f32.mrf.mxu0
        %v2910 = vadd.f32 %v2662, %v2909
        %v2911 = vpop.f32.mrf.mxu0
        %v2912 = vadd.f32 %v2666, %v2911
        %2913 = vdwg.mxu0
        %2914 = vmatprep.subr.mxu0 0.0
        %2915 = vmatpush1.msra.mxu0 0.0
        %2916 = vmatprep.subr.mxu0 0.0
        %2917 = vmatpush1.msra.mxu0 0.0
        %2918 = vmatprep.subr.mxu0 0.0
        %2919 = vmatpush1.msra.mxu0 0.0
        %2920 = vmatprep.subr.mxu0 0.0
        %2921 = vmatpush1.msra.mxu0 0.0
        %2922 = vmatprep.subr.mxu0 0.0
        %2923 = vmatpush1.msra.mxu0 0.0
        %2924 = vmatprep.subr.mxu0 0.0
        %2925 = vmatpush1.msra.mxu0 0.0
        %2926 = vmatprep.subr.mxu0 0.0
        %2927 = vmatpush1.msra.mxu0 0.0
        %2928 = vmatprep.subr.mxu0 0.0
        %2929 = vmatpush1.msra.mxu0 0.0
        %2930 = vmatprep.subr.mxu0 0.0
        %2931 = vmatpush1.msra.mxu0 0.0
        %2932 = vmatprep.subr.mxu0 0.0
        %2933 = vmatpush1.msra.mxu0 0.0
        %2934 = vmatprep.subr.mxu0 0.0
        %2935 = vmatpush1.msra.mxu0 0.0
        %2936 = vmatprep.subr.mxu0 0.0
        %2937 = vmatpush1.msra.mxu0 0.0
        %2938 = vmatprep.subr.mxu0 %v2640
        %2939 = vmatpush1.msra.mxu0 %v2639
        %2940 = vmatprep.subr.mxu0 %v2632
        %2941 = vmatpush1.msra.mxu0 %v2631
        %2942 = vmatprep.subr.mxu0 %v2624
        %2943 = vmatpush1.msra.mxu0 %v2623
        %2944 = vmatprep.subr.mxu0 %v2616
        %2945 = vmatpush1.msra.mxu0 %v2615
        %2946 = vmatprep.subr.mxu0 0.0
        %2947 = vmatpush2.msra.mxu0 0.0
        %2948 = vmatprep.subr.mxu0 0.0
        %2949 = vmatpush2.msra.mxu0 0.0
        %2950 = vmatprep.subr.mxu0 0.0
        %2951 = vmatpush2.msra.mxu0 0.0
        %2952 = vmatprep.subr.mxu0 0.0
        %2953 = vmatpush2.msra.mxu0 0.0
        %2954 = vmatprep.subr.mxu0 0.0
        %2955 = vmatpush2.msra.mxu0 0.0
        %2956 = vmatprep.subr.mxu0 0.0
        %2957 = vmatpush2.msra.mxu0 0.0
        %2958 = vmatprep.subr.mxu0 0.0
        %2959 = vmatpush2.msra.mxu0 0.0
        %2960 = vmatprep.subr.mxu0 0.0
        %2961 = vmatpush2.msra.mxu0 0.0
        %2962 = vmatprep.subr.mxu0 0.0
        %2963 = vmatpush2.msra.mxu0 0.0
        %2964 = vmatprep.subr.mxu0 0.0
        %2965 = vmatpush2.msra.mxu0 0.0
        %2966 = vmatprep.subr.mxu0 0.0
        %2967 = vmatpush2.msra.mxu0 0.0
        %2968 = vmatprep.subr.mxu0 0.0
        %2969 = vmatpush2.msra.mxu0 0.0
        %2970 = vmatprep.subr.mxu0 0.0
        %2971 = vmatpush2.msra.mxu0 0.0
        %2972 = vmatprep.subr.mxu0 0.0
        %2973 = vmatpush2.msra.mxu0 0.0
        %2974 = vmatprep.subr.mxu0 0.0
        %2975 = vmatpush2.msra.mxu0 0.0
        %2976 = vmatprep.subr.mxu0 0.0
        %2977 = vmatpush2.msra.mxu0 0.0
        %2978 = vmatprep.mubr.f32.mxu0 0.0
        %2979 = vmatmul.mubr.f32.gmra.mxu0 %v2152
        %v2980 = vpop.f32.mrf.mxu0
        %v2981 = vadd.f32 %v2670, %v2980
        %v2982 = vpop.f32.mrf.mxu0
        %v2983 = vadd.f32 %v2674, %v2982
        %2984 = vmatprep.mubr.f32.mxu0 0.0
        %2985 = vmatmul.mubr.f32.gmra.mxu0 %v2155
        %v2986 = vpop.f32.mrf.mxu0
        %v2987 = vadd.f32 %v2670, %v2986
        %v2988 = vpop.f32.mrf.mxu0
        %v2989 = vadd.f32 %v2674, %v2988
        %2990 = vdwg.mxu0
        %v2991 = vmax.f32 %v2750, 0.0
        %v2992 = vmax.f32 %v2752, 0.0
        %v2993 = vmax.f32 %v2827, 0.0
        %v2994 = vmax.f32 %v2829, 0.0
        %v2995 = vmax.f32 %v2904, 0.0
        %v2996 = vmax.f32 %v2906, 0.0
        %v2997 = vmax.f32 %v2981, 0.0
        %v2998 = vmax.f32 %v2983, 0.0
        %v2999 = vmax.f32 %v2756, 0.0
        %v3000 = vmax.f32 %v2758, 0.0
        %v3001 = vmax.f32 %v2833, 0.0
        %v3002 = vmax.f32 %v2835, 0.0
        %v3003 = vmax.f32 %v2910, 0.0
        %v3004 = vmax.f32 %v2912, 0.0
        %v3005 = vmax.f32 %v2987, 0.0
        %v3006 = vmax.f32 %v2989, 0.0
        %v3007 = vld [vmem:[%s907 + $0x400] sm:$0xff]
        %v3008 = vld [vmem:[%s907 + $0x408] sm:$0xff]
        %v3009 = vld [vmem:[%s907 + $0x410] sm:$0xff]
        %v3010 = vld [vmem:[%s907 + $0x418] sm:$0xff]
        %v3011 = vld [vmem:[%s907 + $0x420] sm:$0xff]
        %v3012 = vld [vmem:[%s907 + $0x428] sm:$0xff]
        %v3013 = vld [vmem:[%s907 + $0x430] sm:$0xff]
        %v3014 = vld [vmem:[%s907 + $0x438] sm:$0xff]
        %v3015 = vld [vmem:[%s907 + $0x440] sm:$0xff]
        %v3016 = vld [vmem:[%s907 + $0x448] sm:$0xff]
        %v3017 = vld [vmem:[%s907 + $0x450] sm:$0xff]
        %v3018 = vld [vmem:[%s907 + $0x458] sm:$0xff]
        %v3019 = vld [vmem:[%s907 + $0x460] sm:$0xff]
        %v3020 = vld [vmem:[%s907 + $0x468] sm:$0xff]
        %v3021 = vld [vmem:[%s907 + $0x470] sm:$0xff]
        %v3022 = vld [vmem:[%s907 + $0x478] sm:$0xff]
        %v3023 = vld [vmem:[%s907 + $0x480] sm:$0xff]
        %v3024 = vld [vmem:[%s907 + $0x488] sm:$0xff]
        %v3025 = vld [vmem:[%s907 + $0x490] sm:$0xff]
        %v3026 = vld [vmem:[%s907 + $0x498] sm:$0xff]
        %v3027 = vld [vmem:[%s907 + $0x4a0] sm:$0xff]
        %v3028 = vld [vmem:[%s907 + $0x4a8] sm:$0xff]
        %v3029 = vld [vmem:[%s907 + $0x4b0] sm:$0xff]
        %v3030 = vld [vmem:[%s907 + $0x4b8] sm:$0xff]
        %v3031 = vld [vmem:[%s907 + $0x4c0] sm:$0xff]
        %v3032 = vld [vmem:[%s907 + $0x4c8] sm:$0xff]
        %v3033 = vld [vmem:[%s907 + $0x4d0] sm:$0xff]
        %v3034 = vld [vmem:[%s907 + $0x4d8] sm:$0xff]
        %v3035 = vld [vmem:[%s907 + $0x4e0] sm:$0xff]
        %v3036 = vld [vmem:[%s907 + $0x4e8] sm:$0xff]
        %v3037 = vld [vmem:[%s907 + $0x4f0] sm:$0xff]
        %v3038 = vld [vmem:[%s907 + $0x4f8] sm:$0xff]
        %v3039 = vld [vmem:[%s907 + $0x500] sm:$0xff]
        %v3040 = vld [vmem:[%s907 + $0x508] sm:$0xff]
        %v3041 = vld [vmem:[%s907 + $0x510] sm:$0xff]
        %v3042 = vld [vmem:[%s907 + $0x518] sm:$0xff]
        %v3043 = vld [vmem:[%s907 + $0x520] sm:$0xff]
        %v3044 = vld [vmem:[%s907 + $0x528] sm:$0xff]
        %v3045 = vld [vmem:[%s907 + $0x530] sm:$0xff]
        %v3046 = vld [vmem:[%s907 + $0x538] sm:$0xff]
        %v3047 = vld [vmem:[%s907 + $0x540] sm:$0xff]
        %v3048 = vld [vmem:[%s907 + $0x548] sm:$0xff]
        %v3049 = vld [vmem:[%s907 + $0x550] sm:$0xff]
        %v3050 = vld [vmem:[%s907 + $0x558] sm:$0xff]
        %v3051 = vld [vmem:[%s907 + $0x560] sm:$0xff]
        %v3052 = vld [vmem:[%s907 + $0x568] sm:$0xff]
        %v3053 = vld [vmem:[%s907 + $0x570] sm:$0xff]
        %v3054 = vld [vmem:[%s907 + $0x578] sm:$0xff]
        %v3055 = vld [vmem:[%s907 + $0x580] sm:$0xff]
        %v3056 = vld [vmem:[%s907 + $0x588] sm:$0xff]
        %v3057 = vld [vmem:[%s907 + $0x590] sm:$0xff]
        %v3058 = vld [vmem:[%s907 + $0x598] sm:$0xff]
        %v3059 = vld [vmem:[%s907 + $0x5a0] sm:$0xff]
        %v3060 = vld [vmem:[%s907 + $0x5a8] sm:$0xff]
        %v3061 = vld [vmem:[%s907 + $0x5b0] sm:$0xff]
        %v3062 = vld [vmem:[%s907 + $0x5b8] sm:$0xff]
        %v3063 = vld [vmem:[%s907 + $0x5c0] sm:$0xff]
        %v3064 = vld [vmem:[%s907 + $0x5c8] sm:$0xff]
        %v3065 = vld [vmem:[%s907 + $0x5d0] sm:$0xff]
        %v3066 = vld [vmem:[%s907 + $0x5d8] sm:$0xff]
        %v3067 = vld [vmem:[%s907 + $0x5e0] sm:$0xff]
        %v3068 = vld [vmem:[%s907 + $0x5e8] sm:$0xff]
        %v3069 = vld [vmem:[%s907 + $0x5f0] sm:$0xff]
        %v3070 = vld [vmem:[%s907 + $0x5f8] sm:$0xff]
        %v3071 = vld [vmem:[%s907 + $0x600] sm:$0xff]
        %v3072 = vld [vmem:[%s907 + $0x608] sm:$0xff]
        %v3073 = vld [vmem:[%s907 + $0x610] sm:$0xff]
        %v3074 = vld [vmem:[%s907 + $0x618] sm:$0xff]
        %v3075 = vld [vmem:[%s907 + $0x620] sm:$0xff]
        %v3076 = vld [vmem:[%s907 + $0x628] sm:$0xff]
        %v3077 = vld [vmem:[%s907 + $0x630] sm:$0xff]
        %v3078 = vld [vmem:[%s907 + $0x638] sm:$0xff]
        %v3079 = vld [vmem:[%s907 + $0x640] sm:$0xff]
        %v3080 = vld [vmem:[%s907 + $0x648] sm:$0xff]
        %v3081 = vld [vmem:[%s907 + $0x650] sm:$0xff]
        %v3082 = vld [vmem:[%s907 + $0x658] sm:$0xff]
        %v3083 = vld [vmem:[%s907 + $0x660] sm:$0xff]
        %v3084 = vld [vmem:[%s907 + $0x668] sm:$0xff]
        %v3085 = vld [vmem:[%s907 + $0x670] sm:$0xff]
        %v3086 = vld [vmem:[%s907 + $0x678] sm:$0xff]
        %v3087 = vld [vmem:[%s907 + $0x680] sm:$0xff]
        %v3088 = vld [vmem:[%s907 + $0x688] sm:$0xff]
        %v3089 = vld [vmem:[%s907 + $0x690] sm:$0xff]
        %v3090 = vld [vmem:[%s907 + $0x698] sm:$0xff]
        %v3091 = vld [vmem:[%s907 + $0x6a0] sm:$0xff]
        %v3092 = vld [vmem:[%s907 + $0x6a8] sm:$0xff]
        %v3093 = vld [vmem:[%s907 + $0x6b0] sm:$0xff]
        %v3094 = vld [vmem:[%s907 + $0x6b8] sm:$0xff]
        %v3095 = vld [vmem:[%s907 + $0x6c0] sm:$0xff]
        %v3096 = vld [vmem:[%s907 + $0x6c8] sm:$0xff]
        %v3097 = vld [vmem:[%s907 + $0x6d0] sm:$0xff]
        %v3098 = vld [vmem:[%s907 + $0x6d8] sm:$0xff]
        %v3099 = vld [vmem:[%s907 + $0x6e0] sm:$0xff]
        %v3100 = vld [vmem:[%s907 + $0x6e8] sm:$0xff]
        %v3101 = vld [vmem:[%s907 + $0x6f0] sm:$0xff]
        %v3102 = vld [vmem:[%s907 + $0x6f8] sm:$0xff]
        %v3103 = vld [vmem:[%s907 + $0x700] sm:$0xff]
        %v3104 = vld [vmem:[%s907 + $0x708] sm:$0xff]
        %v3105 = vld [vmem:[%s907 + $0x710] sm:$0xff]
        %v3106 = vld [vmem:[%s907 + $0x718] sm:$0xff]
        %v3107 = vld [vmem:[%s907 + $0x720] sm:$0xff]
        %v3108 = vld [vmem:[%s907 + $0x728] sm:$0xff]
        %v3109 = vld [vmem:[%s907 + $0x730] sm:$0xff]
        %v3110 = vld [vmem:[%s907 + $0x738] sm:$0xff]
        %v3111 = vld [vmem:[%s907 + $0x740] sm:$0xff]
        %v3112 = vld [vmem:[%s907 + $0x748] sm:$0xff]
        %v3113 = vld [vmem:[%s907 + $0x750] sm:$0xff]
        %v3114 = vld [vmem:[%s907 + $0x758] sm:$0xff]
        %v3115 = vld [vmem:[%s907 + $0x760] sm:$0xff]
        %v3116 = vld [vmem:[%s907 + $0x768] sm:$0xff]
        %v3117 = vld [vmem:[%s907 + $0x770] sm:$0xff]
        %v3118 = vld [vmem:[%s907 + $0x778] sm:$0xff]
        %v3119 = vld [vmem:[%s907 + $0x780] sm:$0xff]
        %v3120 = vld [vmem:[%s907 + $0x788] sm:$0xff]
        %v3121 = vld [vmem:[%s907 + $0x790] sm:$0xff]
        %v3122 = vld [vmem:[%s907 + $0x798] sm:$0xff]
        %v3123 = vld [vmem:[%s907 + $0x7a0] sm:$0xff]
        %v3124 = vld [vmem:[%s907 + $0x7a8] sm:$0xff]
        %v3125 = vld [vmem:[%s907 + $0x7b0] sm:$0xff]
        %v3126 = vld [vmem:[%s907 + $0x7b8] sm:$0xff]
        %v3127 = vld [vmem:[%s907 + $0x7c0] sm:$0xff]
        %v3128 = vld [vmem:[%s907 + $0x7c8] sm:$0xff]
        %v3129 = vld [vmem:[%s907 + $0x7d0] sm:$0xff]
        %v3130 = vld [vmem:[%s907 + $0x7d8] sm:$0xff]
        %v3131 = vld [vmem:[%s907 + $0x7e0] sm:$0xff]
        %v3132 = vld [vmem:[%s907 + $0x7e8] sm:$0xff]
        %v3133 = vld [vmem:[%s907 + $0x7f0] sm:$0xff]
        %v3134 = vld [vmem:[%s907 + $0x7f8] sm:$0xff]
        %3135 = vmatprep.subr.mxu0 0.0
        %3136 = vmatpush1.msra.mxu0 %v3022
        %3137 = vmatprep.subr.mxu0 0.0
        %3138 = vmatpush1.msra.mxu0 %v3021
        %3139 = vmatprep.subr.mxu0 0.0
        %3140 = vmatpush1.msra.mxu0 %v3020
        %3141 = vmatprep.subr.mxu0 0.0
        %3142 = vmatpush1.msra.mxu0 %v3019
        %3143 = vmatprep.subr.mxu0 0.0
        %3144 = vmatpush1.msra.mxu0 %v3018
        %3145 = vmatprep.subr.mxu0 0.0
        %3146 = vmatpush1.msra.mxu0 %v3017
        %3147 = vmatprep.subr.mxu0 0.0
        %3148 = vmatpush1.msra.mxu0 %v3016
        %3149 = vmatprep.subr.mxu0 0.0
        %3150 = vmatpush1.msra.mxu0 %v3015
        %3151 = vmatprep.subr.mxu0 0.0
        %3152 = vmatpush1.msra.mxu0 %v3014
        %3153 = vmatprep.subr.mxu0 0.0
        %3154 = vmatpush1.msra.mxu0 %v3013
        %3155 = vmatprep.subr.mxu0 0.0
        %3156 = vmatpush1.msra.mxu0 %v3012
        %3157 = vmatprep.subr.mxu0 0.0
        %3158 = vmatpush1.msra.mxu0 %v3011
        %3159 = vmatprep.subr.mxu0 0.0
        %3160 = vmatpush1.msra.mxu0 %v3010
        %3161 = vmatprep.subr.mxu0 0.0
        %3162 = vmatpush1.msra.mxu0 %v3009
        %3163 = vmatprep.subr.mxu0 0.0
        %3164 = vmatpush1.msra.mxu0 %v3008
        %3165 = vmatprep.subr.mxu0 0.0
        %3166 = vmatpush1.msra.mxu0 %v3007
        %3167 = vmatprep.subr.mxu0 0.0
        %3168 = vmatpush2.msra.mxu0 %v3038
        %3169 = vmatprep.subr.mxu0 0.0
        %3170 = vmatpush2.msra.mxu0 %v3037
        %3171 = vmatprep.subr.mxu0 0.0
        %3172 = vmatpush2.msra.mxu0 %v3036
        %3173 = vmatprep.subr.mxu0 0.0
        %3174 = vmatpush2.msra.mxu0 %v3035
        %3175 = vmatprep.subr.mxu0 0.0
        %3176 = vmatpush2.msra.mxu0 %v3034
        %3177 = vmatprep.subr.mxu0 0.0
        %3178 = vmatpush2.msra.mxu0 %v3033
        %3179 = vmatprep.subr.mxu0 0.0
        %3180 = vmatpush2.msra.mxu0 %v3032
        %3181 = vmatprep.subr.mxu0 0.0
        %3182 = vmatpush2.msra.mxu0 %v3031
        %3183 = vmatprep.subr.mxu0 0.0
        %3184 = vmatpush2.msra.mxu0 %v3030
        %3185 = vmatprep.subr.mxu0 0.0
        %3186 = vmatpush2.msra.mxu0 %v3029
        %3187 = vmatprep.subr.mxu0 0.0
        %3188 = vmatpush2.msra.mxu0 %v3028
        %3189 = vmatprep.subr.mxu0 0.0
        %3190 = vmatpush2.msra.mxu0 %v3027
        %3191 = vmatprep.subr.mxu0 0.0
        %3192 = vmatpush2.msra.mxu0 %v3026
        %3193 = vmatprep.subr.mxu0 0.0
        %3194 = vmatpush2.msra.mxu0 %v3025
        %3195 = vmatprep.subr.mxu0 0.0
        %3196 = vmatpush2.msra.mxu0 %v3024
        %3197 = vmatprep.subr.mxu0 0.0
        %3198 = vmatpush2.msra.mxu0 %v3023
        %3199 = vmatprep.mubr.f32.mxu0 %v2992
        %3200 = vmatmul.mubr.f32.gmra.mxu0 %v2991
        %v3201 = vpop.f32.mrf.mxu0
        %v3202 = vadd.f32 0.0, %v3201
        %v3203 = vpop.f32.mrf.mxu0
        %3204 = vmatprep.mubr.f32.mxu0 %v3000
        %3205 = vmatmul.mubr.f32.gmra.mxu0 %v2999
        %v3206 = vpop.f32.mrf.mxu0
        %v3207 = vadd.f32 0.0, %v3206
        %v3208 = vpop.f32.mrf.mxu0
        %3209 = vdwg.mxu0
        %3210 = vmatprep.subr.mxu0 0.0
        %3211 = vmatpush1.msra.mxu0 %v3054
        %3212 = vmatprep.subr.mxu0 0.0
        %3213 = vmatpush1.msra.mxu0 %v3053
        %3214 = vmatprep.subr.mxu0 0.0
        %3215 = vmatpush1.msra.mxu0 %v3052
        %3216 = vmatprep.subr.mxu0 0.0
        %3217 = vmatpush1.msra.mxu0 %v3051
        %3218 = vmatprep.subr.mxu0 0.0
        %3219 = vmatpush1.msra.mxu0 %v3050
        %3220 = vmatprep.subr.mxu0 0.0
        %3221 = vmatpush1.msra.mxu0 %v3049
        %3222 = vmatprep.subr.mxu0 0.0
        %3223 = vmatpush1.msra.mxu0 %v3048
        %3224 = vmatprep.subr.mxu0 0.0
        %3225 = vmatpush1.msra.mxu0 %v3047
        %3226 = vmatprep.subr.mxu0 0.0
        %3227 = vmatpush1.msra.mxu0 %v3046
        %3228 = vmatprep.subr.mxu0 0.0
        %3229 = vmatpush1.msra.mxu0 %v3045
        %3230 = vmatprep.subr.mxu0 0.0
        %3231 = vmatpush1.msra.mxu0 %v3044
        %3232 = vmatprep.subr.mxu0 0.0
        %3233 = vmatpush1.msra.mxu0 %v3043
        %3234 = vmatprep.subr.mxu0 0.0
        %3235 = vmatpush1.msra.mxu0 %v3042
        %3236 = vmatprep.subr.mxu0 0.0
        %3237 = vmatpush1.msra.mxu0 %v3041
        %3238 = vmatprep.subr.mxu0 0.0
        %3239 = vmatpush1.msra.mxu0 %v3040
        %3240 = vmatprep.subr.mxu0 0.0
        %3241 = vmatpush1.msra.mxu0 %v3039
        %3242 = vmatprep.subr.mxu0 0.0
        %3243 = vmatpush2.msra.mxu0 %v3070
        %3244 = vmatprep.subr.mxu0 0.0
        %3245 = vmatpush2.msra.mxu0 %v3069
        %3246 = vmatprep.subr.mxu0 0.0
        %3247 = vmatpush2.msra.mxu0 %v3068
        %3248 = vmatprep.subr.mxu0 0.0
        %3249 = vmatpush2.msra.mxu0 %v3067
        %3250 = vmatprep.subr.mxu0 0.0
        %3251 = vmatpush2.msra.mxu0 %v3066
        %3252 = vmatprep.subr.mxu0 0.0
        %3253 = vmatpush2.msra.mxu0 %v3065
        %3254 = vmatprep.subr.mxu0 0.0
        %3255 = vmatpush2.msra.mxu0 %v3064
        %3256 = vmatprep.subr.mxu0 0.0
        %3257 = vmatpush2.msra.mxu0 %v3063
        %3258 = vmatprep.subr.mxu0 0.0
        %3259 = vmatpush2.msra.mxu0 %v3062
        %3260 = vmatprep.subr.mxu0 0.0
        %3261 = vmatpush2.msra.mxu0 %v3061
        %3262 = vmatprep.subr.mxu0 0.0
        %3263 = vmatpush2.msra.mxu0 %v3060
        %3264 = vmatprep.subr.mxu0 0.0
        %3265 = vmatpush2.msra.mxu0 %v3059
        %3266 = vmatprep.subr.mxu0 0.0
        %3267 = vmatpush2.msra.mxu0 %v3058
        %3268 = vmatprep.subr.mxu0 0.0
        %3269 = vmatpush2.msra.mxu0 %v3057
        %3270 = vmatprep.subr.mxu0 0.0
        %3271 = vmatpush2.msra.mxu0 %v3056
        %3272 = vmatprep.subr.mxu0 0.0
        %3273 = vmatpush2.msra.mxu0 %v3055
        %3274 = vmatprep.mubr.f32.mxu0 %v2994
        %3275 = vmatmul.mubr.f32.gmra.mxu0 %v2993
        %v3276 = vpop.f32.mrf.mxu0
        %v3277 = vadd.f32 %v3202, %v3276
        %v3278 = vpop.f32.mrf.mxu0
        %3279 = vmatprep.mubr.f32.mxu0 %v3002
        %3280 = vmatmul.mubr.f32.gmra.mxu0 %v3001
        %v3281 = vpop.f32.mrf.mxu0
        %v3282 = vadd.f32 %v3207, %v3281
        %v3283 = vpop.f32.mrf.mxu0
        %3284 = vdwg.mxu0
        %3285 = vmatprep.subr.mxu0 0.0
        %3286 = vmatpush1.msra.mxu0 %v3086
        %3287 = vmatprep.subr.mxu0 0.0
        %3288 = vmatpush1.msra.mxu0 %v3085
        %3289 = vmatprep.subr.mxu0 0.0
        %3290 = vmatpush1.msra.mxu0 %v3084
        %3291 = vmatprep.subr.mxu0 0.0
        %3292 = vmatpush1.msra.mxu0 %v3083
        %3293 = vmatprep.subr.mxu0 0.0
        %3294 = vmatpush1.msra.mxu0 %v3082
        %3295 = vmatprep.subr.mxu0 0.0
        %3296 = vmatpush1.msra.mxu0 %v3081
        %3297 = vmatprep.subr.mxu0 0.0
        %3298 = vmatpush1.msra.mxu0 %v3080
        %3299 = vmatprep.subr.mxu0 0.0
        %3300 = vmatpush1.msra.mxu0 %v3079
        %3301 = vmatprep.subr.mxu0 0.0
        %3302 = vmatpush1.msra.mxu0 %v3078
        %3303 = vmatprep.subr.mxu0 0.0
        %3304 = vmatpush1.msra.mxu0 %v3077
        %3305 = vmatprep.subr.mxu0 0.0
        %3306 = vmatpush1.msra.mxu0 %v3076
        %3307 = vmatprep.subr.mxu0 0.0
        %3308 = vmatpush1.msra.mxu0 %v3075
        %3309 = vmatprep.subr.mxu0 0.0
        %3310 = vmatpush1.msra.mxu0 %v3074
        %3311 = vmatprep.subr.mxu0 0.0
        %3312 = vmatpush1.msra.mxu0 %v3073
        %3313 = vmatprep.subr.mxu0 0.0
        %3314 = vmatpush1.msra.mxu0 %v3072
        %3315 = vmatprep.subr.mxu0 0.0
        %3316 = vmatpush1.msra.mxu0 %v3071
        %3317 = vmatprep.subr.mxu0 0.0
        %3318 = vmatpush2.msra.mxu0 %v3102
        %3319 = vmatprep.subr.mxu0 0.0
        %3320 = vmatpush2.msra.mxu0 %v3101
        %3321 = vmatprep.subr.mxu0 0.0
        %3322 = vmatpush2.msra.mxu0 %v3100
        %3323 = vmatprep.subr.mxu0 0.0
        %3324 = vmatpush2.msra.mxu0 %v3099
        %3325 = vmatprep.subr.mxu0 0.0
        %3326 = vmatpush2.msra.mxu0 %v3098
        %3327 = vmatprep.subr.mxu0 0.0
        %3328 = vmatpush2.msra.mxu0 %v3097
        %3329 = vmatprep.subr.mxu0 0.0
        %3330 = vmatpush2.msra.mxu0 %v3096
        %3331 = vmatprep.subr.mxu0 0.0
        %3332 = vmatpush2.msra.mxu0 %v3095
        %3333 = vmatprep.subr.mxu0 0.0
        %3334 = vmatpush2.msra.mxu0 %v3094
        %3335 = vmatprep.subr.mxu0 0.0
        %3336 = vmatpush2.msra.mxu0 %v3093
        %3337 = vmatprep.subr.mxu0 0.0
        %3338 = vmatpush2.msra.mxu0 %v3092
        %3339 = vmatprep.subr.mxu0 0.0
        %3340 = vmatpush2.msra.mxu0 %v3091
        %3341 = vmatprep.subr.mxu0 0.0
        %3342 = vmatpush2.msra.mxu0 %v3090
        %3343 = vmatprep.subr.mxu0 0.0
        %3344 = vmatpush2.msra.mxu0 %v3089
        %3345 = vmatprep.subr.mxu0 0.0
        %3346 = vmatpush2.msra.mxu0 %v3088
        %3347 = vmatprep.subr.mxu0 0.0
        %3348 = vmatpush2.msra.mxu0 %v3087
        %3349 = vmatprep.mubr.f32.mxu0 %v2996
        %3350 = vmatmul.mubr.f32.gmra.mxu0 %v2995
        %v3351 = vpop.f32.mrf.mxu0
        %v3352 = vadd.f32 %v3277, %v3351
        %v3353 = vpop.f32.mrf.mxu0
        %3354 = vmatprep.mubr.f32.mxu0 %v3004
        %3355 = vmatmul.mubr.f32.gmra.mxu0 %v3003
        %v3356 = vpop.f32.mrf.mxu0
        %v3357 = vadd.f32 %v3282, %v3356
        %v3358 = vpop.f32.mrf.mxu0
        %3359 = vdwg.mxu0
        %3360 = vmatprep.subr.mxu0 0.0
        %3361 = vmatpush1.msra.mxu0 %v3118
        %3362 = vmatprep.subr.mxu0 0.0
        %3363 = vmatpush1.msra.mxu0 %v3117
        %3364 = vmatprep.subr.mxu0 0.0
        %3365 = vmatpush1.msra.mxu0 %v3116
        %3366 = vmatprep.subr.mxu0 0.0
        %3367 = vmatpush1.msra.mxu0 %v3115
        %3368 = vmatprep.subr.mxu0 0.0
        %3369 = vmatpush1.msra.mxu0 %v3114
        %3370 = vmatprep.subr.mxu0 0.0
        %3371 = vmatpush1.msra.mxu0 %v3113
        %3372 = vmatprep.subr.mxu0 0.0
        %3373 = vmatpush1.msra.mxu0 %v3112
        %3374 = vmatprep.subr.mxu0 0.0
        %3375 = vmatpush1.msra.mxu0 %v3111
        %3376 = vmatprep.subr.mxu0 0.0
        %3377 = vmatpush1.msra.mxu0 %v3110
        %3378 = vmatprep.subr.mxu0 0.0
        %3379 = vmatpush1.msra.mxu0 %v3109
        %3380 = vmatprep.subr.mxu0 0.0
        %3381 = vmatpush1.msra.mxu0 %v3108
        %3382 = vmatprep.subr.mxu0 0.0
        %3383 = vmatpush1.msra.mxu0 %v3107
        %3384 = vmatprep.subr.mxu0 0.0
        %3385 = vmatpush1.msra.mxu0 %v3106
        %3386 = vmatprep.subr.mxu0 0.0
        %3387 = vmatpush1.msra.mxu0 %v3105
        %3388 = vmatprep.subr.mxu0 0.0
        %3389 = vmatpush1.msra.mxu0 %v3104
        %3390 = vmatprep.subr.mxu0 0.0
        %3391 = vmatpush1.msra.mxu0 %v3103
        %3392 = vmatprep.subr.mxu0 0.0
        %3393 = vmatpush2.msra.mxu0 %v3134
        %3394 = vmatprep.subr.mxu0 0.0
        %3395 = vmatpush2.msra.mxu0 %v3133
        %3396 = vmatprep.subr.mxu0 0.0
        %3397 = vmatpush2.msra.mxu0 %v3132
        %3398 = vmatprep.subr.mxu0 0.0
        %3399 = vmatpush2.msra.mxu0 %v3131
        %3400 = vmatprep.subr.mxu0 0.0
        %3401 = vmatpush2.msra.mxu0 %v3130
        %3402 = vmatprep.subr.mxu0 0.0
        %3403 = vmatpush2.msra.mxu0 %v3129
        %3404 = vmatprep.subr.mxu0 0.0
        %3405 = vmatpush2.msra.mxu0 %v3128
        %3406 = vmatprep.subr.mxu0 0.0
        %3407 = vmatpush2.msra.mxu0 %v3127
        %3408 = vmatprep.subr.mxu0 0.0
        %3409 = vmatpush2.msra.mxu0 %v3126
        %3410 = vmatprep.subr.mxu0 0.0
        %3411 = vmatpush2.msra.mxu0 %v3125
        %3412 = vmatprep.subr.mxu0 0.0
        %3413 = vmatpush2.msra.mxu0 %v3124
        %3414 = vmatprep.subr.mxu0 0.0
        %3415 = vmatpush2.msra.mxu0 %v3123
        %3416 = vmatprep.subr.mxu0 0.0
        %3417 = vmatpush2.msra.mxu0 %v3122
        %3418 = vmatprep.subr.mxu0 0.0
        %3419 = vmatpush2.msra.mxu0 %v3121
        %3420 = vmatprep.subr.mxu0 0.0
        %3421 = vmatpush2.msra.mxu0 %v3120
        %3422 = vmatprep.subr.mxu0 0.0
        %3423 = vmatpush2.msra.mxu0 %v3119
        %3424 = vmatprep.mubr.f32.mxu0 %v2998
        %3425 = vmatmul.mubr.f32.gmra.mxu0 %v2997
        %v3426 = vpop.f32.mrf.mxu0
        %v3427 = vadd.f32 %v3352, %v3426
        %v3428 = vpop.f32.mrf.mxu0
        %3429 = vmatprep.mubr.f32.mxu0 %v3006
        %3430 = vmatmul.mubr.f32.gmra.mxu0 %v3005
        %v3431 = vpop.f32.mrf.mxu0
        %v3432 = vadd.f32 %v3357, %v3431
        %v3433 = vpop.f32.mrf.mxu0
        %3434 = vdwg.mxu0
        %3435 = vmatprep.subr.mxu0 0.0
        %3436 = vmatpush1.msra.mxu0 %v2496
        %3437 = vmatprep.subr.mxu0 0.0
        %3438 = vmatpush1.msra.mxu0 %v2495
        %3439 = vmatprep.subr.mxu0 0.0
        %3440 = vmatpush1.msra.mxu0 %v2494
        %3441 = vmatprep.subr.mxu0 0.0
        %3442 = vmatpush1.msra.mxu0 %v2493
        %3443 = vmatprep.subr.mxu0 0.0
        %3444 = vmatpush1.msra.mxu0 %v2492
        %3445 = vmatprep.subr.mxu0 0.0
        %3446 = vmatpush1.msra.mxu0 %v2491
        %3447 = vmatprep.subr.mxu0 0.0
        %3448 = vmatpush1.msra.mxu0 %v2490
        %3449 = vmatprep.subr.mxu0 0.0
        %3450 = vmatpush1.msra.mxu0 %v2489
        %3451 = vmatprep.subr.mxu0 0.0
        %3452 = vmatpush1.msra.mxu0 %v2488
        %3453 = vmatprep.subr.mxu0 0.0
        %3454 = vmatpush1.msra.mxu0 %v2487
        %3455 = vmatprep.subr.mxu0 0.0
        %3456 = vmatpush1.msra.mxu0 %v2486
        %3457 = vmatprep.subr.mxu0 0.0
        %3458 = vmatpush1.msra.mxu0 %v2485
        %3459 = vmatprep.subr.mxu0 0.0
        %3460 = vmatpush1.msra.mxu0 %v2484
        %3461 = vmatprep.subr.mxu0 0.0
        %3462 = vmatpush1.msra.mxu0 %v2483
        %3463 = vmatprep.subr.mxu0 0.0
        %3464 = vmatpush1.msra.mxu0 %v2482
        %3465 = vmatprep.subr.mxu0 0.0
        %3466 = vmatpush1.msra.mxu0 %v2481
        %3467 = vmatprep.subr.mxu0 0.0
        %3468 = vmatpush2.msra.mxu0 %v2512
        %3469 = vmatprep.subr.mxu0 0.0
        %3470 = vmatpush2.msra.mxu0 %v2511
        %3471 = vmatprep.subr.mxu0 0.0
        %3472 = vmatpush2.msra.mxu0 %v2510
        %3473 = vmatprep.subr.mxu0 0.0
        %3474 = vmatpush2.msra.mxu0 %v2509
        %3475 = vmatprep.subr.mxu0 0.0
        %3476 = vmatpush2.msra.mxu0 %v2508
        %3477 = vmatprep.subr.mxu0 0.0
        %3478 = vmatpush2.msra.mxu0 %v2507
        %3479 = vmatprep.subr.mxu0 0.0
        %3480 = vmatpush2.msra.mxu0 %v2506
        %3481 = vmatprep.subr.mxu0 0.0
        %3482 = vmatpush2.msra.mxu0 %v2505
        %3483 = vmatprep.subr.mxu0 0.0
        %3484 = vmatpush2.msra.mxu0 %v2504
        %3485 = vmatprep.subr.mxu0 0.0
        %3486 = vmatpush2.msra.mxu0 %v2503
        %3487 = vmatprep.subr.mxu0 0.0
        %3488 = vmatpush2.msra.mxu0 %v2502
        %3489 = vmatprep.subr.mxu0 0.0
        %3490 = vmatpush2.msra.mxu0 %v2501
        %3491 = vmatprep.subr.mxu0 0.0
        %3492 = vmatpush2.msra.mxu0 %v2500
        %3493 = vmatprep.subr.mxu0 0.0
        %3494 = vmatpush2.msra.mxu0 %v2499
        %3495 = vmatprep.subr.mxu0 0.0
        %3496 = vmatpush2.msra.mxu0 %v2498
        %3497 = vmatprep.subr.mxu0 0.0
        %3498 = vmatpush2.msra.mxu0 %v2497
        %3499 = vmatprep.mubr.f32.mxu0 %v2466
        %3500 = vmatmul.mubr.f32.gmra.mxu0 %v2465
        %v3501 = vpop.f32.mrf.mxu0
        %v3502 = vadd.f32 %v3427, %v3501
        %v3503 = vpop.f32.mrf.mxu0
        %3504 = vmatprep.mubr.f32.mxu0 %v2474
        %3505 = vmatmul.mubr.f32.gmra.mxu0 %v2473
        %v3506 = vpop.f32.mrf.mxu0
        %v3507 = vadd.f32 %v3432, %v3506
        %v3508 = vpop.f32.mrf.mxu0
        %3509 = vdwg.mxu0
        %3510 = vmatprep.subr.mxu0 0.0
        %3511 = vmatpush1.msra.mxu0 %v2528
        %3512 = vmatprep.subr.mxu0 0.0
        %3513 = vmatpush1.msra.mxu0 %v2527
        %3514 = vmatprep.subr.mxu0 0.0
        %3515 = vmatpush1.msra.mxu0 %v2526
        %3516 = vmatprep.subr.mxu0 0.0
        %3517 = vmatpush1.msra.mxu0 %v2525
        %3518 = vmatprep.subr.mxu0 0.0
        %3519 = vmatpush1.msra.mxu0 %v2524
        %3520 = vmatprep.subr.mxu0 0.0
        %3521 = vmatpush1.msra.mxu0 %v2523
        %3522 = vmatprep.subr.mxu0 0.0
        %3523 = vmatpush1.msra.mxu0 %v2522
        %3524 = vmatprep.subr.mxu0 0.0
        %3525 = vmatpush1.msra.mxu0 %v2521
        %3526 = vmatprep.subr.mxu0 0.0
        %3527 = vmatpush1.msra.mxu0 %v2520
        %3528 = vmatprep.subr.mxu0 0.0
        %3529 = vmatpush1.msra.mxu0 %v2519
        %3530 = vmatprep.subr.mxu0 0.0
        %3531 = vmatpush1.msra.mxu0 %v2518
        %3532 = vmatprep.subr.mxu0 0.0
        %3533 = vmatpush1.msra.mxu0 %v2517
        %3534 = vmatprep.subr.mxu0 0.0
        %3535 = vmatpush1.msra.mxu0 %v2516
        %3536 = vmatprep.subr.mxu0 0.0
        %3537 = vmatpush1.msra.mxu0 %v2515
        %3538 = vmatprep.subr.mxu0 0.0
        %3539 = vmatpush1.msra.mxu0 %v2514
        %3540 = vmatprep.subr.mxu0 0.0
        %3541 = vmatpush1.msra.mxu0 %v2513
        %3542 = vmatprep.subr.mxu0 0.0
        %3543 = vmatpush2.msra.mxu0 %v2544
        %3544 = vmatprep.subr.mxu0 0.0
        %3545 = vmatpush2.msra.mxu0 %v2543
        %3546 = vmatprep.subr.mxu0 0.0
        %3547 = vmatpush2.msra.mxu0 %v2542
        %3548 = vmatprep.subr.mxu0 0.0
        %3549 = vmatpush2.msra.mxu0 %v2541
        %3550 = vmatprep.subr.mxu0 0.0
        %3551 = vmatpush2.msra.mxu0 %v2540
        %3552 = vmatprep.subr.mxu0 0.0
        %3553 = vmatpush2.msra.mxu0 %v2539
        %3554 = vmatprep.subr.mxu0 0.0
        %3555 = vmatpush2.msra.mxu0 %v2538
        %3556 = vmatprep.subr.mxu0 0.0
        %3557 = vmatpush2.msra.mxu0 %v2537
        %3558 = vmatprep.subr.mxu0 0.0
        %3559 = vmatpush2.msra.mxu0 %v2536
        %3560 = vmatprep.subr.mxu0 0.0
        %3561 = vmatpush2.msra.mxu0 %v2535
        %3562 = vmatprep.subr.mxu0 0.0
        %3563 = vmatpush2.msra.mxu0 %v2534
        %3564 = vmatprep.subr.mxu0 0.0
        %3565 = vmatpush2.msra.mxu0 %v2533
        %3566 = vmatprep.subr.mxu0 0.0
        %3567 = vmatpush2.msra.mxu0 %v2532
        %3568 = vmatprep.subr.mxu0 0.0
        %3569 = vmatpush2.msra.mxu0 %v2531
        %3570 = vmatprep.subr.mxu0 0.0
        %3571 = vmatpush2.msra.mxu0 %v2530
        %3572 = vmatprep.subr.mxu0 0.0
        %3573 = vmatpush2.msra.mxu0 %v2529
        %3574 = vmatprep.mubr.f32.mxu0 %v2468
        %3575 = vmatmul.mubr.f32.gmra.mxu0 %v2467
        %v3576 = vpop.f32.mrf.mxu0
        %v3577 = vadd.f32 %v3502, %v3576
        %v3578 = vpop.f32.mrf.mxu0
        %3579 = vmatprep.mubr.f32.mxu0 %v2476
        %3580 = vmatmul.mubr.f32.gmra.mxu0 %v2475
        %v3581 = vpop.f32.mrf.mxu0
        %v3582 = vadd.f32 %v3507, %v3581
        %v3583 = vpop.f32.mrf.mxu0
        %3584 = vdwg.mxu0
        %3585 = vmatprep.subr.mxu0 0.0
        %3586 = vmatpush1.msra.mxu0 %v2560
        %3587 = vmatprep.subr.mxu0 0.0
        %3588 = vmatpush1.msra.mxu0 %v2559
        %3589 = vmatprep.subr.mxu0 0.0
        %3590 = vmatpush1.msra.mxu0 %v2558
        %3591 = vmatprep.subr.mxu0 0.0
        %3592 = vmatpush1.msra.mxu0 %v2557
        %3593 = vmatprep.subr.mxu0 0.0
        %3594 = vmatpush1.msra.mxu0 %v2556
        %3595 = vmatprep.subr.mxu0 0.0
        %3596 = vmatpush1.msra.mxu0 %v2555
        %3597 = vmatprep.subr.mxu0 0.0
        %3598 = vmatpush1.msra.mxu0 %v2554
        %3599 = vmatprep.subr.mxu0 0.0
        %3600 = vmatpush1.msra.mxu0 %v2553
        %3601 = vmatprep.subr.mxu0 0.0
        %3602 = vmatpush1.msra.mxu0 %v2552
        %3603 = vmatprep.subr.mxu0 0.0
        %3604 = vmatpush1.msra.mxu0 %v2551
        %3605 = vmatprep.subr.mxu0 0.0
        %3606 = vmatpush1.msra.mxu0 %v2550
        %3607 = vmatprep.subr.mxu0 0.0
        %3608 = vmatpush1.msra.mxu0 %v2549
        %3609 = vmatprep.subr.mxu0 0.0
        %3610 = vmatpush1.msra.mxu0 %v2548
        %3611 = vmatprep.subr.mxu0 0.0
        %3612 = vmatpush1.msra.mxu0 %v2547
        %3613 = vmatprep.subr.mxu0 0.0
        %3614 = vmatpush1.msra.mxu0 %v2546
        %3615 = vmatprep.subr.mxu0 0.0
        %3616 = vmatpush1.msra.mxu0 %v2545
        %3617 = vmatprep.subr.mxu0 0.0
        %3618 = vmatpush2.msra.mxu0 %v2576
        %3619 = vmatprep.subr.mxu0 0.0
        %3620 = vmatpush2.msra.mxu0 %v2575
        %3621 = vmatprep.subr.mxu0 0.0
        %3622 = vmatpush2.msra.mxu0 %v2574
        %3623 = vmatprep.subr.mxu0 0.0
        %3624 = vmatpush2.msra.mxu0 %v2573
        %3625 = vmatprep.subr.mxu0 0.0
        %3626 = vmatpush2.msra.mxu0 %v2572
        %3627 = vmatprep.subr.mxu0 0.0
        %3628 = vmatpush2.msra.mxu0 %v2571
        %3629 = vmatprep.subr.mxu0 0.0
        %3630 = vmatpush2.msra.mxu0 %v2570
        %3631 = vmatprep.subr.mxu0 0.0
        %3632 = vmatpush2.msra.mxu0 %v2569
        %3633 = vmatprep.subr.mxu0 0.0
        %3634 = vmatpush2.msra.mxu0 %v2568
        %3635 = vmatprep.subr.mxu0 0.0
        %3636 = vmatpush2.msra.mxu0 %v2567
        %3637 = vmatprep.subr.mxu0 0.0
        %3638 = vmatpush2.msra.mxu0 %v2566
        %3639 = vmatprep.subr.mxu0 0.0
        %3640 = vmatpush2.msra.mxu0 %v2565
        %3641 = vmatprep.subr.mxu0 0.0
        %3642 = vmatpush2.msra.mxu0 %v2564
        %3643 = vmatprep.subr.mxu0 0.0
        %3644 = vmatpush2.msra.mxu0 %v2563
        %3645 = vmatprep.subr.mxu0 0.0
        %3646 = vmatpush2.msra.mxu0 %v2562
        %3647 = vmatprep.subr.mxu0 0.0
        %3648 = vmatpush2.msra.mxu0 %v2561
        %3649 = vmatprep.mubr.f32.mxu0 %v2470
        %3650 = vmatmul.mubr.f32.gmra.mxu0 %v2469
        %v3651 = vpop.f32.mrf.mxu0
        %v3652 = vadd.f32 %v3577, %v3651
        %v3653 = vpop.f32.mrf.mxu0
        %3654 = vmatprep.mubr.f32.mxu0 %v2478
        %3655 = vmatmul.mubr.f32.gmra.mxu0 %v2477
        %v3656 = vpop.f32.mrf.mxu0
        %v3657 = vadd.f32 %v3582, %v3656
        %v3658 = vpop.f32.mrf.mxu0
        %3659 = vdwg.mxu0
        %3660 = vmatprep.subr.mxu0 0.0
        %3661 = vmatpush1.msra.mxu0 %v2592
        %3662 = vmatprep.subr.mxu0 0.0
        %3663 = vmatpush1.msra.mxu0 %v2591
        %3664 = vmatprep.subr.mxu0 0.0
        %3665 = vmatpush1.msra.mxu0 %v2590
        %3666 = vmatprep.subr.mxu0 0.0
        %3667 = vmatpush1.msra.mxu0 %v2589
        %3668 = vmatprep.subr.mxu0 0.0
        %3669 = vmatpush1.msra.mxu0 %v2588
        %3670 = vmatprep.subr.mxu0 0.0
        %3671 = vmatpush1.msra.mxu0 %v2587
        %3672 = vmatprep.subr.mxu0 0.0
        %3673 = vmatpush1.msra.mxu0 %v2586
        %3674 = vmatprep.subr.mxu0 0.0
        %3675 = vmatpush1.msra.mxu0 %v2585
        %3676 = vmatprep.subr.mxu0 0.0
        %3677 = vmatpush1.msra.mxu0 %v2584
        %3678 = vmatprep.subr.mxu0 0.0
        %3679 = vmatpush1.msra.mxu0 %v2583
        %3680 = vmatprep.subr.mxu0 0.0
        %3681 = vmatpush1.msra.mxu0 %v2582
        %3682 = vmatprep.subr.mxu0 0.0
        %3683 = vmatpush1.msra.mxu0 %v2581
        %3684 = vmatprep.subr.mxu0 0.0
        %3685 = vmatpush1.msra.mxu0 %v2580
        %3686 = vmatprep.subr.mxu0 0.0
        %3687 = vmatpush1.msra.mxu0 %v2579
        %3688 = vmatprep.subr.mxu0 0.0
        %3689 = vmatpush1.msra.mxu0 %v2578
        %3690 = vmatprep.subr.mxu0 0.0
        %3691 = vmatpush1.msra.mxu0 %v2577
        %3692 = vmatprep.subr.mxu0 0.0
        %3693 = vmatpush2.msra.mxu0 %v2608
        %3694 = vmatprep.subr.mxu0 0.0
        %3695 = vmatpush2.msra.mxu0 %v2607
        %3696 = vmatprep.subr.mxu0 0.0
        %3697 = vmatpush2.msra.mxu0 %v2606
        %3698 = vmatprep.subr.mxu0 0.0
        %3699 = vmatpush2.msra.mxu0 %v2605
        %3700 = vmatprep.subr.mxu0 0.0
        %3701 = vmatpush2.msra.mxu0 %v2604
        %3702 = vmatprep.subr.mxu0 0.0
        %3703 = vmatpush2.msra.mxu0 %v2603
        %3704 = vmatprep.subr.mxu0 0.0
        %3705 = vmatpush2.msra.mxu0 %v2602
        %3706 = vmatprep.subr.mxu0 0.0
        %3707 = vmatpush2.msra.mxu0 %v2601
        %3708 = vmatprep.subr.mxu0 0.0
        %3709 = vmatpush2.msra.mxu0 %v2600
        %3710 = vmatprep.subr.mxu0 0.0
        %3711 = vmatpush2.msra.mxu0 %v2599
        %3712 = vmatprep.subr.mxu0 0.0
        %3713 = vmatpush2.msra.mxu0 %v2598
        %3714 = vmatprep.subr.mxu0 0.0
        %3715 = vmatpush2.msra.mxu0 %v2597
        %3716 = vmatprep.subr.mxu0 0.0
        %3717 = vmatpush2.msra.mxu0 %v2596
        %3718 = vmatprep.subr.mxu0 0.0
        %3719 = vmatpush2.msra.mxu0 %v2595
        %3720 = vmatprep.subr.mxu0 0.0
        %3721 = vmatpush2.msra.mxu0 %v2594
        %3722 = vmatprep.subr.mxu0 0.0
        %3723 = vmatpush2.msra.mxu0 %v2593
        %3724 = vmatprep.mubr.f32.mxu0 %v2472
        %3725 = vmatmul.mubr.f32.gmra.mxu0 %v2471
        %v3726 = vpop.f32.mrf.mxu0
        %v3727 = vadd.f32 %v3652, %v3726
        %v3728 = vpop.f32.mrf.mxu0
        %3729 = vmatprep.mubr.f32.mxu0 %v2480
        %3730 = vmatmul.mubr.f32.gmra.mxu0 %v2479
        %v3731 = vpop.f32.mrf.mxu0
        %v3732 = vadd.f32 %v3657, %v3731
        %v3733 = vpop.f32.mrf.mxu0
        %3734 = vdwg.mxu0
        %v3735 = vld [vmem:[%s898 + $0x80] sm:$0xff]
        %v3736 = vld [vmem:[%s898 + $0x108] sm:$0xff]
        %v3737 = vld [vmem:[%s898 + $0x190] sm:$0xff]
        %v3738 = vld [vmem:[%s898 + $0x218] sm:$0xff]
        %v3739 = vld [vmem:[%s902 + $0x10] sm:$0x1]
        %v3741 = vlaneseq
        %v3742 = vshrl.u32 %v3741, 7
        %v3743 = vsub.s32 0, %v3742
        %v3744 = vrot.slane %v3739, %v3743
        %3746 = vmatprep.subr.mxu0 0.0
        %3747 = vmatpush1.msra.mxu0 0.0
        %3748 = vmatprep.subr.mxu0 0.0
        %3749 = vmatpush1.msra.mxu0 0.0
        %3750 = vmatprep.subr.mxu0 0.0
        %3751 = vmatpush1.msra.mxu0 0.0
        %3752 = vmatprep.subr.mxu0 0.0
        %3753 = vmatpush1.msra.mxu0 0.0
        %3754 = vmatprep.subr.mxu0 0.0
        %3755 = vmatpush1.msra.mxu0 0.0
        %3756 = vmatprep.subr.mxu0 0.0
        %3757 = vmatpush1.msra.mxu0 0.0
        %3758 = vmatprep.subr.mxu0 0.0
        %3759 = vmatpush1.msra.mxu0 0.0
        %3760 = vmatprep.subr.mxu0 0.0
        %3761 = vmatpush1.msra.mxu0 0.0
        %3762 = vmatprep.subr.mxu0 0.0
        %3763 = vmatpush1.msra.mxu0 0.0
        %3764 = vmatprep.subr.mxu0 0.0
        %3765 = vmatpush1.msra.mxu0 0.0
        %3766 = vmatprep.subr.mxu0 0.0
        %3767 = vmatpush1.msra.mxu0 0.0
        %3768 = vmatprep.subr.mxu0 0.0
        %3769 = vmatpush1.msra.mxu0 0.0
        %3770 = vmatprep.subr.mxu0 0.0
        %3771 = vmatpush1.msra.mxu0 %v3738
        %3772 = vmatprep.subr.mxu0 0.0
        %3773 = vmatpush1.msra.mxu0 %v3737
        %3774 = vmatprep.subr.mxu0 0.0
        %3775 = vmatpush1.msra.mxu0 %v3736
        %3776 = vmatprep.subr.mxu0 0.0
        %3777 = vmatpush1.msra.mxu0 %v3735
        %3778 = vmatprep.subr.mxu0 0.0
        %3779 = vmatpush2.msra.mxu0 0.0
        %3780 = vmatprep.subr.mxu0 0.0
        %3781 = vmatpush2.msra.mxu0 0.0
        %3782 = vmatprep.subr.mxu0 0.0
        %3783 = vmatpush2.msra.mxu0 0.0
        %3784 = vmatprep.subr.mxu0 0.0
        %3785 = vmatpush2.msra.mxu0 0.0
        %3786 = vmatprep.subr.mxu0 0.0
        %3787 = vmatpush2.msra.mxu0 0.0
        %3788 = vmatprep.subr.mxu0 0.0
        %3789 = vmatpush2.msra.mxu0 0.0
        %3790 = vmatprep.subr.mxu0 0.0
        %3791 = vmatpush2.msra.mxu0 0.0
        %3792 = vmatprep.subr.mxu0 0.0
        %3793 = vmatpush2.msra.mxu0 0.0
        %3794 = vmatprep.subr.mxu0 0.0
        %3795 = vmatpush2.msra.mxu0 0.0
        %3796 = vmatprep.subr.mxu0 0.0
        %3797 = vmatpush2.msra.mxu0 0.0
        %3798 = vmatprep.subr.mxu0 0.0
        %3799 = vmatpush2.msra.mxu0 0.0
        %3800 = vmatprep.subr.mxu0 0.0
        %3801 = vmatpush2.msra.mxu0 0.0
        %3802 = vmatprep.subr.mxu0 0.0
        %3803 = vmatpush2.msra.mxu0 0.0
        %3804 = vmatprep.subr.mxu0 0.0
        %3805 = vmatpush2.msra.mxu0 0.0
        %3806 = vmatprep.subr.mxu0 0.0
        %3807 = vmatpush2.msra.mxu0 0.0
        %3808 = vmatprep.subr.mxu0 0.0
        %3809 = vmatpush2.msra.mxu0 0.0
        %3810 = vmatprep.mubr.f32.mxu0 0.0
        %3811 = vmatmul.mubr.f32.gmra.mxu0 %v2152
        %v3812 = vpop.f32.mrf.mxu0
        %v3813 = vadd.f32 %v3744, %v3812
        %v3814 = vpop.f32.mrf.mxu0
        %3815 = vmatprep.mubr.f32.mxu0 0.0
        %3816 = vmatmul.mubr.f32.gmra.mxu0 %v2155
        %v3817 = vpop.f32.mrf.mxu0
        %v3818 = vadd.f32 %v3744, %v3817
        %v3819 = vpop.f32.mrf.mxu0
        %3820 = vdwg.mxu0
        %v3821 = vmax.f32 %v3813, 0.0
        %v3822 = vmax.f32 %v3818, 0.0
        %v3823 = vld [vmem:[%s907 + $0x800] sm:$0xff]
        %v3824 = vld [vmem:[%s907 + $0x808] sm:$0xff]
        %v3825 = vld [vmem:[%s907 + $0x810] sm:$0xff]
        %v3826 = vld [vmem:[%s907 + $0x818] sm:$0xff]
        %v3827 = vld [vmem:[%s907 + $0x820] sm:$0xff]
        %v3828 = vld [vmem:[%s907 + $0x828] sm:$0xff]
        %v3829 = vld [vmem:[%s907 + $0x830] sm:$0xff]
        %v3830 = vld [vmem:[%s907 + $0x838] sm:$0xff]
        %v3831 = vld [vmem:[%s907 + $0x840] sm:$0xff]
        %v3832 = vld [vmem:[%s907 + $0x848] sm:$0xff]
        %v3833 = vld [vmem:[%s907 + $0x850] sm:$0xff]
        %v3834 = vld [vmem:[%s907 + $0x858] sm:$0xff]
        %v3835 = vld [vmem:[%s907 + $0x860] sm:$0xff]
        %v3836 = vld [vmem:[%s907 + $0x868] sm:$0xff]
        %v3837 = vld [vmem:[%s907 + $0x870] sm:$0xff]
        %v3838 = vld [vmem:[%s907 + $0x878] sm:$0xff]
        %3839 = vmatprep.subr.mxu0 0.0
        %3840 = vmatpush1.msra.mxu0 %v3838
        %3841 = vmatprep.subr.mxu0 0.0
        %3842 = vmatpush1.msra.mxu0 %v3837
        %3843 = vmatprep.subr.mxu0 0.0
        %3844 = vmatpush1.msra.mxu0 %v3836
        %3845 = vmatprep.subr.mxu0 0.0
        %3846 = vmatpush1.msra.mxu0 %v3835
        %3847 = vmatprep.subr.mxu0 0.0
        %3848 = vmatpush1.msra.mxu0 %v3834
        %3849 = vmatprep.subr.mxu0 0.0
        %3850 = vmatpush1.msra.mxu0 %v3833
        %3851 = vmatprep.subr.mxu0 0.0
        %3852 = vmatpush1.msra.mxu0 %v3832
        %3853 = vmatprep.subr.mxu0 0.0
        %3854 = vmatpush1.msra.mxu0 %v3831
        %3855 = vmatprep.subr.mxu0 0.0
        %3856 = vmatpush1.msra.mxu0 %v3830
        %3857 = vmatprep.subr.mxu0 0.0
        %3858 = vmatpush1.msra.mxu0 %v3829
        %3859 = vmatprep.subr.mxu0 0.0
        %3860 = vmatpush1.msra.mxu0 %v3828
        %3861 = vmatprep.subr.mxu0 0.0
        %3862 = vmatpush1.msra.mxu0 %v3827
        %3863 = vmatprep.subr.mxu0 0.0
        %3864 = vmatpush1.msra.mxu0 %v3826
        %3865 = vmatprep.subr.mxu0 0.0
        %3866 = vmatpush1.msra.mxu0 %v3825
        %3867 = vmatprep.subr.mxu0 0.0
        %3868 = vmatpush1.msra.mxu0 %v3824
        %3869 = vmatprep.subr.mxu0 0.0
        %3870 = vmatpush1.msra.mxu0 %v3823
        %3871 = vmatprep.subr.mxu0 0.0
        %3872 = vmatpush2.msra.mxu0 0.0
        %3873 = vmatprep.subr.mxu0 0.0
        %3874 = vmatpush2.msra.mxu0 0.0
        %3875 = vmatprep.subr.mxu0 0.0
        %3876 = vmatpush2.msra.mxu0 0.0
        %3877 = vmatprep.subr.mxu0 0.0
        %3878 = vmatpush2.msra.mxu0 0.0
        %3879 = vmatprep.subr.mxu0 0.0
        %3880 = vmatpush2.msra.mxu0 0.0
        %3881 = vmatprep.subr.mxu0 0.0
        %3882 = vmatpush2.msra.mxu0 0.0
        %3883 = vmatprep.subr.mxu0 0.0
        %3884 = vmatpush2.msra.mxu0 0.0
        %3885 = vmatprep.subr.mxu0 0.0
        %3886 = vmatpush2.msra.mxu0 0.0
        %3887 = vmatprep.subr.mxu0 0.0
        %3888 = vmatpush2.msra.mxu0 0.0
        %3889 = vmatprep.subr.mxu0 0.0
        %3890 = vmatpush2.msra.mxu0 0.0
        %3891 = vmatprep.subr.mxu0 0.0
        %3892 = vmatpush2.msra.mxu0 0.0
        %3893 = vmatprep.subr.mxu0 0.0
        %3894 = vmatpush2.msra.mxu0 0.0
        %3895 = vmatprep.subr.mxu0 0.0
        %3896 = vmatpush2.msra.mxu0 0.0
        %3897 = vmatprep.subr.mxu0 0.0
        %3898 = vmatpush2.msra.mxu0 0.0
        %3899 = vmatprep.subr.mxu0 0.0
        %3900 = vmatpush2.msra.mxu0 0.0
        %3901 = vmatprep.subr.mxu0 0.0
        %3902 = vmatpush2.msra.mxu0 0.0
        %3903 = vmatprep.mubr.f32.mxu0 0.0
        %3904 = vmatmul.mubr.f32.gmra.mxu0 %v3821
        %v3905 = vpop.f32.mrf.mxu0
        %v3906 = vadd.f32 0.0, %v3905
        %v3907 = vpop.f32.mrf.mxu0
        %3908 = vmatprep.mubr.f32.mxu0 0.0
        %3909 = vmatmul.mubr.f32.gmra.mxu0 %v3822
        %v3910 = vpop.f32.mrf.mxu0
        %v3911 = vadd.f32 0.0, %v3910
        %v3912 = vpop.f32.mrf.mxu0
        %3913 = vdwg.mxu0
        %v3914 = vadd.f32 %v3727, %v3906
        %v3915 = vadd.f32 %v3732, %v3911
        %v3916 = vadd.f32 %v2031, %v3914
        %v3917 = vadd.f32 %v2032, %v3915
        %v3918 = vld [vmem:[%s910] sm:$0x1]
        %v3920 = vlaneseq
        %v3921 = vshrl.u32 %v3920, 7
        %v3922 = vsub.s32 0, %v3921
        %v3923 = vrot.slane %v3918, %v3922
        %v3925 = vadd.f32 %v3916, %v3923
        %v3926 = vadd.f32 %v3917, %v3923
        %3927 = vst.msk [vmem:[#allocation2] sm:$0xff] %vm926, %v3925
        %3928 = vst.msk [vmem:[#allocation2 + $0x8] sm:$0xff] %vm926, %v3926
        %3929 = vst.msk [vmem:[%s841] sm:$0xff] %vm926, %v3925
        %3930 = vst.msk [vmem:[%s841 + $0x8] sm:$0xff] %vm926, %v3926
        %p3931 = scmp.eq.s32.totalorder %s41, 1
        // Predicated region
        $region101: #{tpu_custom_call.1} parent=95 // pred_check
          %p3932 = pneg %p3931
        $region102: #{tpu_custom_call.1} parent=95 // pred_check_branch
          %3934 = sbr.rel (%p3932) target = $region104
        $region103: #{tpu_custom_call.1} parent=95 // pred_region
          %v3935 = vld [vmem:[%s17] sm:$0x1]
          %v3936 = vld [vmem:[%s18] sm:$0x1]
          %v3937 = vsel %vm926, %v3925, 0.0
          %3938 = vadd.xlane.f32.xlu0 %v3937
          %v3939 = vpop.xlane.xlu0 %3938
          %v3940 = vsel %vm926, %v3926, 0.0
          %3941 = vadd.xlane.f32.xlu0 %v3940
          %v3942 = vpop.xlane.xlu0 %3941
          %v3943 = vmul.f32 %v3939, %v933
          %v3944 = vmul.f32 %v3942, %v933
          %v3945 = vsub.f32 %v3925, %v3943
          %v3946 = vsub.f32 %v3926, %v3944
          %v3947 = vmul.f32 %v3945, %v3945
          %v3948 = vmul.f32 %v3946, %v3946
          %v3949 = vsel %vm926, %v3947, 0.0
          %3950 = vadd.xlane.f32.xlu0 %v3949
          %v3951 = vpop.xlane.xlu0 %3950
          %v3952 = vsel %vm926, %v3948, 0.0
          %3953 = vadd.xlane.f32.xlu0 %v3952
          %v3954 = vpop.xlane.xlu0 %3953
          %v3955 = vmul.f32 %v3951, %v933
          %v3956 = vmul.f32 %v3954, %v933
          %v3957 = vadd.f32 %v3955, 1e-05
          %v3958 = vadd.f32 %v3956, 1e-05
          %v3959 = vrsqrt.pop %v3957
          %v3960 = vrsqrt.pop %v3958
          %v3961 = vmul.f32 %v3945, %v3959
          %v3962 = vmul.f32 %v3946, %v3960
          %v3964 = vlaneseq
          %v3965 = vshrl.u32 %v3964, 7
          %v3966 = vsub.s32 0, %v3965
          %v3967 = vrot.slane %v3935, %v3966
          %v3969 = vmul.f32 %v3961, %v3967
          %v3970 = vmul.f32 %v3962, %v3967
          %v3972 = vlaneseq
          %v3973 = vshrl.u32 %v3972, 7
          %v3974 = vsub.s32 0, %v3973
          %v3975 = vrot.slane %v3936, %v3974
          %v3977 = vadd.f32 %v3969, %v3975
          %v3978 = vadd.f32 %v3970, %v3975
          %3979 = vst.msk [vmem:[#allocation6] sm:$0xff] %vm926, %v3977
          %3980 = vst.msk [vmem:[#allocation6 + $0x8] sm:$0xff] %vm926, %v3978
        $region104: #{tpu_custom_call.1} parent=95 // pred_fallthru
          _
        %s3981 = sand.u32 %s542, 1
        %s3982 = scalar_lea.sflag [#allocation5], %s3981
        %s3983 = sand.u32 %s542, 1
        %s3984 = smul.addr %s3983, 16
        %s3985 = scalar_lea.vmem [#allocation4], %s3984
        // Predicated region
        $region105: #{tpu_custom_call.1} parent=95 // pred_check
          %p3986 = pneg %p552
        $region106: #{tpu_custom_call.1} parent=95 // pred_check_branch
          %3988 = sbr.rel (%p3986) target = $region108
        $region107: #{tpu_custom_call.1} parent=95 // pred_region
          %s3989 = smul.u32 2, %s40
          %s3991 = ssub.s32 256, 256
          %3992 = vsyncadd %s3982, %s3991
          %s3993 = smul.addr %s41, 2
          %s3994 = sadd.s32 %s3989, %s3993
          %s3995 = smul.addr %s3994, 128
          %s3996 = scalar_lea.hbm %s19, %s3995
          %s3997 = sshll.u32 %s3985, 4
          %s3998 = int_to_ptr.vmem [resolvable:$true] %s3997
          %4003 = dma.vmem_to_hbm [thread:$0]  %s3998, 256, %s3996, %s3982, 128, 128, 8
        $region108: #{tpu_custom_call.1} parent=95 // pred_fallthru
          _
        // Predicated region
        $region109: #{tpu_custom_call.1} parent=95 // pred_check
          %p4004 = pneg %p578
        $region110: #{tpu_custom_call.1} parent=95 // pred_check_branch
          %4006 = sbr.rel (%p4004) target = $region112
        $region111: #{tpu_custom_call.1} parent=95 // pred_region
          %s4007 = smul.u32 2, %s40
          %s4009 = ssub.s32 256, 256
          %4010 = vsyncadd [#allocation7], %s4009
          %s4011 = smul.addr %s4007, 128
          %s4012 = scalar_lea.hbm %s20, %s4011
          %s4013 = sshll.u32 [#allocation6], 4
          %s4014 = int_to_ptr.vmem [resolvable:$true] %s4013
          %4019 = dma.vmem_to_hbm [thread:$0]  %s4014, 256, %s4012, [#allocation7], 128, 128, 8
        $region112: #{tpu_custom_call.1} parent=95 // pred_fallthru
          _
        // Predicated region
        $region113: #{tpu_custom_call.1} parent=95 // pred_check
          %p4020 = pneg %p578
        $region114: #{tpu_custom_call.1} parent=95 // pred_check_branch
          %4022 = sbr.rel (%p4020) target = $region116
        $region115: #{tpu_custom_call.1} parent=95 // pred_region
          %4023 = dma.done [#allocation7], 256
        $region116: #{tpu_custom_call.1} parent=95 // pred_fallthru
          _
      $region96: #{tpu_custom_call.1} parent=5 // pred_fallthru
        _
      %p4024 = scmp.le.s32.totalorder 2, %s31
      // Predicated region
      $region117: #{tpu_custom_call.1} parent=5 // pred_check
        %p4025 = pneg %p4024
      $region118: #{tpu_custom_call.1} parent=5 // pred_check_branch
        %4027 = sbr.rel (%p4025) target = $region120
      $region119: #{tpu_custom_call.1} parent=5 // pred_region
        %s4028 = ssub.s32 %s31, 2
        // Predicated region
        $region121: #{tpu_custom_call.1} parent=119 // pred_check
          %p4029 = pneg %p558
        $region122: #{tpu_custom_call.1} parent=119 // pred_check_branch
          %4031 = sbr.rel (%p4029) target = $region124
        $region123: #{tpu_custom_call.1} parent=119 // pred_region
          %s4032 = sand.u32 %s543, 1
          %s4033 = scalar_lea.sflag [#allocation5], %s4032
          %s4034 = sand.u32 %s543, 1
          %s4035 = smul.addr %s4034, 16
          %s4036 = scalar_lea.vmem [#allocation4], %s4035
          %4037 = dma.done %s4033, 256
        $region124: #{tpu_custom_call.1} parent=119 // pred_fallthru
          _
      $region120: #{tpu_custom_call.1} parent=5 // pred_fallthru
        _
    $region6: #{tpu_custom_call.1} parent=1 // loop_footer
      %s35 = sadd.s32 1, %s31
    $region7: #{tpu_custom_call.1} parent=1 // loop_footer_branch
      %30 = sbr.rel target = $region3
    $region8: #{tpu_custom_call.1} parent=1 // loop_exit
      _
    %4038 = vsyncpa [#allocation5], 1
    %s4039 = scalar_lea.sflag [#allocation5], 1
    %4040 = vsyncpa %s4039, 1
    %4041 = vsyncpa [#allocation7], 1

</llo_original>
